<compile_context>
chip_gen: v5e
topology: v5e:2x2
jax: 0.10.0
libtpu: 0.0.40
codegen_flags: <defaults>
</compile_context>

<pallas_src>
import functools
import math

import jax
import jax.numpy as jnp
from jax.experimental import pallas as pl
from jax.experimental.pallas import tpu as pltpu

# ---------------- small synthetic BERT config ----------------
BATCH = 2
SEQ = 8
HIDDEN = 128           # stands in for 768
NUM_HEADS = 4
HEAD_DIM = HIDDEN // NUM_HEADS
INTERMEDIATE = 256
NUM_LAYERS = 2
VOCAB = 64
MAX_POS = 16
NUM_LABELS = 5         # len(labels)
CLS_PAD = 128          # classifier output padded to a full lane tile
LN_EPS = 1e-12


# ---------------- small helpers ----------------
def _recip(x):
    # EUP reciprocal (separate VLIW slot); fall back to a divide on old JAX.
    if hasattr(pl, "reciprocal"):
        return pl.reciprocal(x, approx=True)
    return 1.0 / x


def _layernorm_f32(y, g, b, eps):
    mean = jnp.mean(y, axis=-1, keepdims=True)
    cen = y - mean
    var = jnp.mean(cen * cen, axis=-1, keepdims=True)
    return (cen * jax.lax.rsqrt(var + eps)) * g + b


def _gelu_tanh(x):
    return 0.5 * x * (1.0 + jnp.tanh(0.7978845608028654 * (x + 0.044715 * x * x * x)))


# ---------------- fused whole-model Pallas kernel ----------------
def _bert_kernel(emb_ref, mask_ref, eg_ref, eb_ref,
                 wqkv_ref, bqkv_ref, wo_ref, bo_ref, ln1g_ref, ln1b_ref,
                 w1_ref, b1_ref, w2_ref, b2_ref, ln2g_ref, ln2b_ref,
                 pw_ref, pb_ref, cw_ref, cb_ref, o_ref,
                 *, num_layers, num_heads, head_dim, eps):
    """Grid = (batch,). One step = full encoder + pooler + classifier for one example."""
    bf = jnp.bfloat16
    H = emb_ref.shape[-1]

    # embedding LayerNorm (f32)
    x = _layernorm_f32(emb_ref[0], eg_ref[...], eb_ref[...], eps)          # (S, H)
    mask_add = mask_ref[0]                                                  # (1, S) -> bcast rows

    for l in range(num_layers):                                             # static unroll
        # ---- attention: fused QKV projection (scale pre-folded into Q) ----
        xb = x.astype(bf)
        qkv = jnp.dot(xb, wqkv_ref[l], preferred_element_type=jnp.float32) + bqkv_ref[l]
        q, k, v = qkv[:, :H], qkv[:, H:2 * H], qkv[:, 2 * H:]

        ctx_parts = []
        for h in range(num_heads):                                          # nH=4, unrolled
            sl = slice(h * head_dim, (h + 1) * head_dim)
            qh, kh, vh = q[:, sl], k[:, sl], v[:, sl]
            s = jax.lax.dot_general(qh.astype(bf), kh.astype(bf),
                                    (((1,), (1,)), ((), ())),
                                    preferred_element_type=jnp.float32)     # (S, S)
            s = s + mask_add
            s = s - jnp.max(s, axis=-1, keepdims=True)
            p = jnp.exp(s)
            p = p * _recip(jnp.sum(p, axis=-1, keepdims=True))
            ctx_parts.append(jnp.dot(p.astype(bf), vh.astype(bf),
                                     preferred_element_type=jnp.float32))   # (S, Dh)
        ctx = jnp.concatenate(ctx_parts, axis=-1)                           # (S, H)

        # output projection (single K=H dot) + residual + LayerNorm
        y = jnp.dot(ctx.astype(bf), wo_ref[l],
                    preferred_element_type=jnp.float32) + bo_ref[l] + x
        x = _layernorm_f32(y, ln1g_ref[l], ln1b_ref[l], eps)

        # ---- FFN: W1 + GELU -> W2 -> residual -> LayerNorm ----
        hmid = jnp.dot(x.astype(bf), w1_ref[l],
                       preferred_element_type=jnp.float32) + b1_ref[l]
        hmid = _gelu_tanh(hmid)
        y = jnp.dot(hmid.astype(bf), w2_ref[l],
                    preferred_element_type=jnp.float32) + b2_ref[l] + x
        x = _layernorm_f32(y, ln2g_ref[l], ln2b_ref[l], eps)

    # ---- pooler (tanh dense on CLS) + classifier (ReLU), lane-padded output ----
    cls_tok = x[0:1, :]                                                     # (1, H)
    pooled = jnp.tanh(jnp.dot(cls_tok.astype(bf), pw_ref[...],
                              preferred_element_type=jnp.float32) + pb_ref[...])
    logits = jnp.dot(pooled.astype(bf), cw_ref[...],
                     preferred_element_type=jnp.float32) + cb_ref[...]      # (1, 128)
    o_ref[0] = jnp.maximum(logits, 0.0)


def bert_encoder_classifier(emb, mask_add, prep):
    B, S, H = emb.shape
    L, I, H3 = NUM_LAYERS, INTERMEDIATE, 3 * HIDDEN
    kernel = functools.partial(_bert_kernel, num_layers=NUM_LAYERS,
                               num_heads=NUM_HEADS, head_dim=HEAD_DIM, eps=LN_EPS)
    const2 = lambda b: (0, 0)
    const3 = lambda b: (0, 0, 0)
    # NOTE: at real BERT-base sizes set vmem_limit_bytes here and single-buffer the
    # constant weight blocks (pipeline_mode=pl.Buffered(1)); at these shapes it is moot.
    logits = pl.pallas_call(
        kernel,
        out_shape=jax.ShapeDtypeStruct((B, 1, CLS_PAD), jnp.float32),
        grid=(B,),
        in_specs=[
            pl.BlockSpec((1, S, H), lambda b: (b, 0, 0)),     # embeddings (f32)
            pl.BlockSpec((1, 1, S), lambda b: (b, 0, 0)),     # additive key mask
            pl.BlockSpec((1, H), const2),                     # emb LN gamma
            pl.BlockSpec((1, H), const2),                     # emb LN beta
            pl.BlockSpec((L, H, H3), const3),                 # fused QKV weights (bf16)
            pl.BlockSpec((L, 1, H3), const3),                 # fused QKV bias (f32)
            pl.BlockSpec((L, H, H), const3),                  # output proj (bf16)
            pl.BlockSpec((L, 1, H), const3),                  # output proj bias
            pl.BlockSpec((L, 1, H), const3),                  # ln1 gamma
            pl.BlockSpec((L, 1, H), const3),                  # ln1 beta
            pl.BlockSpec((L, H, I), const3),                  # FFN W1 (bf16)
            pl.BlockSpec((L, 1, I), const3),                  # FFN b1
            pl.BlockSpec((L, I, H), const3),                  # FFN W2 (bf16)
            pl.BlockSpec((L, 1, H), const3),                  # FFN b2
            pl.BlockSpec((L, 1, H), const3),                  # ln2 gamma
            pl.BlockSpec((L, 1, H), const3),                  # ln2 beta
            pl.BlockSpec((H, H), const2),                     # pooler W (bf16)
            pl.BlockSpec((1, H), const2),                     # pooler b
            pl.BlockSpec((H, CLS_PAD), const2),               # classifier W padded (bf16)
            pl.BlockSpec((1, CLS_PAD), const2),               # classifier b padded
        ],
        out_specs=pl.BlockSpec((1, 1, CLS_PAD), lambda b: (b, 0, 0)),
        compiler_params=pltpu.CompilerParams(dimension_semantics=("parallel",)),
    )(emb, mask_add,
      prep["emb_ln_g"], prep["emb_ln_b"],
      prep["wqkv"], prep["bqkv"], prep["wo"], prep["bo"], prep["ln1_g"], prep["ln1_b"],
      prep["w1"], prep["b1"], prep["w2"], prep["b2"], prep["ln2_g"], prep["ln2_b"],
      prep["pool_w"], prep["pool_b"], prep["cls_w"], prep["cls_b"])
    return logits.reshape(B, CLS_PAD)


# ---------------- parameters (deterministic synthetic init) ----------------
def init_params(key):
    def nrm(k, shape):
        return 0.02 * jax.random.normal(k, shape, dtype=jnp.float32)

    keys = iter(jax.random.split(key, 8 + NUM_LAYERS * 8 + 4))
    params = {
        "word_emb": nrm(next(keys), (VOCAB, HIDDEN)),
        "pos_emb": nrm(next(keys), (MAX_POS, HIDDEN)),
        "type_emb": nrm(next(keys), (2, HIDDEN)),
        "emb_ln_g": jnp.ones((HIDDEN,), jnp.float32),
        "emb_ln_b": jnp.zeros((HIDDEN,), jnp.float32),
        "layers": [],
        "pool_w": nrm(next(keys), (HIDDEN, HIDDEN)),
        "pool_b": jnp.zeros((HIDDEN,), jnp.float32),
        "cls_w": nrm(next(keys), (HIDDEN, NUM_LABELS)),
        "cls_b": jnp.zeros((NUM_LABELS,), jnp.float32),
    }
    for _ in range(NUM_LAYERS):
        params["layers"].append({
            "wq": nrm(next(keys), (HIDDEN, HIDDEN)), "bq": jnp.zeros((HIDDEN,), jnp.float32),
            "wk": nrm(next(keys), (HIDDEN, HIDDEN)), "bk": jnp.zeros((HIDDEN,), jnp.float32),
            "wv": nrm(next(keys), (HIDDEN, HIDDEN)), "bv": jnp.zeros((HIDDEN,), jnp.float32),
            "wo": nrm(next(keys), (HIDDEN, HIDDEN)), "bo": jnp.zeros((HIDDEN,), jnp.float32),
            "ln1_g": jnp.ones((HIDDEN,), jnp.float32), "ln1_b": jnp.zeros((HIDDEN,), jnp.float32),
            "w1": nrm(next(keys), (HIDDEN, INTERMEDIATE)), "b1": jnp.zeros((INTERMEDIATE,), jnp.float32),
            "w2": nrm(next(keys), (INTERMEDIATE, HIDDEN)), "b2": jnp.zeros((HIDDEN,), jnp.float32),
            "ln2_g": jnp.ones((HIDDEN,), jnp.float32), "ln2_b": jnp.zeros((HIDDEN,), jnp.float32),
        })
    return params


def prepare_params(params):
    """One-time layout/dtype prep: fused+scaled QKV weights, layer-stacked tensors,
    bf16 matmul weights, 2-D broadcastable biases, lane-padded classifier weights."""
    H, I = HIDDEN, INTERMEDIATE
    bf = jnp.bfloat16
    scale = 1.0 / math.sqrt(HEAD_DIM)

    wqkv, bqkv, wo, bo, ln1g, ln1b = [], [], [], [], [], []
    w1, b1, w2, b2, ln2g, ln2b = [], [], [], [], [], []
    for layer in params["layers"]:
        # fold softmax scale into the Q projection; fuse Q/K/V along output lanes
        wqkv.append(jnp.concatenate(
            [layer["wq"] * scale, layer["wk"], layer["wv"]], axis=1).astype(bf))   # (H, 3H)
        bqkv.append(jnp.concatenate(
            [layer["bq"] * scale, layer["bk"], layer["bv"]]).reshape(1, 3 * H))    # (1, 3H)
        wo.append(layer["wo"].astype(bf))
        bo.append(layer["bo"].reshape(1, H))
        ln1g.append(layer["ln1_g"].reshape(1, H))
        ln1b.append(layer["ln1_b"].reshape(1, H))
        w1.append(layer["w1"].astype(bf))
        b1.append(layer["b1"].reshape(1, I))
        w2.append(layer["w2"].astype(bf))
        b2.append(layer["b2"].reshape(1, H))
        ln2g.append(layer["ln2_g"].reshape(1, H))
        ln2b.append(layer["ln2_b"].reshape(1, H))

    return {
        "word_emb": params["word_emb"],
        "pos_emb": params["pos_emb"],
        "type_emb": params["type_emb"],
        "emb_ln_g": params["emb_ln_g"].reshape(1, H),
        "emb_ln_b": params["emb_ln_b"].reshape(1, H),
        "wqkv": jnp.stack(wqkv), "bqkv": jnp.stack(bqkv),
        "wo": jnp.stack(wo), "bo": jnp.stack(bo),
        "ln1_g": jnp.stack(ln1g), "ln1_b": jnp.stack(ln1b),
        "w1": jnp.stack(w1), "b1": jnp.stack(b1),
        "w2": jnp.stack(w2), "b2": jnp.stack(b2),
        "ln2_g": jnp.stack(ln2g), "ln2_b": jnp.stack(ln2b),
        "pool_w": params["pool_w"].astype(bf),
        "pool_b": params["pool_b"].reshape(1, H),
        "cls_w": jnp.zeros((H, CLS_PAD), jnp.float32)
                 .at[:, :NUM_LABELS].set(params["cls_w"]).astype(bf),
        "cls_b": jnp.zeros((1, CLS_PAD), jnp.float32)
                 .at[:, :NUM_LABELS].set(params["cls_b"].reshape(1, -1)),
    }


# ---------------- forward pass ----------------
def bert_classifier_forward(prep, input_ids, mask):
    B, S = input_ids.shape
    # embeddings (gather = glue in plain JAX); everything else in one pallas_call
    emb = (prep["word_emb"][input_ids]
           + prep["pos_emb"][:S][None, :, :]
           + prep["type_emb"][0][None, None, :])                 # (B, S, H) f32
    # additive key mask (0 for valid, -1e9 for padding), shaped (B, 1, S)
    mask_add = ((1.0 - mask.astype(jnp.float32)) * -1e9).reshape(B, 1, S)
    logits = bert_encoder_classifier(emb, mask_add, prep)        # (B, 128)
    return logits[:, :NUM_LABELS]                                # (B, NUM_LABELS)


if __name__ == "__main__":
    key = jax.random.PRNGKey(0)
    pkey, ikey = jax.random.split(key)
    params = init_params(pkey)
    prep = prepare_params(params)

    input_ids = jax.random.randint(ikey, (BATCH, SEQ), 0, VOCAB, dtype=jnp.int32)
    mask = jnp.ones((BATCH, SEQ), dtype=jnp.int32).at[1, SEQ - 2:].set(0)  # pad last 2 of ex. 1

    fwd = jax.jit(functools.partial(bert_classifier_forward, prep))
    out = fwd(input_ids, mask)
    jax.block_until_ready(out)
    assert out.shape == (BATCH, NUM_LABELS)
    assert bool(jnp.all(out >= 0.0))   # ReLU output is non-negative
    print("KERNEL_OK")
</pallas_src>

<mosaic_0001>
module attributes {stable_mosaic.version = 11 : i64} {
  func.func @_bert_kernel(%arg0: i32, %arg1: memref<1x8x128xf32, #tpu.memory_space<vmem>>, %arg2: memref<1x1x8xf32, #tpu.memory_space<vmem>>, %arg3: memref<1x128xf32, #tpu.memory_space<vmem>>, %arg4: memref<1x128xf32, #tpu.memory_space<vmem>>, %arg5: memref<2x128x384xbf16, #tpu.memory_space<vmem>>, %arg6: memref<2x1x384xf32, #tpu.memory_space<vmem>>, %arg7: memref<2x128x128xbf16, #tpu.memory_space<vmem>>, %arg8: memref<2x1x128xf32, #tpu.memory_space<vmem>>, %arg9: memref<2x1x128xf32, #tpu.memory_space<vmem>>, %arg10: memref<2x1x128xf32, #tpu.memory_space<vmem>>, %arg11: memref<2x128x256xbf16, #tpu.memory_space<vmem>>, %arg12: memref<2x1x256xf32, #tpu.memory_space<vmem>>, %arg13: memref<2x256x128xbf16, #tpu.memory_space<vmem>>, %arg14: memref<2x1x128xf32, #tpu.memory_space<vmem>>, %arg15: memref<2x1x128xf32, #tpu.memory_space<vmem>>, %arg16: memref<2x1x128xf32, #tpu.memory_space<vmem>>, %arg17: memref<128x128xbf16, #tpu.memory_space<vmem>>, %arg18: memref<1x128xf32, #tpu.memory_space<vmem>>, %arg19: memref<128x128xbf16, #tpu.memory_space<vmem>>, %arg20: memref<1x128xf32, #tpu.memory_space<vmem>>, %arg21: memref<1x1x128xf32, #tpu.memory_space<vmem>>) attributes {dimension_semantics = [#tpu.dimension_semantics<parallel>], iteration_bounds = array<i64: 2>, scalar_prefetch = 0 : i64, scratch_operands = 0 : i64, tpu.core_type = #tpu.core_type<tc>, window_params = [{transform_indices = @transform_0, window_bounds = array<i64: 1, 8, 128>}, {transform_indices = @transform_1, window_bounds = array<i64: 1, 1, 8>}, {pipeline_mode = #tpu.pipeline_mode<synchronous>, transform_indices = @transform_2, window_bounds = array<i64: 1, 128>}, {pipeline_mode = #tpu.pipeline_mode<synchronous>, transform_indices = @transform_3, window_bounds = array<i64: 1, 128>}, {pipeline_mode = #tpu.pipeline_mode<synchronous>, transform_indices = @transform_4, window_bounds = array<i64: 2, 128, 384>}, {pipeline_mode = #tpu.pipeline_mode<synchronous>, transform_indices = @transform_5, window_bounds = array<i64: 2, 1, 384>}, {pipeline_mode = #tpu.pipeline_mode<synchronous>, transform_indices = @transform_6, window_bounds = array<i64: 2, 128, 128>}, {pipeline_mode = #tpu.pipeline_mode<synchronous>, transform_indices = @transform_7, window_bounds = array<i64: 2, 1, 128>}, {pipeline_mode = #tpu.pipeline_mode<synchronous>, transform_indices = @transform_8, window_bounds = array<i64: 2, 1, 128>}, {pipeline_mode = #tpu.pipeline_mode<synchronous>, transform_indices = @transform_9, window_bounds = array<i64: 2, 1, 128>}, {pipeline_mode = #tpu.pipeline_mode<synchronous>, transform_indices = @transform_10, window_bounds = array<i64: 2, 128, 256>}, {pipeline_mode = #tpu.pipeline_mode<synchronous>, transform_indices = @transform_11, window_bounds = array<i64: 2, 1, 256>}, {pipeline_mode = #tpu.pipeline_mode<synchronous>, transform_indices = @transform_12, window_bounds = array<i64: 2, 256, 128>}, {pipeline_mode = #tpu.pipeline_mode<synchronous>, transform_indices = @transform_13, window_bounds = array<i64: 2, 1, 128>}, {pipeline_mode = #tpu.pipeline_mode<synchronous>, transform_indices = @transform_14, window_bounds = array<i64: 2, 1, 128>}, {pipeline_mode = #tpu.pipeline_mode<synchronous>, transform_indices = @transform_15, window_bounds = array<i64: 2, 1, 128>}, {pipeline_mode = #tpu.pipeline_mode<synchronous>, transform_indices = @transform_16, window_bounds = array<i64: 128, 128>}, {pipeline_mode = #tpu.pipeline_mode<synchronous>, transform_indices = @transform_17, window_bounds = array<i64: 1, 128>}, {pipeline_mode = #tpu.pipeline_mode<synchronous>, transform_indices = @transform_18, window_bounds = array<i64: 128, 128>}, {pipeline_mode = #tpu.pipeline_mode<synchronous>, transform_indices = @transform_19, window_bounds = array<i64: 1, 128>}, {transform_indices = @transform_20, window_bounds = array<i64: 1, 1, 128>}]} {
    %c0 = arith.constant 0 : index
    %c0_0 = arith.constant 0 : index
    %c0_1 = arith.constant 0 : index
    %0 = vector.load %arg1[%c0, %c0_0, %c0_1] : memref<1x8x128xf32, #tpu.memory_space<vmem>>, vector<1x8x128xf32>
    %1 = vector.shape_cast %0 : vector<1x8x128xf32> to vector<8x128xf32>
    %c0_2 = arith.constant 0 : index
    %c0_3 = arith.constant 0 : index
    %2 = vector.load %arg3[%c0_2, %c0_3] : memref<1x128xf32, #tpu.memory_space<vmem>>, vector<1x128xf32>
    %c0_4 = arith.constant 0 : index
    %c0_5 = arith.constant 0 : index
    %3 = vector.load %arg4[%c0_4, %c0_5] : memref<1x128xf32, #tpu.memory_space<vmem>>, vector<1x128xf32>
    %cst = arith.constant dense<0.000000e+00> : vector<8xf32>
    %4 = vector.multi_reduction <add>, %1, %cst [1] : vector<8x128xf32> to vector<8xf32>
    %5 = vector.shape_cast %4 : vector<8xf32> to vector<8x1xf32>
    %cst_6 = arith.constant 1.280000e+02 : f32
    %6 = vector.broadcast %cst_6 : f32 to vector<8x1xf32>
    %7 = arith.divf %5, %6 : vector<8x1xf32>
    %8 = vector.broadcast %7 : vector<8x1xf32> to vector<8x128xf32>
    %9 = arith.subf %1, %8 : vector<8x128xf32>
    %10 = arith.mulf %9, %9 : vector<8x128xf32>
    %cst_7 = arith.constant dense<0.000000e+00> : vector<8xf32>
    %11 = vector.multi_reduction <add>, %10, %cst_7 [1] : vector<8x128xf32> to vector<8xf32>
    %12 = vector.shape_cast %11 : vector<8xf32> to vector<8x1xf32>
    %cst_8 = arith.constant 1.280000e+02 : f32
    %13 = vector.broadcast %cst_8 : f32 to vector<8x1xf32>
    %14 = arith.divf %12, %13 : vector<8x1xf32>
    %cst_9 = arith.constant 9.99999996E-13 : f32
    %15 = vector.broadcast %cst_9 : f32 to vector<8x1xf32>
    %16 = arith.addf %14, %15 : vector<8x1xf32>
    %17 = math.rsqrt %16 : vector<8x1xf32>
    %18 = vector.broadcast %17 : vector<8x1xf32> to vector<8x128xf32>
    %19 = arith.mulf %9, %18 : vector<8x128xf32>
    %20 = vector.broadcast %2 : vector<1x128xf32> to vector<8x128xf32>
    %21 = arith.mulf %19, %20 : vector<8x128xf32>
    %22 = vector.broadcast %3 : vector<1x128xf32> to vector<8x128xf32>
    %23 = arith.addf %21, %22 : vector<8x128xf32>
    %c0_10 = arith.constant 0 : index
    %c0_11 = arith.constant 0 : index
    %c0_12 = arith.constant 0 : index
    %24 = vector.load %arg2[%c0_10, %c0_11, %c0_12] : memref<1x1x8xf32, #tpu.memory_space<vmem>>, vector<1x1x8xf32>
    %25 = vector.shape_cast %24 : vector<1x1x8xf32> to vector<1x8xf32>
    %26 = arith.truncf %23 : vector<8x128xf32> to vector<8x128xbf16>
    %c0_13 = arith.constant 0 : index
    %c0_14 = arith.constant 0 : index
    %c0_15 = arith.constant 0 : index
    %27 = vector.load %arg5[%c0_13, %c0_14, %c0_15] : memref<2x128x384xbf16, #tpu.memory_space<vmem>>, vector<1x128x384xbf16>
    %28 = vector.shape_cast %27 : vector<1x128x384xbf16> to vector<128x384xbf16>
    %cst_16 = arith.constant dense<0.000000e+00> : vector<8x384xf32>
    %29 = tpu.matmul %26, %28, %cst_16 {dimension_numbers = #tpu.dot_dimension_numbers<[1], [0], [0], [1], [0, 0, 1, 1], [], []>} : vector<8x128xbf16>, vector<128x384xbf16>, vector<8x384xf32> -> vector<8x384xf32>
    %c0_17 = arith.constant 0 : index
    %c0_18 = arith.constant 0 : index
    %c0_19 = arith.constant 0 : index
    %30 = vector.load %arg6[%c0_17, %c0_18, %c0_19] : memref<2x1x384xf32, #tpu.memory_space<vmem>>, vector<1x1x384xf32>
    %31 = vector.shape_cast %30 : vector<1x1x384xf32> to vector<1x384xf32>
    %32 = vector.broadcast %31 : vector<1x384xf32> to vector<8x384xf32>
    %33 = arith.addf %29, %32 : vector<8x384xf32>
    %34 = vector.extract_strided_slice %33 {offsets = [0, 0], sizes = [8, 128], strides = [1, 1]} : vector<8x384xf32> to vector<8x128xf32>
    %35 = vector.extract_strided_slice %33 {offsets = [0, 128], sizes = [8, 128], strides = [1, 1]} : vector<8x384xf32> to vector<8x128xf32>
    %36 = vector.extract_strided_slice %33 {offsets = [0, 256], sizes = [8, 128], strides = [1, 1]} : vector<8x384xf32> to vector<8x128xf32>
    %37 = vector.extract_strided_slice %34 {offsets = [0, 0], sizes = [8, 32], strides = [1, 1]} : vector<8x128xf32> to vector<8x32xf32>
    %38 = vector.extract_strided_slice %35 {offsets = [0, 0], sizes = [8, 32], strides = [1, 1]} : vector<8x128xf32> to vector<8x32xf32>
    %39 = vector.extract_strided_slice %36 {offsets = [0, 0], sizes = [8, 32], strides = [1, 1]} : vector<8x128xf32> to vector<8x32xf32>
    %40 = arith.truncf %37 : vector<8x32xf32> to vector<8x32xbf16>
    %41 = arith.truncf %38 : vector<8x32xf32> to vector<8x32xbf16>
    %cst_20 = arith.constant dense<0.000000e+00> : vector<8x8xf32>
    %42 = tpu.matmul %40, %41, %cst_20 {dimension_numbers = #tpu.dot_dimension_numbers<[1], [1], [0], [0], [0, 0, 1, 0], [], []>} : vector<8x32xbf16>, vector<8x32xbf16>, vector<8x8xf32> -> vector<8x8xf32>
    %43 = vector.broadcast %25 : vector<1x8xf32> to vector<8x8xf32>
    %44 = arith.addf %42, %43 : vector<8x8xf32>
    %cst_21 = arith.constant dense<0xFF800000> : vector<8xf32>
    %45 = vector.multi_reduction <maximumf>, %44, %cst_21 [1] : vector<8x8xf32> to vector<8xf32>
    %46 = vector.shape_cast %45 : vector<8xf32> to vector<8x1xf32>
    %47 = vector.broadcast %46 : vector<8x1xf32> to vector<8x8xf32>
    %48 = arith.subf %44, %47 : vector<8x8xf32>
    %49 = math.exp %48 : vector<8x8xf32>
    %cst_22 = arith.constant dense<0.000000e+00> : vector<8xf32>
    %50 = vector.multi_reduction <add>, %49, %cst_22 [1] : vector<8x8xf32> to vector<8xf32>
    %51 = vector.shape_cast %50 : vector<8xf32> to vector<8x1xf32>
    %52 = tpu.reciprocal %51 {approx = true} : vector<8x1xf32> -> vector<8x1xf32>
    %53 = vector.broadcast %52 : vector<8x1xf32> to vector<8x8xf32>
    %54 = arith.mulf %49, %53 : vector<8x8xf32>
    %55 = arith.truncf %54 : vector<8x8xf32> to vector<8x8xbf16>
    %56 = arith.truncf %39 : vector<8x32xf32> to vector<8x32xbf16>
    %cst_23 = arith.constant dense<0.000000e+00> : vector<8x32xf32>
    %57 = tpu.matmul %55, %56, %cst_23 {dimension_numbers = #tpu.dot_dimension_numbers<[1], [0], [0], [1], [0, 0, 1, 1], [], []>} : vector<8x8xbf16>, vector<8x32xbf16>, vector<8x32xf32> -> vector<8x32xf32>
    %58 = vector.extract_strided_slice %34 {offsets = [0, 32], sizes = [8, 32], strides = [1, 1]} : vector<8x128xf32> to vector<8x32xf32>
    %59 = vector.extract_strided_slice %35 {offsets = [0, 32], sizes = [8, 32], strides = [1, 1]} : vector<8x128xf32> to vector<8x32xf32>
    %60 = vector.extract_strided_slice %36 {offsets = [0, 32], sizes = [8, 32], strides = [1, 1]} : vector<8x128xf32> to vector<8x32xf32>
    %61 = arith.truncf %58 : vector<8x32xf32> to vector<8x32xbf16>
    %62 = arith.truncf %59 : vector<8x32xf32> to vector<8x32xbf16>
    %cst_24 = arith.constant dense<0.000000e+00> : vector<8x8xf32>
    %63 = tpu.matmul %61, %62, %cst_24 {dimension_numbers = #tpu.dot_dimension_numbers<[1], [1], [0], [0], [0, 0, 1, 0], [], []>} : vector<8x32xbf16>, vector<8x32xbf16>, vector<8x8xf32> -> vector<8x8xf32>
    %64 = vector.broadcast %25 : vector<1x8xf32> to vector<8x8xf32>
    %65 = arith.addf %63, %64 : vector<8x8xf32>
    %cst_25 = arith.constant dense<0xFF800000> : vector<8xf32>
    %66 = vector.multi_reduction <maximumf>, %65, %cst_25 [1] : vector<8x8xf32> to vector<8xf32>
    %67 = vector.shape_cast %66 : vector<8xf32> to vector<8x1xf32>
    %68 = vector.broadcast %67 : vector<8x1xf32> to vector<8x8xf32>
    %69 = arith.subf %65, %68 : vector<8x8xf32>
    %70 = math.exp %69 : vector<8x8xf32>
    %cst_26 = arith.constant dense<0.000000e+00> : vector<8xf32>
    %71 = vector.multi_reduction <add>, %70, %cst_26 [1] : vector<8x8xf32> to vector<8xf32>
    %72 = vector.shape_cast %71 : vector<8xf32> to vector<8x1xf32>
    %73 = tpu.reciprocal %72 {approx = true} : vector<8x1xf32> -> vector<8x1xf32>
    %74 = vector.broadcast %73 : vector<8x1xf32> to vector<8x8xf32>
    %75 = arith.mulf %70, %74 : vector<8x8xf32>
    %76 = arith.truncf %75 : vector<8x8xf32> to vector<8x8xbf16>
    %77 = arith.truncf %60 : vector<8x32xf32> to vector<8x32xbf16>
    %cst_27 = arith.constant dense<0.000000e+00> : vector<8x32xf32>
    %78 = tpu.matmul %76, %77, %cst_27 {dimension_numbers = #tpu.dot_dimension_numbers<[1], [0], [0], [1], [0, 0, 1, 1], [], []>} : vector<8x8xbf16>, vector<8x32xbf16>, vector<8x32xf32> -> vector<8x32xf32>
    %79 = vector.extract_strided_slice %34 {offsets = [0, 64], sizes = [8, 32], strides = [1, 1]} : vector<8x128xf32> to vector<8x32xf32>
    %80 = vector.extract_strided_slice %35 {offsets = [0, 64], sizes = [8, 32], strides = [1, 1]} : vector<8x128xf32> to vector<8x32xf32>
    %81 = vector.extract_strided_slice %36 {offsets = [0, 64], sizes = [8, 32], strides = [1, 1]} : vector<8x128xf32> to vector<8x32xf32>
    %82 = arith.truncf %79 : vector<8x32xf32> to vector<8x32xbf16>
    %83 = arith.truncf %80 : vector<8x32xf32> to vector<8x32xbf16>
    %cst_28 = arith.constant dense<0.000000e+00> : vector<8x8xf32>
    %84 = tpu.matmul %82, %83, %cst_28 {dimension_numbers = #tpu.dot_dimension_numbers<[1], [1], [0], [0], [0, 0, 1, 0], [], []>} : vector<8x32xbf16>, vector<8x32xbf16>, vector<8x8xf32> -> vector<8x8xf32>
    %85 = vector.broadcast %25 : vector<1x8xf32> to vector<8x8xf32>
    %86 = arith.addf %84, %85 : vector<8x8xf32>
    %cst_29 = arith.constant dense<0xFF800000> : vector<8xf32>
    %87 = vector.multi_reduction <maximumf>, %86, %cst_29 [1] : vector<8x8xf32> to vector<8xf32>
    %88 = vector.shape_cast %87 : vector<8xf32> to vector<8x1xf32>
    %89 = vector.broadcast %88 : vector<8x1xf32> to vector<8x8xf32>
    %90 = arith.subf %86, %89 : vector<8x8xf32>
    %91 = math.exp %90 : vector<8x8xf32>
    %cst_30 = arith.constant dense<0.000000e+00> : vector<8xf32>
    %92 = vector.multi_reduction <add>, %91, %cst_30 [1] : vector<8x8xf32> to vector<8xf32>
    %93 = vector.shape_cast %92 : vector<8xf32> to vector<8x1xf32>
    %94 = tpu.reciprocal %93 {approx = true} : vector<8x1xf32> -> vector<8x1xf32>
    %95 = vector.broadcast %94 : vector<8x1xf32> to vector<8x8xf32>
    %96 = arith.mulf %91, %95 : vector<8x8xf32>
    %97 = arith.truncf %96 : vector<8x8xf32> to vector<8x8xbf16>
    %98 = arith.truncf %81 : vector<8x32xf32> to vector<8x32xbf16>
    %cst_31 = arith.constant dense<0.000000e+00> : vector<8x32xf32>
    %99 = tpu.matmul %97, %98, %cst_31 {dimension_numbers = #tpu.dot_dimension_numbers<[1], [0], [0], [1], [0, 0, 1, 1], [], []>} : vector<8x8xbf16>, vector<8x32xbf16>, vector<8x32xf32> -> vector<8x32xf32>
    %100 = vector.extract_strided_slice %34 {offsets = [0, 96], sizes = [8, 32], strides = [1, 1]} : vector<8x128xf32> to vector<8x32xf32>
    %101 = vector.extract_strided_slice %35 {offsets = [0, 96], sizes = [8, 32], strides = [1, 1]} : vector<8x128xf32> to vector<8x32xf32>
    %102 = vector.extract_strided_slice %36 {offsets = [0, 96], sizes = [8, 32], strides = [1, 1]} : vector<8x128xf32> to vector<8x32xf32>
    %103 = arith.truncf %100 : vector<8x32xf32> to vector<8x32xbf16>
    %104 = arith.truncf %101 : vector<8x32xf32> to vector<8x32xbf16>
    %cst_32 = arith.constant dense<0.000000e+00> : vector<8x8xf32>
    %105 = tpu.matmul %103, %104, %cst_32 {dimension_numbers = #tpu.dot_dimension_numbers<[1], [1], [0], [0], [0, 0, 1, 0], [], []>} : vector<8x32xbf16>, vector<8x32xbf16>, vector<8x8xf32> -> vector<8x8xf32>
    %106 = vector.broadcast %25 : vector<1x8xf32> to vector<8x8xf32>
    %107 = arith.addf %105, %106 : vector<8x8xf32>
    %cst_33 = arith.constant dense<0xFF800000> : vector<8xf32>
    %108 = vector.multi_reduction <maximumf>, %107, %cst_33 [1] : vector<8x8xf32> to vector<8xf32>
    %109 = vector.shape_cast %108 : vector<8xf32> to vector<8x1xf32>
    %110 = vector.broadcast %109 : vector<8x1xf32> to vector<8x8xf32>
    %111 = arith.subf %107, %110 : vector<8x8xf32>
    %112 = math.exp %111 : vector<8x8xf32>
    %cst_34 = arith.constant dense<0.000000e+00> : vector<8xf32>
    %113 = vector.multi_reduction <add>, %112, %cst_34 [1] : vector<8x8xf32> to vector<8xf32>
    %114 = vector.shape_cast %113 : vector<8xf32> to vector<8x1xf32>
    %115 = tpu.reciprocal %114 {approx = true} : vector<8x1xf32> -> vector<8x1xf32>
    %116 = vector.broadcast %115 : vector<8x1xf32> to vector<8x8xf32>
    %117 = arith.mulf %112, %116 : vector<8x8xf32>
    %118 = arith.truncf %117 : vector<8x8xf32> to vector<8x8xbf16>
    %119 = arith.truncf %102 : vector<8x32xf32> to vector<8x32xbf16>
    %cst_35 = arith.constant dense<0.000000e+00> : vector<8x32xf32>
    %120 = tpu.matmul %118, %119, %cst_35 {dimension_numbers = #tpu.dot_dimension_numbers<[1], [0], [0], [1], [0, 0, 1, 1], [], []>} : vector<8x8xbf16>, vector<8x32xbf16>, vector<8x32xf32> -> vector<8x32xf32>
    %121 = tpu.concatenate %57, %78, %99, %120 in 1 : vector<8x32xf32>, vector<8x32xf32>, vector<8x32xf32>, vector<8x32xf32> -> vector<8x128xf32>
    %122 = arith.truncf %121 : vector<8x128xf32> to vector<8x128xbf16>
    %c0_36 = arith.constant 0 : index
    %c0_37 = arith.constant 0 : index
    %c0_38 = arith.constant 0 : index
    %123 = vector.load %arg7[%c0_36, %c0_37, %c0_38] : memref<2x128x128xbf16, #tpu.memory_space<vmem>>, vector<1x128x128xbf16>
    %124 = vector.shape_cast %123 : vector<1x128x128xbf16> to vector<128x128xbf16>
    %cst_39 = arith.constant dense<0.000000e+00> : vector<8x128xf32>
    %125 = tpu.matmul %122, %124, %cst_39 {dimension_numbers = #tpu.dot_dimension_numbers<[1], [0], [0], [1], [0, 0, 1, 1], [], []>} : vector<8x128xbf16>, vector<128x128xbf16>, vector<8x128xf32> -> vector<8x128xf32>
    %c0_40 = arith.constant 0 : index
    %c0_41 = arith.constant 0 : index
    %c0_42 = arith.constant 0 : index
    %126 = vector.load %arg8[%c0_40, %c0_41, %c0_42] : memref<2x1x128xf32, #tpu.memory_space<vmem>>, vector<1x1x128xf32>
    %127 = vector.shape_cast %126 : vector<1x1x128xf32> to vector<1x128xf32>
    %128 = vector.broadcast %127 : vector<1x128xf32> to vector<8x128xf32>
    %129 = arith.addf %125, %128 : vector<8x128xf32>
    %130 = arith.addf %129, %23 : vector<8x128xf32>
    %c0_43 = arith.constant 0 : index
    %c0_44 = arith.constant 0 : index
    %c0_45 = arith.constant 0 : index
    %131 = vector.load %arg9[%c0_43, %c0_44, %c0_45] : memref<2x1x128xf32, #tpu.memory_space<vmem>>, vector<1x1x128xf32>
    %132 = vector.shape_cast %131 : vector<1x1x128xf32> to vector<1x128xf32>
    %c0_46 = arith.constant 0 : index
    %c0_47 = arith.constant 0 : index
    %c0_48 = arith.constant 0 : index
    %133 = vector.load %arg10[%c0_46, %c0_47, %c0_48] : memref<2x1x128xf32, #tpu.memory_space<vmem>>, vector<1x1x128xf32>
    %134 = vector.shape_cast %133 : vector<1x1x128xf32> to vector<1x128xf32>
    %cst_49 = arith.constant dense<0.000000e+00> : vector<8xf32>
    %135 = vector.multi_reduction <add>, %130, %cst_49 [1] : vector<8x128xf32> to vector<8xf32>
    %136 = vector.shape_cast %135 : vector<8xf32> to vector<8x1xf32>
    %cst_50 = arith.constant 1.280000e+02 : f32
    %137 = vector.broadcast %cst_50 : f32 to vector<8x1xf32>
    %138 = arith.divf %136, %137 : vector<8x1xf32>
    %139 = vector.broadcast %138 : vector<8x1xf32> to vector<8x128xf32>
    %140 = arith.subf %130, %139 : vector<8x128xf32>
    %141 = arith.mulf %140, %140 : vector<8x128xf32>
    %cst_51 = arith.constant dense<0.000000e+00> : vector<8xf32>
    %142 = vector.multi_reduction <add>, %141, %cst_51 [1] : vector<8x128xf32> to vector<8xf32>
    %143 = vector.shape_cast %142 : vector<8xf32> to vector<8x1xf32>
    %cst_52 = arith.constant 1.280000e+02 : f32
    %144 = vector.broadcast %cst_52 : f32 to vector<8x1xf32>
    %145 = arith.divf %143, %144 : vector<8x1xf32>
    %cst_53 = arith.constant 9.99999996E-13 : f32
    %146 = vector.broadcast %cst_53 : f32 to vector<8x1xf32>
    %147 = arith.addf %145, %146 : vector<8x1xf32>
    %148 = math.rsqrt %147 : vector<8x1xf32>
    %149 = vector.broadcast %148 : vector<8x1xf32> to vector<8x128xf32>
    %150 = arith.mulf %140, %149 : vector<8x128xf32>
    %151 = vector.broadcast %132 : vector<1x128xf32> to vector<8x128xf32>
    %152 = arith.mulf %150, %151 : vector<8x128xf32>
    %153 = vector.broadcast %134 : vector<1x128xf32> to vector<8x128xf32>
    %154 = arith.addf %152, %153 : vector<8x128xf32>
    %155 = arith.truncf %154 : vector<8x128xf32> to vector<8x128xbf16>
    %c0_54 = arith.constant 0 : index
    %c0_55 = arith.constant 0 : index
    %c0_56 = arith.constant 0 : index
    %156 = vector.load %arg11[%c0_54, %c0_55, %c0_56] : memref<2x128x256xbf16, #tpu.memory_space<vmem>>, vector<1x128x256xbf16>
    %157 = vector.shape_cast %156 : vector<1x128x256xbf16> to vector<128x256xbf16>
    %cst_57 = arith.constant dense<0.000000e+00> : vector<8x256xf32>
    %158 = tpu.matmul %155, %157, %cst_57 {dimension_numbers = #tpu.dot_dimension_numbers<[1], [0], [0], [1], [0, 0, 1, 1], [], []>} : vector<8x128xbf16>, vector<128x256xbf16>, vector<8x256xf32> -> vector<8x256xf32>
    %c0_58 = arith.constant 0 : index
    %c0_59 = arith.constant 0 : index
    %c0_60 = arith.constant 0 : index
    %159 = vector.load %arg12[%c0_58, %c0_59, %c0_60] : memref<2x1x256xf32, #tpu.memory_space<vmem>>, vector<1x1x256xf32>
    %160 = vector.shape_cast %159 : vector<1x1x256xf32> to vector<1x256xf32>
    %161 = vector.broadcast %160 : vector<1x256xf32> to vector<8x256xf32>
    %162 = arith.addf %158, %161 : vector<8x256xf32>
    %cst_61 = arith.constant 5.000000e-01 : f32
    %163 = vector.broadcast %cst_61 : f32 to vector<8x256xf32>
    %164 = arith.mulf %163, %162 : vector<8x256xf32>
    %cst_62 = arith.constant 4.471500e-02 : f32
    %165 = vector.broadcast %cst_62 : f32 to vector<8x256xf32>
    %166 = arith.mulf %165, %162 : vector<8x256xf32>
    %167 = arith.mulf %166, %162 : vector<8x256xf32>
    %168 = arith.mulf %167, %162 : vector<8x256xf32>
    %169 = arith.addf %162, %168 : vector<8x256xf32>
    %cst_63 = arith.constant 0.797884583 : f32
    %170 = vector.broadcast %cst_63 : f32 to vector<8x256xf32>
    %171 = arith.mulf %170, %169 : vector<8x256xf32>
    %172 = math.tanh %171 : vector<8x256xf32>
    %cst_64 = arith.constant 1.000000e+00 : f32
    %173 = vector.broadcast %cst_64 : f32 to vector<8x256xf32>
    %174 = arith.addf %173, %172 : vector<8x256xf32>
    %175 = arith.mulf %164, %174 : vector<8x256xf32>
    %176 = arith.truncf %175 : vector<8x256xf32> to vector<8x256xbf16>
    %c0_65 = arith.constant 0 : index
    %c0_66 = arith.constant 0 : index
    %c0_67 = arith.constant 0 : index
    %177 = vector.load %arg13[%c0_65, %c0_66, %c0_67] : memref<2x256x128xbf16, #tpu.memory_space<vmem>>, vector<1x256x128xbf16>
    %178 = vector.shape_cast %177 : vector<1x256x128xbf16> to vector<256x128xbf16>
    %cst_68 = arith.constant dense<0.000000e+00> : vector<8x128xf32>
    %179 = tpu.matmul %176, %178, %cst_68 {dimension_numbers = #tpu.dot_dimension_numbers<[1], [0], [0], [1], [0, 0, 1, 1], [], []>} : vector<8x256xbf16>, vector<256x128xbf16>, vector<8x128xf32> -> vector<8x128xf32>
    %c0_69 = arith.constant 0 : index
    %c0_70 = arith.constant 0 : index
    %c0_71 = arith.constant 0 : index
    %180 = vector.load %arg14[%c0_69, %c0_70, %c0_71] : memref<2x1x128xf32, #tpu.memory_space<vmem>>, vector<1x1x128xf32>
    %181 = vector.shape_cast %180 : vector<1x1x128xf32> to vector<1x128xf32>
    %182 = vector.broadcast %181 : vector<1x128xf32> to vector<8x128xf32>
    %183 = arith.addf %179, %182 : vector<8x128xf32>
    %184 = arith.addf %183, %154 : vector<8x128xf32>
    %c0_72 = arith.constant 0 : index
    %c0_73 = arith.constant 0 : index
    %c0_74 = arith.constant 0 : index
    %185 = vector.load %arg15[%c0_72, %c0_73, %c0_74] : memref<2x1x128xf32, #tpu.memory_space<vmem>>, vector<1x1x128xf32>
    %186 = vector.shape_cast %185 : vector<1x1x128xf32> to vector<1x128xf32>
    %c0_75 = arith.constant 0 : index
    %c0_76 = arith.constant 0 : index
    %c0_77 = arith.constant 0 : index
    %187 = vector.load %arg16[%c0_75, %c0_76, %c0_77] : memref<2x1x128xf32, #tpu.memory_space<vmem>>, vector<1x1x128xf32>
    %188 = vector.shape_cast %187 : vector<1x1x128xf32> to vector<1x128xf32>
    %cst_78 = arith.constant dense<0.000000e+00> : vector<8xf32>
    %189 = vector.multi_reduction <add>, %184, %cst_78 [1] : vector<8x128xf32> to vector<8xf32>
    %190 = vector.shape_cast %189 : vector<8xf32> to vector<8x1xf32>
    %cst_79 = arith.constant 1.280000e+02 : f32
    %191 = vector.broadcast %cst_79 : f32 to vector<8x1xf32>
    %192 = arith.divf %190, %191 : vector<8x1xf32>
    %193 = vector.broadcast %192 : vector<8x1xf32> to vector<8x128xf32>
    %194 = arith.subf %184, %193 : vector<8x128xf32>
    %195 = arith.mulf %194, %194 : vector<8x128xf32>
    %cst_80 = arith.constant dense<0.000000e+00> : vector<8xf32>
    %196 = vector.multi_reduction <add>, %195, %cst_80 [1] : vector<8x128xf32> to vector<8xf32>
    %197 = vector.shape_cast %196 : vector<8xf32> to vector<8x1xf32>
    %cst_81 = arith.constant 1.280000e+02 : f32
    %198 = vector.broadcast %cst_81 : f32 to vector<8x1xf32>
    %199 = arith.divf %197, %198 : vector<8x1xf32>
    %cst_82 = arith.constant 9.99999996E-13 : f32
    %200 = vector.broadcast %cst_82 : f32 to vector<8x1xf32>
    %201 = arith.addf %199, %200 : vector<8x1xf32>
    %202 = math.rsqrt %201 : vector<8x1xf32>
    %203 = vector.broadcast %202 : vector<8x1xf32> to vector<8x128xf32>
    %204 = arith.mulf %194, %203 : vector<8x128xf32>
    %205 = vector.broadcast %186 : vector<1x128xf32> to vector<8x128xf32>
    %206 = arith.mulf %204, %205 : vector<8x128xf32>
    %207 = vector.broadcast %188 : vector<1x128xf32> to vector<8x128xf32>
    %208 = arith.addf %206, %207 : vector<8x128xf32>
    %209 = arith.truncf %208 : vector<8x128xf32> to vector<8x128xbf16>
    %c1 = arith.constant 1 : index
    %c0_83 = arith.constant 0 : index
    %c0_84 = arith.constant 0 : index
    %210 = vector.load %arg5[%c1, %c0_83, %c0_84] : memref<2x128x384xbf16, #tpu.memory_space<vmem>>, vector<1x128x384xbf16>
    %211 = vector.shape_cast %210 : vector<1x128x384xbf16> to vector<128x384xbf16>
    %cst_85 = arith.constant dense<0.000000e+00> : vector<8x384xf32>
    %212 = tpu.matmul %209, %211, %cst_85 {dimension_numbers = #tpu.dot_dimension_numbers<[1], [0], [0], [1], [0, 0, 1, 1], [], []>} : vector<8x128xbf16>, vector<128x384xbf16>, vector<8x384xf32> -> vector<8x384xf32>
    %c1_86 = arith.constant 1 : index
    %c0_87 = arith.constant 0 : index
    %c0_88 = arith.constant 0 : index
    %213 = vector.load %arg6[%c1_86, %c0_87, %c0_88] : memref<2x1x384xf32, #tpu.memory_space<vmem>>, vector<1x1x384xf32>
    %214 = vector.shape_cast %213 : vector<1x1x384xf32> to vector<1x384xf32>
    %215 = vector.broadcast %214 : vector<1x384xf32> to vector<8x384xf32>
    %216 = arith.addf %212, %215 : vector<8x384xf32>
    %217 = vector.extract_strided_slice %216 {offsets = [0, 0], sizes = [8, 128], strides = [1, 1]} : vector<8x384xf32> to vector<8x128xf32>
    %218 = vector.extract_strided_slice %216 {offsets = [0, 128], sizes = [8, 128], strides = [1, 1]} : vector<8x384xf32> to vector<8x128xf32>
    %219 = vector.extract_strided_slice %216 {offsets = [0, 256], sizes = [8, 128], strides = [1, 1]} : vector<8x384xf32> to vector<8x128xf32>
    %220 = vector.extract_strided_slice %217 {offsets = [0, 0], sizes = [8, 32], strides = [1, 1]} : vector<8x128xf32> to vector<8x32xf32>
    %221 = vector.extract_strided_slice %218 {offsets = [0, 0], sizes = [8, 32], strides = [1, 1]} : vector<8x128xf32> to vector<8x32xf32>
    %222 = vector.extract_strided_slice %219 {offsets = [0, 0], sizes = [8, 32], strides = [1, 1]} : vector<8x128xf32> to vector<8x32xf32>
    %223 = arith.truncf %220 : vector<8x32xf32> to vector<8x32xbf16>
    %224 = arith.truncf %221 : vector<8x32xf32> to vector<8x32xbf16>
    %cst_89 = arith.constant dense<0.000000e+00> : vector<8x8xf32>
    %225 = tpu.matmul %223, %224, %cst_89 {dimension_numbers = #tpu.dot_dimension_numbers<[1], [1], [0], [0], [0, 0, 1, 0], [], []>} : vector<8x32xbf16>, vector<8x32xbf16>, vector<8x8xf32> -> vector<8x8xf32>
    %226 = vector.broadcast %25 : vector<1x8xf32> to vector<8x8xf32>
    %227 = arith.addf %225, %226 : vector<8x8xf32>
    %cst_90 = arith.constant dense<0xFF800000> : vector<8xf32>
    %228 = vector.multi_reduction <maximumf>, %227, %cst_90 [1] : vector<8x8xf32> to vector<8xf32>
    %229 = vector.shape_cast %228 : vector<8xf32> to vector<8x1xf32>
    %230 = vector.broadcast %229 : vector<8x1xf32> to vector<8x8xf32>
    %231 = arith.subf %227, %230 : vector<8x8xf32>
    %232 = math.exp %231 : vector<8x8xf32>
    %cst_91 = arith.constant dense<0.000000e+00> : vector<8xf32>
    %233 = vector.multi_reduction <add>, %232, %cst_91 [1] : vector<8x8xf32> to vector<8xf32>
    %234 = vector.shape_cast %233 : vector<8xf32> to vector<8x1xf32>
    %235 = tpu.reciprocal %234 {approx = true} : vector<8x1xf32> -> vector<8x1xf32>
    %236 = vector.broadcast %235 : vector<8x1xf32> to vector<8x8xf32>
    %237 = arith.mulf %232, %236 : vector<8x8xf32>
    %238 = arith.truncf %237 : vector<8x8xf32> to vector<8x8xbf16>
    %239 = arith.truncf %222 : vector<8x32xf32> to vector<8x32xbf16>
    %cst_92 = arith.constant dense<0.000000e+00> : vector<8x32xf32>
    %240 = tpu.matmul %238, %239, %cst_92 {dimension_numbers = #tpu.dot_dimension_numbers<[1], [0], [0], [1], [0, 0, 1, 1], [], []>} : vector<8x8xbf16>, vector<8x32xbf16>, vector<8x32xf32> -> vector<8x32xf32>
    %241 = vector.extract_strided_slice %217 {offsets = [0, 32], sizes = [8, 32], strides = [1, 1]} : vector<8x128xf32> to vector<8x32xf32>
    %242 = vector.extract_strided_slice %218 {offsets = [0, 32], sizes = [8, 32], strides = [1, 1]} : vector<8x128xf32> to vector<8x32xf32>
    %243 = vector.extract_strided_slice %219 {offsets = [0, 32], sizes = [8, 32], strides = [1, 1]} : vector<8x128xf32> to vector<8x32xf32>
    %244 = arith.truncf %241 : vector<8x32xf32> to vector<8x32xbf16>
    %245 = arith.truncf %242 : vector<8x32xf32> to vector<8x32xbf16>
    %cst_93 = arith.constant dense<0.000000e+00> : vector<8x8xf32>
    %246 = tpu.matmul %244, %245, %cst_93 {dimension_numbers = #tpu.dot_dimension_numbers<[1], [1], [0], [0], [0, 0, 1, 0], [], []>} : vector<8x32xbf16>, vector<8x32xbf16>, vector<8x8xf32> -> vector<8x8xf32>
    %247 = vector.broadcast %25 : vector<1x8xf32> to vector<8x8xf32>
    %248 = arith.addf %246, %247 : vector<8x8xf32>
    %cst_94 = arith.constant dense<0xFF800000> : vector<8xf32>
    %249 = vector.multi_reduction <maximumf>, %248, %cst_94 [1] : vector<8x8xf32> to vector<8xf32>
    %250 = vector.shape_cast %249 : vector<8xf32> to vector<8x1xf32>
    %251 = vector.broadcast %250 : vector<8x1xf32> to vector<8x8xf32>
    %252 = arith.subf %248, %251 : vector<8x8xf32>
    %253 = math.exp %252 : vector<8x8xf32>
    %cst_95 = arith.constant dense<0.000000e+00> : vector<8xf32>
    %254 = vector.multi_reduction <add>, %253, %cst_95 [1] : vector<8x8xf32> to vector<8xf32>
    %255 = vector.shape_cast %254 : vector<8xf32> to vector<8x1xf32>
    %256 = tpu.reciprocal %255 {approx = true} : vector<8x1xf32> -> vector<8x1xf32>
    %257 = vector.broadcast %256 : vector<8x1xf32> to vector<8x8xf32>
    %258 = arith.mulf %253, %257 : vector<8x8xf32>
    %259 = arith.truncf %258 : vector<8x8xf32> to vector<8x8xbf16>
    %260 = arith.truncf %243 : vector<8x32xf32> to vector<8x32xbf16>
    %cst_96 = arith.constant dense<0.000000e+00> : vector<8x32xf32>
    %261 = tpu.matmul %259, %260, %cst_96 {dimension_numbers = #tpu.dot_dimension_numbers<[1], [0], [0], [1], [0, 0, 1, 1], [], []>} : vector<8x8xbf16>, vector<8x32xbf16>, vector<8x32xf32> -> vector<8x32xf32>
    %262 = vector.extract_strided_slice %217 {offsets = [0, 64], sizes = [8, 32], strides = [1, 1]} : vector<8x128xf32> to vector<8x32xf32>
    %263 = vector.extract_strided_slice %218 {offsets = [0, 64], sizes = [8, 32], strides = [1, 1]} : vector<8x128xf32> to vector<8x32xf32>
    %264 = vector.extract_strided_slice %219 {offsets = [0, 64], sizes = [8, 32], strides = [1, 1]} : vector<8x128xf32> to vector<8x32xf32>
    %265 = arith.truncf %262 : vector<8x32xf32> to vector<8x32xbf16>
    %266 = arith.truncf %263 : vector<8x32xf32> to vector<8x32xbf16>
    %cst_97 = arith.constant dense<0.000000e+00> : vector<8x8xf32>
    %267 = tpu.matmul %265, %266, %cst_97 {dimension_numbers = #tpu.dot_dimension_numbers<[1], [1], [0], [0], [0, 0, 1, 0], [], []>} : vector<8x32xbf16>, vector<8x32xbf16>, vector<8x8xf32> -> vector<8x8xf32>
    %268 = vector.broadcast %25 : vector<1x8xf32> to vector<8x8xf32>
    %269 = arith.addf %267, %268 : vector<8x8xf32>
    %cst_98 = arith.constant dense<0xFF800000> : vector<8xf32>
    %270 = vector.multi_reduction <maximumf>, %269, %cst_98 [1] : vector<8x8xf32> to vector<8xf32>
    %271 = vector.shape_cast %270 : vector<8xf32> to vector<8x1xf32>
    %272 = vector.broadcast %271 : vector<8x1xf32> to vector<8x8xf32>
    %273 = arith.subf %269, %272 : vector<8x8xf32>
    %274 = math.exp %273 : vector<8x8xf32>
    %cst_99 = arith.constant dense<0.000000e+00> : vector<8xf32>
    %275 = vector.multi_reduction <add>, %274, %cst_99 [1] : vector<8x8xf32> to vector<8xf32>
    %276 = vector.shape_cast %275 : vector<8xf32> to vector<8x1xf32>
    %277 = tpu.reciprocal %276 {approx = true} : vector<8x1xf32> -> vector<8x1xf32>
    %278 = vector.broadcast %277 : vector<8x1xf32> to vector<8x8xf32>
    %279 = arith.mulf %274, %278 : vector<8x8xf32>
    %280 = arith.truncf %279 : vector<8x8xf32> to vector<8x8xbf16>
    %281 = arith.truncf %264 : vector<8x32xf32> to vector<8x32xbf16>
    %cst_100 = arith.constant dense<0.000000e+00> : vector<8x32xf32>
    %282 = tpu.matmul %280, %281, %cst_100 {dimension_numbers = #tpu.dot_dimension_numbers<[1], [0], [0], [1], [0, 0, 1, 1], [], []>} : vector<8x8xbf16>, vector<8x32xbf16>, vector<8x32xf32> -> vector<8x32xf32>
    %283 = vector.extract_strided_slice %217 {offsets = [0, 96], sizes = [8, 32], strides = [1, 1]} : vector<8x128xf32> to vector<8x32xf32>
    %284 = vector.extract_strided_slice %218 {offsets = [0, 96], sizes = [8, 32], strides = [1, 1]} : vector<8x128xf32> to vector<8x32xf32>
    %285 = vector.extract_strided_slice %219 {offsets = [0, 96], sizes = [8, 32], strides = [1, 1]} : vector<8x128xf32> to vector<8x32xf32>
    %286 = arith.truncf %283 : vector<8x32xf32> to vector<8x32xbf16>
    %287 = arith.truncf %284 : vector<8x32xf32> to vector<8x32xbf16>
    %cst_101 = arith.constant dense<0.000000e+00> : vector<8x8xf32>
    %288 = tpu.matmul %286, %287, %cst_101 {dimension_numbers = #tpu.dot_dimension_numbers<[1], [1], [0], [0], [0, 0, 1, 0], [], []>} : vector<8x32xbf16>, vector<8x32xbf16>, vector<8x8xf32> -> vector<8x8xf32>
    %289 = vector.broadcast %25 : vector<1x8xf32> to vector<8x8xf32>
    %290 = arith.addf %288, %289 : vector<8x8xf32>
    %cst_102 = arith.constant dense<0xFF800000> : vector<8xf32>
    %291 = vector.multi_reduction <maximumf>, %290, %cst_102 [1] : vector<8x8xf32> to vector<8xf32>
    %292 = vector.shape_cast %291 : vector<8xf32> to vector<8x1xf32>
    %293 = vector.broadcast %292 : vector<8x1xf32> to vector<8x8xf32>
    %294 = arith.subf %290, %293 : vector<8x8xf32>
    %295 = math.exp %294 : vector<8x8xf32>
    %cst_103 = arith.constant dense<0.000000e+00> : vector<8xf32>
    %296 = vector.multi_reduction <add>, %295, %cst_103 [1] : vector<8x8xf32> to vector<8xf32>
    %297 = vector.shape_cast %296 : vector<8xf32> to vector<8x1xf32>
    %298 = tpu.reciprocal %297 {approx = true} : vector<8x1xf32> -> vector<8x1xf32>
    %299 = vector.broadcast %298 : vector<8x1xf32> to vector<8x8xf32>
    %300 = arith.mulf %295, %299 : vector<8x8xf32>
    %301 = arith.truncf %300 : vector<8x8xf32> to vector<8x8xbf16>
    %302 = arith.truncf %285 : vector<8x32xf32> to vector<8x32xbf16>
    %cst_104 = arith.constant dense<0.000000e+00> : vector<8x32xf32>
    %303 = tpu.matmul %301, %302, %cst_104 {dimension_numbers = #tpu.dot_dimension_numbers<[1], [0], [0], [1], [0, 0, 1, 1], [], []>} : vector<8x8xbf16>, vector<8x32xbf16>, vector<8x32xf32> -> vector<8x32xf32>
    %304 = tpu.concatenate %240, %261, %282, %303 in 1 : vector<8x32xf32>, vector<8x32xf32>, vector<8x32xf32>, vector<8x32xf32> -> vector<8x128xf32>
    %305 = arith.truncf %304 : vector<8x128xf32> to vector<8x128xbf16>
    %c1_105 = arith.constant 1 : index
    %c0_106 = arith.constant 0 : index
    %c0_107 = arith.constant 0 : index
    %306 = vector.load %arg7[%c1_105, %c0_106, %c0_107] : memref<2x128x128xbf16, #tpu.memory_space<vmem>>, vector<1x128x128xbf16>
    %307 = vector.shape_cast %306 : vector<1x128x128xbf16> to vector<128x128xbf16>
    %cst_108 = arith.constant dense<0.000000e+00> : vector<8x128xf32>
    %308 = tpu.matmul %305, %307, %cst_108 {dimension_numbers = #tpu.dot_dimension_numbers<[1], [0], [0], [1], [0, 0, 1, 1], [], []>} : vector<8x128xbf16>, vector<128x128xbf16>, vector<8x128xf32> -> vector<8x128xf32>
    %c1_109 = arith.constant 1 : index
    %c0_110 = arith.constant 0 : index
    %c0_111 = arith.constant 0 : index
    %309 = vector.load %arg8[%c1_109, %c0_110, %c0_111] : memref<2x1x128xf32, #tpu.memory_space<vmem>>, vector<1x1x128xf32>
    %310 = vector.shape_cast %309 : vector<1x1x128xf32> to vector<1x128xf32>
    %311 = vector.broadcast %310 : vector<1x128xf32> to vector<8x128xf32>
    %312 = arith.addf %308, %311 : vector<8x128xf32>
    %313 = arith.addf %312, %208 : vector<8x128xf32>
    %c1_112 = arith.constant 1 : index
    %c0_113 = arith.constant 0 : index
    %c0_114 = arith.constant 0 : index
    %314 = vector.load %arg9[%c1_112, %c0_113, %c0_114] : memref<2x1x128xf32, #tpu.memory_space<vmem>>, vector<1x1x128xf32>
    %315 = vector.shape_cast %314 : vector<1x1x128xf32> to vector<1x128xf32>
    %c1_115 = arith.constant 1 : index
    %c0_116 = arith.constant 0 : index
    %c0_117 = arith.constant 0 : index
    %316 = vector.load %arg10[%c1_115, %c0_116, %c0_117] : memref<2x1x128xf32, #tpu.memory_space<vmem>>, vector<1x1x128xf32>
    %317 = vector.shape_cast %316 : vector<1x1x128xf32> to vector<1x128xf32>
    %cst_118 = arith.constant dense<0.000000e+00> : vector<8xf32>
    %318 = vector.multi_reduction <add>, %313, %cst_118 [1] : vector<8x128xf32> to vector<8xf32>
    %319 = vector.shape_cast %318 : vector<8xf32> to vector<8x1xf32>
    %cst_119 = arith.constant 1.280000e+02 : f32
    %320 = vector.broadcast %cst_119 : f32 to vector<8x1xf32>
    %321 = arith.divf %319, %320 : vector<8x1xf32>
    %322 = vector.broadcast %321 : vector<8x1xf32> to vector<8x128xf32>
    %323 = arith.subf %313, %322 : vector<8x128xf32>
    %324 = arith.mulf %323, %323 : vector<8x128xf32>
    %cst_120 = arith.constant dense<0.000000e+00> : vector<8xf32>
    %325 = vector.multi_reduction <add>, %324, %cst_120 [1] : vector<8x128xf32> to vector<8xf32>
    %326 = vector.shape_cast %325 : vector<8xf32> to vector<8x1xf32>
    %cst_121 = arith.constant 1.280000e+02 : f32
    %327 = vector.broadcast %cst_121 : f32 to vector<8x1xf32>
    %328 = arith.divf %326, %327 : vector<8x1xf32>
    %cst_122 = arith.constant 9.99999996E-13 : f32
    %329 = vector.broadcast %cst_122 : f32 to vector<8x1xf32>
    %330 = arith.addf %328, %329 : vector<8x1xf32>
    %331 = math.rsqrt %330 : vector<8x1xf32>
    %332 = vector.broadcast %331 : vector<8x1xf32> to vector<8x128xf32>
    %333 = arith.mulf %323, %332 : vector<8x128xf32>
    %334 = vector.broadcast %315 : vector<1x128xf32> to vector<8x128xf32>
    %335 = arith.mulf %333, %334 : vector<8x128xf32>
    %336 = vector.broadcast %317 : vector<1x128xf32> to vector<8x128xf32>
    %337 = arith.addf %335, %336 : vector<8x128xf32>
    %338 = arith.truncf %337 : vector<8x128xf32> to vector<8x128xbf16>
    %c1_123 = arith.constant 1 : index
    %c0_124 = arith.constant 0 : index
    %c0_125 = arith.constant 0 : index
    %339 = vector.load %arg11[%c1_123, %c0_124, %c0_125] : memref<2x128x256xbf16, #tpu.memory_space<vmem>>, vector<1x128x256xbf16>
    %340 = vector.shape_cast %339 : vector<1x128x256xbf16> to vector<128x256xbf16>
    %cst_126 = arith.constant dense<0.000000e+00> : vector<8x256xf32>
    %341 = tpu.matmul %338, %340, %cst_126 {dimension_numbers = #tpu.dot_dimension_numbers<[1], [0], [0], [1], [0, 0, 1, 1], [], []>} : vector<8x128xbf16>, vector<128x256xbf16>, vector<8x256xf32> -> vector<8x256xf32>
    %c1_127 = arith.constant 1 : index
    %c0_128 = arith.constant 0 : index
    %c0_129 = arith.constant 0 : index
    %342 = vector.load %arg12[%c1_127, %c0_128, %c0_129] : memref<2x1x256xf32, #tpu.memory_space<vmem>>, vector<1x1x256xf32>
    %343 = vector.shape_cast %342 : vector<1x1x256xf32> to vector<1x256xf32>
    %344 = vector.broadcast %343 : vector<1x256xf32> to vector<8x256xf32>
    %345 = arith.addf %341, %344 : vector<8x256xf32>
    %cst_130 = arith.constant 5.000000e-01 : f32
    %346 = vector.broadcast %cst_130 : f32 to vector<8x256xf32>
    %347 = arith.mulf %346, %345 : vector<8x256xf32>
    %cst_131 = arith.constant 4.471500e-02 : f32
    %348 = vector.broadcast %cst_131 : f32 to vector<8x256xf32>
    %349 = arith.mulf %348, %345 : vector<8x256xf32>
    %350 = arith.mulf %349, %345 : vector<8x256xf32>
    %351 = arith.mulf %350, %345 : vector<8x256xf32>
    %352 = arith.addf %345, %351 : vector<8x256xf32>
    %cst_132 = arith.constant 0.797884583 : f32
    %353 = vector.broadcast %cst_132 : f32 to vector<8x256xf32>
    %354 = arith.mulf %353, %352 : vector<8x256xf32>
    %355 = math.tanh %354 : vector<8x256xf32>
    %cst_133 = arith.constant 1.000000e+00 : f32
    %356 = vector.broadcast %cst_133 : f32 to vector<8x256xf32>
    %357 = arith.addf %356, %355 : vector<8x256xf32>
    %358 = arith.mulf %347, %357 : vector<8x256xf32>
    %359 = arith.truncf %358 : vector<8x256xf32> to vector<8x256xbf16>
    %c1_134 = arith.constant 1 : index
    %c0_135 = arith.constant 0 : index
    %c0_136 = arith.constant 0 : index
    %360 = vector.load %arg13[%c1_134, %c0_135, %c0_136] : memref<2x256x128xbf16, #tpu.memory_space<vmem>>, vector<1x256x128xbf16>
    %361 = vector.shape_cast %360 : vector<1x256x128xbf16> to vector<256x128xbf16>
    %cst_137 = arith.constant dense<0.000000e+00> : vector<8x128xf32>
    %362 = tpu.matmul %359, %361, %cst_137 {dimension_numbers = #tpu.dot_dimension_numbers<[1], [0], [0], [1], [0, 0, 1, 1], [], []>} : vector<8x256xbf16>, vector<256x128xbf16>, vector<8x128xf32> -> vector<8x128xf32>
    %c1_138 = arith.constant 1 : index
    %c0_139 = arith.constant 0 : index
    %c0_140 = arith.constant 0 : index
    %363 = vector.load %arg14[%c1_138, %c0_139, %c0_140] : memref<2x1x128xf32, #tpu.memory_space<vmem>>, vector<1x1x128xf32>
    %364 = vector.shape_cast %363 : vector<1x1x128xf32> to vector<1x128xf32>
    %365 = vector.broadcast %364 : vector<1x128xf32> to vector<8x128xf32>
    %366 = arith.addf %362, %365 : vector<8x128xf32>
    %367 = arith.addf %366, %337 : vector<8x128xf32>
    %c1_141 = arith.constant 1 : index
    %c0_142 = arith.constant 0 : index
    %c0_143 = arith.constant 0 : index
    %368 = vector.load %arg15[%c1_141, %c0_142, %c0_143] : memref<2x1x128xf32, #tpu.memory_space<vmem>>, vector<1x1x128xf32>
    %369 = vector.shape_cast %368 : vector<1x1x128xf32> to vector<1x128xf32>
    %c1_144 = arith.constant 1 : index
    %c0_145 = arith.constant 0 : index
    %c0_146 = arith.constant 0 : index
    %370 = vector.load %arg16[%c1_144, %c0_145, %c0_146] : memref<2x1x128xf32, #tpu.memory_space<vmem>>, vector<1x1x128xf32>
    %371 = vector.shape_cast %370 : vector<1x1x128xf32> to vector<1x128xf32>
    %cst_147 = arith.constant dense<0.000000e+00> : vector<8xf32>
    %372 = vector.multi_reduction <add>, %367, %cst_147 [1] : vector<8x128xf32> to vector<8xf32>
    %373 = vector.shape_cast %372 : vector<8xf32> to vector<8x1xf32>
    %cst_148 = arith.constant 1.280000e+02 : f32
    %374 = vector.broadcast %cst_148 : f32 to vector<8x1xf32>
    %375 = arith.divf %373, %374 : vector<8x1xf32>
    %376 = vector.broadcast %375 : vector<8x1xf32> to vector<8x128xf32>
    %377 = arith.subf %367, %376 : vector<8x128xf32>
    %378 = arith.mulf %377, %377 : vector<8x128xf32>
    %cst_149 = arith.constant dense<0.000000e+00> : vector<8xf32>
    %379 = vector.multi_reduction <add>, %378, %cst_149 [1] : vector<8x128xf32> to vector<8xf32>
    %380 = vector.shape_cast %379 : vector<8xf32> to vector<8x1xf32>
    %cst_150 = arith.constant 1.280000e+02 : f32
    %381 = vector.broadcast %cst_150 : f32 to vector<8x1xf32>
    %382 = arith.divf %380, %381 : vector<8x1xf32>
    %cst_151 = arith.constant 9.99999996E-13 : f32
    %383 = vector.broadcast %cst_151 : f32 to vector<8x1xf32>
    %384 = arith.addf %382, %383 : vector<8x1xf32>
    %385 = math.rsqrt %384 : vector<8x1xf32>
    %386 = vector.broadcast %385 : vector<8x1xf32> to vector<8x128xf32>
    %387 = arith.mulf %377, %386 : vector<8x128xf32>
    %388 = vector.broadcast %369 : vector<1x128xf32> to vector<8x128xf32>
    %389 = arith.mulf %387, %388 : vector<8x128xf32>
    %390 = vector.broadcast %371 : vector<1x128xf32> to vector<8x128xf32>
    %391 = arith.addf %389, %390 : vector<8x128xf32>
    %392 = vector.extract_strided_slice %391 {offsets = [0, 0], sizes = [1, 128], strides = [1, 1]} : vector<8x128xf32> to vector<1x128xf32>
    %393 = arith.truncf %392 : vector<1x128xf32> to vector<1x128xbf16>
    %c0_152 = arith.constant 0 : index
    %c0_153 = arith.constant 0 : index
    %394 = vector.load %arg17[%c0_152, %c0_153] : memref<128x128xbf16, #tpu.memory_space<vmem>>, vector<128x128xbf16>
    %cst_154 = arith.constant dense<0.000000e+00> : vector<1x128xf32>
    %395 = tpu.matmul %393, %394, %cst_154 {dimension_numbers = #tpu.dot_dimension_numbers<[1], [0], [0], [1], [0, 0, 1, 1], [], []>} : vector<1x128xbf16>, vector<128x128xbf16>, vector<1x128xf32> -> vector<1x128xf32>
    %c0_155 = arith.constant 0 : index
    %c0_156 = arith.constant 0 : index
    %396 = vector.load %arg18[%c0_155, %c0_156] : memref<1x128xf32, #tpu.memory_space<vmem>>, vector<1x128xf32>
    %397 = arith.addf %395, %396 : vector<1x128xf32>
    %398 = math.tanh %397 : vector<1x128xf32>
    %399 = arith.truncf %398 : vector<1x128xf32> to vector<1x128xbf16>
    %c0_157 = arith.constant 0 : index
    %c0_158 = arith.constant 0 : index
    %400 = vector.load %arg19[%c0_157, %c0_158] : memref<128x128xbf16, #tpu.memory_space<vmem>>, vector<128x128xbf16>
    %cst_159 = arith.constant dense<0.000000e+00> : vector<1x128xf32>
    %401 = tpu.matmul %399, %400, %cst_159 {dimension_numbers = #tpu.dot_dimension_numbers<[1], [0], [0], [1], [0, 0, 1, 1], [], []>} : vector<1x128xbf16>, vector<128x128xbf16>, vector<1x128xf32> -> vector<1x128xf32>
    %c0_160 = arith.constant 0 : index
    %c0_161 = arith.constant 0 : index
    %402 = vector.load %arg20[%c0_160, %c0_161] : memref<1x128xf32, #tpu.memory_space<vmem>>, vector<1x128xf32>
    %403 = arith.addf %401, %402 : vector<1x128xf32>
    %cst_162 = arith.constant 0.000000e+00 : f32
    %404 = vector.broadcast %cst_162 : f32 to vector<1x128xf32>
    %405 = arith.maximumf %403, %404 : vector<1x128xf32>
    %c0_163 = arith.constant 0 : index
    %c0_164 = arith.constant 0 : index
    %c0_165 = arith.constant 0 : index
    %406 = vector.load %arg21[%c0_163, %c0_164, %c0_165] : memref<1x1x128xf32, #tpu.memory_space<vmem>>, vector<1x1x128xf32>
    %407 = vector.shape_cast %406 : vector<1x1x128xf32> to vector<1x128xf32>
    %408 = vector.shape_cast %405 : vector<1x128xf32> to vector<1x1x128xf32>
    tpu.vector_store %arg21[%c0_163, %c0_164, %c0_165], %408 {strides = array<i32>} : memref<1x1x128xf32, #tpu.memory_space<vmem>>, vector<1x1x128xf32>,
    return
  }
  func.func @transform_0(%arg0: i32) -> (i32, i32, i32) {
    %c0_i32 = arith.constant 0 : i32
    %c0_i32_0 = arith.constant 0 : i32
    %c0_i32_1 = arith.constant 0 : i32
    return %arg0, %c0_i32, %c0_i32_0 : i32, i32, i32
  }
  func.func @transform_1(%arg0: i32) -> (i32, i32, i32) {
    %c0_i32 = arith.constant 0 : i32
    %c0_i32_0 = arith.constant 0 : i32
    %c0_i32_1 = arith.constant 0 : i32
    return %arg0, %c0_i32, %c0_i32_0 : i32, i32, i32
  }
  func.func @transform_2(%arg0: i32) -> (i32, i32) {
    %c0_i32 = arith.constant 0 : i32
    %c0_i32_0 = arith.constant 0 : i32
    %c0_i32_1 = arith.constant 0 : i32
    return %c0_i32, %c0_i32_0 : i32, i32
  }
  func.func @transform_3(%arg0: i32) -> (i32, i32) {
    %c0_i32 = arith.constant 0 : i32
    %c0_i32_0 = arith.constant 0 : i32
    %c0_i32_1 = arith.constant 0 : i32
    return %c0_i32, %c0_i32_0 : i32, i32
  }
  func.func @transform_4(%arg0: i32) -> (i32, i32, i32) {
    %c0_i32 = arith.constant 0 : i32
    %c0_i32_0 = arith.constant 0 : i32
    %c0_i32_1 = arith.constant 0 : i32
    %c0_i32_2 = arith.constant 0 : i32
    return %c0_i32, %c0_i32_0, %c0_i32_1 : i32, i32, i32
  }
  func.func @transform_5(%arg0: i32) -> (i32, i32, i32) {
    %c0_i32 = arith.constant 0 : i32
    %c0_i32_0 = arith.constant 0 : i32
    %c0_i32_1 = arith.constant 0 : i32
    %c0_i32_2 = arith.constant 0 : i32
    return %c0_i32, %c0_i32_0, %c0_i32_1 : i32, i32, i32
  }
  func.func @transform_6(%arg0: i32) -> (i32, i32, i32) {
    %c0_i32 = arith.constant 0 : i32
    %c0_i32_0 = arith.constant 0 : i32
    %c0_i32_1 = arith.constant 0 : i32
    %c0_i32_2 = arith.constant 0 : i32
    return %c0_i32, %c0_i32_0, %c0_i32_1 : i32, i32, i32
  }
  func.func @transform_7(%arg0: i32) -> (i32, i32, i32) {
    %c0_i32 = arith.constant 0 : i32
    %c0_i32_0 = arith.constant 0 : i32
    %c0_i32_1 = arith.constant 0 : i32
    %c0_i32_2 = arith.constant 0 : i32
    return %c0_i32, %c0_i32_0, %c0_i32_1 : i32, i32, i32
  }
  func.func @transform_8(%arg0: i32) -> (i32, i32, i32) {
    %c0_i32 = arith.constant 0 : i32
    %c0_i32_0 = arith.constant 0 : i32
    %c0_i32_1 = arith.constant 0 : i32
    %c0_i32_2 = arith.constant 0 : i32
    return %c0_i32, %c0_i32_0, %c0_i32_1 : i32, i32, i32
  }
  func.func @transform_9(%arg0: i32) -> (i32, i32, i32) {
    %c0_i32 = arith.constant 0 : i32
    %c0_i32_0 = arith.constant 0 : i32
    %c0_i32_1 = arith.constant 0 : i32
    %c0_i32_2 = arith.constant 0 : i32
    return %c0_i32, %c0_i32_0, %c0_i32_1 : i32, i32, i32
  }
  func.func @transform_10(%arg0: i32) -> (i32, i32, i32) {
    %c0_i32 = arith.constant 0 : i32
    %c0_i32_0 = arith.constant 0 : i32
    %c0_i32_1 = arith.constant 0 : i32
    %c0_i32_2 = arith.constant 0 : i32
    return %c0_i32, %c0_i32_0, %c0_i32_1 : i32, i32, i32
  }
  func.func @transform_11(%arg0: i32) -> (i32, i32, i32) {
    %c0_i32 = arith.constant 0 : i32
    %c0_i32_0 = arith.constant 0 : i32
    %c0_i32_1 = arith.constant 0 : i32
    %c0_i32_2 = arith.constant 0 : i32
    return %c0_i32, %c0_i32_0, %c0_i32_1 : i32, i32, i32
  }
  func.func @transform_12(%arg0: i32) -> (i32, i32, i32) {
    %c0_i32 = arith.constant 0 : i32
    %c0_i32_0 = arith.constant 0 : i32
    %c0_i32_1 = arith.constant 0 : i32
    %c0_i32_2 = arith.constant 0 : i32
    return %c0_i32, %c0_i32_0, %c0_i32_1 : i32, i32, i32
  }
  func.func @transform_13(%arg0: i32) -> (i32, i32, i32) {
    %c0_i32 = arith.constant 0 : i32
    %c0_i32_0 = arith.constant 0 : i32
    %c0_i32_1 = arith.constant 0 : i32
    %c0_i32_2 = arith.constant 0 : i32
    return %c0_i32, %c0_i32_0, %c0_i32_1 : i32, i32, i32
  }
  func.func @transform_14(%arg0: i32) -> (i32, i32, i32) {
    %c0_i32 = arith.constant 0 : i32
    %c0_i32_0 = arith.constant 0 : i32
    %c0_i32_1 = arith.constant 0 : i32
    %c0_i32_2 = arith.constant 0 : i32
    return %c0_i32, %c0_i32_0, %c0_i32_1 : i32, i32, i32
  }
  func.func @transform_15(%arg0: i32) -> (i32, i32, i32) {
    %c0_i32 = arith.constant 0 : i32
    %c0_i32_0 = arith.constant 0 : i32
    %c0_i32_1 = arith.constant 0 : i32
    %c0_i32_2 = arith.constant 0 : i32
    return %c0_i32, %c0_i32_0, %c0_i32_1 : i32, i32, i32
  }
  func.func @transform_16(%arg0: i32) -> (i32, i32) {
    %c0_i32 = arith.constant 0 : i32
    %c0_i32_0 = arith.constant 0 : i32
    %c0_i32_1 = arith.constant 0 : i32
    return %c0_i32, %c0_i32_0 : i32, i32
  }
  func.func @transform_17(%arg0: i32) -> (i32, i32) {
    %c0_i32 = arith.constant 0 : i32
    %c0_i32_0 = arith.constant 0 : i32
    %c0_i32_1 = arith.constant 0 : i32
    return %c0_i32, %c0_i32_0 : i32, i32
  }
  func.func @transform_18(%arg0: i32) -> (i32, i32) {
    %c0_i32 = arith.constant 0 : i32
    %c0_i32_0 = arith.constant 0 : i32
    %c0_i32_1 = arith.constant 0 : i32
    return %c0_i32, %c0_i32_0 : i32, i32
  }
  func.func @transform_19(%arg0: i32) -> (i32, i32) {
    %c0_i32 = arith.constant 0 : i32
    %c0_i32_0 = arith.constant 0 : i32
    %c0_i32_1 = arith.constant 0 : i32
    return %c0_i32, %c0_i32_0 : i32, i32
  }
  func.func @transform_20(%arg0: i32) -> (i32, i32, i32) {
    %c0_i32 = arith.constant 0 : i32
    %c0_i32_0 = arith.constant 0 : i32
    %c0_i32_1 = arith.constant 0 : i32
    return %arg0, %c0_i32, %c0_i32_0 : i32, i32, i32
  }
}

</mosaic_0001>

<llo_original>
// kernel: bert_classifier_forward.1
$region0: #{bert_classifier_forward.1}
  #allocation0 [shape = 'u32[]', space=smem, size = 0x4, offset = 0x4, fixed_abs, tag = 'smem constant byte address 0x4 - core index']
  #allocation1 [shape = 'u32[72,128]{1,0:T(1,128)}', space=vmem, size = 0x9000, scoped, tag = 'internal scratch']
  %s0 = inlined_call_operand.vmem [shape: f32[2,8,128], index: 0, kind: input, shape index: {}]
  %s1 = inlined_call_operand.vmem [shape: f32[2,1,8], index: 1, kind: input, shape index: {}]
  %s2 = inlined_call_operand.vmem [shape: f32[1,128], index: 2, kind: input, shape index: {}]
  %s3 = inlined_call_operand.vmem [shape: f32[1,128], index: 3, kind: input, shape index: {}, may-alias: {3,17,19}]
  %s4 = inlined_call_operand.hbm [shape: bf16[2,128,384], index: 4, kind: input, shape index: {}]
  %s5 = inlined_call_operand.vmem [shape: f32[2,1,384], index: 5, kind: input, shape index: {}]
  %s6 = inlined_call_operand.vmem [shape: bf16[2,128,128], index: 6, kind: input, shape index: {}]
  %s7 = inlined_call_operand.vmem [shape: f32[2,1,128], index: 7, kind: input, shape index: {}, may-alias: {7,9,13,15}]
  %s8 = inlined_call_operand.vmem [shape: f32[2,1,128], index: 8, kind: input, shape index: {}, may-alias: {8,14}]
  %s9 = inlined_call_operand.vmem [shape: f32[2,1,128], index: 9, kind: input, shape index: {}, may-alias: {7,9,13,15}]
  %s10 = inlined_call_operand.hbm [shape: bf16[2,128,256], index: 10, kind: input, shape index: {}]
  %s11 = inlined_call_operand.vmem [shape: f32[2,1,256], index: 11, kind: input, shape index: {}]
  %s12 = inlined_call_operand.hbm [shape: bf16[2,256,128], index: 12, kind: input, shape index: {}]
  %s13 = inlined_call_operand.vmem [shape: f32[2,1,128], index: 13, kind: input, shape index: {}, may-alias: {7,9,13,15}]
  %s14 = inlined_call_operand.vmem [shape: f32[2,1,128], index: 14, kind: input, shape index: {}, may-alias: {8,14}]
  %s15 = inlined_call_operand.vmem [shape: f32[2,1,128], index: 15, kind: input, shape index: {}, may-alias: {7,9,13,15}]
  %s16 = inlined_call_operand.vmem [shape: bf16[128,128], index: 16, kind: input, shape index: {}]
  %s17 = inlined_call_operand.vmem [shape: f32[1,128], index: 17, kind: input, shape index: {}, may-alias: {3,17,19}]
  %s18 = inlined_call_operand.hbm [shape: bf16[128,128], index: 18, kind: input, shape index: {}]
  %s19 = inlined_call_operand.vmem [shape: f32[1,128], index: 19, kind: input, shape index: {}, may-alias: {3,17,19}]
  %s20 = inlined_call_operand.hbm [shape: f32[2,1,128], index: 20, kind: output, shape index: {}]
  %s21 = sld [smem:[#allocation0]]
  $region129: #{bert_classifier_forward.1} parent=0
    _
  %s23 = ssub.s32 1, %s21
  %s24 = scalar_select 0, %s23, %s21
  $region1: #{bert_classifier_forward.1} parent=0
    #allocation2 [shape = 'u8[196608]{0}', space=vmem, size = 0x30000, scoped, tag = 'input window, operand 4, single buffered']
    #allocation3 [shape = 's32[2]{0}', space=sflag, size = 0x8, scoped, tag = 'scoped memory for bert_classifier_forward.1']
    #allocation4 [shape = 's32[2]{0}', space=sflag, size = 0x8, scoped, tag = 'scoped memory for bert_classifier_forward.1']
    #allocation5 [shape = 'u8[131072]{0}', space=vmem, size = 0x20000, scoped, tag = 'input window, operand 10, single buffered']
    #allocation6 [shape = 's32[1]{0}', space=sflag, size = 0x4, scoped, tag = 'scoped memory for bert_classifier_forward.1']
    #allocation7 [shape = 'u8[131072]{0}', space=vmem, size = 0x20000, scoped, tag = 'input window, operand 12, single buffered']
    #allocation8 [shape = 'u8[32768]{0}', space=vmem, size = 0x8000, scoped, tag = 'input window, operand 18, single buffered']
    #allocation9 [shape = 's32[1]{0}', space=sflag, size = 0x4, scoped, tag = 'scoped memory for bert_classifier_forward.1']
    #allocation10 [shape = 'u8[1024]{0}', space=vmem, size = 0x400, scoped, tag = 'output window, operand 0']
    %25 = vsyncpa [#allocation3], 0
    %26 = vsyncpa [#allocation6], 0
    %27 = vsyncpa [#allocation9], 0
    %28 = vsyncpa [#allocation4], 0
    %s29 = scalar_lea.sflag [#allocation4], 1
    %30 = vsyncpa %s29, 0
    loop: start=0, step=1, limit=4
    $region2: #{bert_classifier_forward.1} parent=1 // loop_pre_header
      _
    $region3: #{bert_classifier_forward.1} parent=1 // loop_header
      %s32 = sphi 0, %s36
      %p33 = scmp.ge.s32.totalorder %s32, 4
      %s42 = sphi 0, %s44
      %s45 = sphi 0, %s42
      %s46 = sphi 0, %s45
      %s62 = sphi 0, %s46
      %s68 = sphi 0, %s70
      %s71 = sphi 0, %s68
      %s72 = sphi 0, %s71
      %s88 = sphi 0, %s72
      %s92 = sphi 0, %s92
      %s94 = sphi 0, %s92
      %s95 = sphi 0, %s94
      %s109 = sphi 0, %s95
      %s113 = sphi 0, %s113
      %s115 = sphi 0, %s113
      %s116 = sphi 0, %s115
      %s130 = sphi 0, %s116
      %s134 = sphi 0, %s134
      %s136 = sphi 0, %s134
      %s137 = sphi 0, %s136
      %s151 = sphi 0, %s137
      %s155 = sphi 0, %s155
      %s157 = sphi 0, %s155
      %s158 = sphi 0, %s157
      %s172 = sphi 0, %s158
      %s176 = sphi 0, %s176
      %s178 = sphi 0, %s176
      %s179 = sphi 0, %s178
      %s193 = sphi 0, %s179
      %s197 = sphi 0, %s197
      %s199 = sphi 0, %s197
      %s200 = sphi 0, %s199
      %s214 = sphi 0, %s200
      %s218 = sphi 0, %s218
      %s220 = sphi 0, %s218
      %s221 = sphi 0, %s220
      %s235 = sphi 0, %s221
      %s239 = sphi 0, %s239
      %s241 = sphi 0, %s239
      %s242 = sphi 0, %s241
      %s256 = sphi 0, %s242
      %s260 = sphi 0, %s260
      %s262 = sphi 0, %s260
      %s263 = sphi 0, %s262
      %s277 = sphi 0, %s263
      %s281 = sphi 0, %s281
      %s283 = sphi 0, %s281
      %s284 = sphi 0, %s283
      %s298 = sphi 0, %s284
      %s302 = sphi 0, %s302
      %s304 = sphi 0, %s302
      %s305 = sphi 0, %s304
      %s319 = sphi 0, %s305
      %s323 = sphi 0, %s323
      %s325 = sphi 0, %s323
      %s326 = sphi 0, %s325
      %s340 = sphi 0, %s326
      %s344 = sphi 0, %s344
      %s346 = sphi 0, %s344
      %s347 = sphi 0, %s346
      %s361 = sphi 0, %s347
      %s365 = sphi 0, %s365
      %s367 = sphi 0, %s365
      %s368 = sphi 0, %s367
      %s382 = sphi 0, %s368
      %s386 = sphi 0, %s386
      %s388 = sphi 0, %s386
      %s389 = sphi 0, %s388
      %s403 = sphi 0, %s389
      %s407 = sphi 0, %s407
      %s409 = sphi 0, %s407
      %s410 = sphi 0, %s409
      %s424 = sphi 0, %s410
      %s428 = sphi 0, %s428
      %s430 = sphi 0, %s428
      %s431 = sphi 0, %s430
      %s445 = sphi 0, %s431
      %s449 = sphi 0, %s449
      %s451 = sphi 0, %s449
      %s452 = sphi 0, %s451
      %s466 = sphi 0, %s452
      %s472 = sphi 0, %s474
      %s475 = sphi 0, %s472
      %s476 = sphi 0, %s475
      %s492 = sphi 0, %s476
    $region4: #{bert_classifier_forward.1} parent=1 // loop_header_branch
      %35 = sbr.rel (%p33) target = $region8
    $region5: #{bert_classifier_forward.1} parent=1 // loop_body
      %s37 = ssub.s32 %s32, 1
      %s38 = ssub.s32 %s32, 2
      %s39 = sadd.s32 %s32, 1
      %s40 = ssub.s32 %s32, %s39
      %p41 = scmp.eq.s32.totalorder %s40, 0
      %s43 = sadd.s32 %s42, 1
      %s44 = scalar_select %p41, %s42, %s43
      %p47 = pneg %p41
      %p48 = scmp.eq.s32.totalorder %s32, 1
      %p49 = por %p47, %p48
      %p50 = scmp.ne.s32.totalorder %s42, %s45
      %p51 = scmp.eq.s32.totalorder %s32, 0
      %p52 = por %p50, %p51
      %p53 = scmp.ne.s32.totalorder %s42, %s45
      %p54 = scmp.eq.s32.totalorder %s37, 1
      %p55 = por %p53, %p54
      %p56 = scmp.ne.s32.totalorder %s45, %s46
      %p57 = scmp.eq.s32.totalorder %s37, 0
      %p58 = por %p56, %p57
      %p59 = scmp.ne.s32.totalorder %s45, %s46
      %p60 = scmp.eq.s32.totalorder %s38, 1
      %p61 = por %p59, %p60
      %p63 = scmp.ne.s32.totalorder %s46, %s62
      %p64 = scmp.eq.s32.totalorder %s38, 0
      %p65 = por %p63, %p64
      %s66 = ssub.s32 %s32, %s39
      %p67 = scmp.eq.s32.totalorder %s66, 0
      %s69 = sadd.s32 %s68, 1
      %s70 = scalar_select %p67, %s68, %s69
      %p73 = pneg %p67
      %p74 = scmp.eq.s32.totalorder %s32, 1
      %p75 = por %p73, %p74
      %p76 = scmp.ne.s32.totalorder %s68, %s71
      %p77 = scmp.eq.s32.totalorder %s32, 0
      %p78 = por %p76, %p77
      %p79 = scmp.ne.s32.totalorder %s68, %s71
      %p80 = scmp.eq.s32.totalorder %s37, 1
      %p81 = por %p79, %p80
      %p82 = scmp.ne.s32.totalorder %s71, %s72
      %p83 = scmp.eq.s32.totalorder %s37, 0
      %p84 = por %p82, %p83
      %p85 = scmp.ne.s32.totalorder %s71, %s72
      %p86 = scmp.eq.s32.totalorder %s38, 1
      %p87 = por %p85, %p86
      %p89 = scmp.ne.s32.totalorder %s72, %s88
      %p90 = scmp.eq.s32.totalorder %s38, 0
      %p91 = por %p89, %p90
      %s93 = sadd.s32 %s92, 1
      %p96 = scmp.eq.s32.totalorder %s32, 1
      %p97 = scmp.ne.s32.totalorder %s92, %s94
      %p98 = scmp.eq.s32.totalorder %s32, 0
      %p99 = por %p97, %p98
      %p100 = scmp.ne.s32.totalorder %s92, %s94
      %p101 = scmp.eq.s32.totalorder %s37, 1
      %p102 = por %p100, %p101
      %p103 = scmp.ne.s32.totalorder %s94, %s95
      %p104 = scmp.eq.s32.totalorder %s37, 0
      %p105 = por %p103, %p104
      %p106 = scmp.ne.s32.totalorder %s94, %s95
      %p107 = scmp.eq.s32.totalorder %s38, 1
      %p108 = por %p106, %p107
      %p110 = scmp.ne.s32.totalorder %s95, %s109
      %p111 = scmp.eq.s32.totalorder %s38, 0
      %p112 = por %p110, %p111
      %s114 = sadd.s32 %s113, 1
      %p117 = scmp.eq.s32.totalorder %s32, 1
      %p118 = scmp.ne.s32.totalorder %s113, %s115
      %p119 = scmp.eq.s32.totalorder %s32, 0
      %p120 = por %p118, %p119
      %p121 = scmp.ne.s32.totalorder %s113, %s115
      %p122 = scmp.eq.s32.totalorder %s37, 1
      %p123 = por %p121, %p122
      %p124 = scmp.ne.s32.totalorder %s115, %s116
      %p125 = scmp.eq.s32.totalorder %s37, 0
      %p126 = por %p124, %p125
      %p127 = scmp.ne.s32.totalorder %s115, %s116
      %p128 = scmp.eq.s32.totalorder %s38, 1
      %p129 = por %p127, %p128
      %p131 = scmp.ne.s32.totalorder %s116, %s130
      %p132 = scmp.eq.s32.totalorder %s38, 0
      %p133 = por %p131, %p132
      %s135 = sadd.s32 %s134, 1
      %p138 = scmp.eq.s32.totalorder %s32, 1
      %p139 = scmp.ne.s32.totalorder %s134, %s136
      %p140 = scmp.eq.s32.totalorder %s32, 0
      %p141 = por %p139, %p140
      %p142 = scmp.ne.s32.totalorder %s134, %s136
      %p143 = scmp.eq.s32.totalorder %s37, 1
      %p144 = por %p142, %p143
      %p145 = scmp.ne.s32.totalorder %s136, %s137
      %p146 = scmp.eq.s32.totalorder %s37, 0
      %p147 = por %p145, %p146
      %p148 = scmp.ne.s32.totalorder %s136, %s137
      %p149 = scmp.eq.s32.totalorder %s38, 1
      %p150 = por %p148, %p149
      %p152 = scmp.ne.s32.totalorder %s137, %s151
      %p153 = scmp.eq.s32.totalorder %s38, 0
      %p154 = por %p152, %p153
      %s156 = sadd.s32 %s155, 1
      %p159 = scmp.eq.s32.totalorder %s32, 1
      %p160 = scmp.ne.s32.totalorder %s155, %s157
      %p161 = scmp.eq.s32.totalorder %s32, 0
      %p162 = por %p160, %p161
      %p163 = scmp.ne.s32.totalorder %s155, %s157
      %p164 = scmp.eq.s32.totalorder %s37, 1
      %p165 = por %p163, %p164
      %p166 = scmp.ne.s32.totalorder %s157, %s158
      %p167 = scmp.eq.s32.totalorder %s37, 0
      %p168 = por %p166, %p167
      %p169 = scmp.ne.s32.totalorder %s157, %s158
      %p170 = scmp.eq.s32.totalorder %s38, 1
      %p171 = por %p169, %p170
      %p173 = scmp.ne.s32.totalorder %s158, %s172
      %p174 = scmp.eq.s32.totalorder %s38, 0
      %p175 = por %p173, %p174
      %s177 = sadd.s32 %s176, 1
      %p180 = scmp.eq.s32.totalorder %s32, 1
      %p181 = scmp.ne.s32.totalorder %s176, %s178
      %p182 = scmp.eq.s32.totalorder %s32, 0
      %p183 = por %p181, %p182
      %p184 = scmp.ne.s32.totalorder %s176, %s178
      %p185 = scmp.eq.s32.totalorder %s37, 1
      %p186 = por %p184, %p185
      %p187 = scmp.ne.s32.totalorder %s178, %s179
      %p188 = scmp.eq.s32.totalorder %s37, 0
      %p189 = por %p187, %p188
      %p190 = scmp.ne.s32.totalorder %s178, %s179
      %p191 = scmp.eq.s32.totalorder %s38, 1
      %p192 = por %p190, %p191
      %p194 = scmp.ne.s32.totalorder %s179, %s193
      %p195 = scmp.eq.s32.totalorder %s38, 0
      %p196 = por %p194, %p195
      %s198 = sadd.s32 %s197, 1
      %p201 = scmp.eq.s32.totalorder %s32, 1
      %p202 = scmp.ne.s32.totalorder %s197, %s199
      %p203 = scmp.eq.s32.totalorder %s32, 0
      %p204 = por %p202, %p203
      %p205 = scmp.ne.s32.totalorder %s197, %s199
      %p206 = scmp.eq.s32.totalorder %s37, 1
      %p207 = por %p205, %p206
      %p208 = scmp.ne.s32.totalorder %s199, %s200
      %p209 = scmp.eq.s32.totalorder %s37, 0
      %p210 = por %p208, %p209
      %p211 = scmp.ne.s32.totalorder %s199, %s200
      %p212 = scmp.eq.s32.totalorder %s38, 1
      %p213 = por %p211, %p212
      %p215 = scmp.ne.s32.totalorder %s200, %s214
      %p216 = scmp.eq.s32.totalorder %s38, 0
      %p217 = por %p215, %p216
      %s219 = sadd.s32 %s218, 1
      %p222 = scmp.eq.s32.totalorder %s32, 1
      %p223 = scmp.ne.s32.totalorder %s218, %s220
      %p224 = scmp.eq.s32.totalorder %s32, 0
      %p225 = por %p223, %p224
      %p226 = scmp.ne.s32.totalorder %s218, %s220
      %p227 = scmp.eq.s32.totalorder %s37, 1
      %p228 = por %p226, %p227
      %p229 = scmp.ne.s32.totalorder %s220, %s221
      %p230 = scmp.eq.s32.totalorder %s37, 0
      %p231 = por %p229, %p230
      %p232 = scmp.ne.s32.totalorder %s220, %s221
      %p233 = scmp.eq.s32.totalorder %s38, 1
      %p234 = por %p232, %p233
      %p236 = scmp.ne.s32.totalorder %s221, %s235
      %p237 = scmp.eq.s32.totalorder %s38, 0
      %p238 = por %p236, %p237
      %s240 = sadd.s32 %s239, 1
      %p243 = scmp.eq.s32.totalorder %s32, 1
      %p244 = scmp.ne.s32.totalorder %s239, %s241
      %p245 = scmp.eq.s32.totalorder %s32, 0
      %p246 = por %p244, %p245
      %p247 = scmp.ne.s32.totalorder %s239, %s241
      %p248 = scmp.eq.s32.totalorder %s37, 1
      %p249 = por %p247, %p248
      %p250 = scmp.ne.s32.totalorder %s241, %s242
      %p251 = scmp.eq.s32.totalorder %s37, 0
      %p252 = por %p250, %p251
      %p253 = scmp.ne.s32.totalorder %s241, %s242
      %p254 = scmp.eq.s32.totalorder %s38, 1
      %p255 = por %p253, %p254
      %p257 = scmp.ne.s32.totalorder %s242, %s256
      %p258 = scmp.eq.s32.totalorder %s38, 0
      %p259 = por %p257, %p258
      %s261 = sadd.s32 %s260, 1
      %p264 = scmp.eq.s32.totalorder %s32, 1
      %p265 = scmp.ne.s32.totalorder %s260, %s262
      %p266 = scmp.eq.s32.totalorder %s32, 0
      %p267 = por %p265, %p266
      %p268 = scmp.ne.s32.totalorder %s260, %s262
      %p269 = scmp.eq.s32.totalorder %s37, 1
      %p270 = por %p268, %p269
      %p271 = scmp.ne.s32.totalorder %s262, %s263
      %p272 = scmp.eq.s32.totalorder %s37, 0
      %p273 = por %p271, %p272
      %p274 = scmp.ne.s32.totalorder %s262, %s263
      %p275 = scmp.eq.s32.totalorder %s38, 1
      %p276 = por %p274, %p275
      %p278 = scmp.ne.s32.totalorder %s263, %s277
      %p279 = scmp.eq.s32.totalorder %s38, 0
      %p280 = por %p278, %p279
      %s282 = sadd.s32 %s281, 1
      %p285 = scmp.eq.s32.totalorder %s32, 1
      %p286 = scmp.ne.s32.totalorder %s281, %s283
      %p287 = scmp.eq.s32.totalorder %s32, 0
      %p288 = por %p286, %p287
      %p289 = scmp.ne.s32.totalorder %s281, %s283
      %p290 = scmp.eq.s32.totalorder %s37, 1
      %p291 = por %p289, %p290
      %p292 = scmp.ne.s32.totalorder %s283, %s284
      %p293 = scmp.eq.s32.totalorder %s37, 0
      %p294 = por %p292, %p293
      %p295 = scmp.ne.s32.totalorder %s283, %s284
      %p296 = scmp.eq.s32.totalorder %s38, 1
      %p297 = por %p295, %p296
      %p299 = scmp.ne.s32.totalorder %s284, %s298
      %p300 = scmp.eq.s32.totalorder %s38, 0
      %p301 = por %p299, %p300
      %s303 = sadd.s32 %s302, 1
      %p306 = scmp.eq.s32.totalorder %s32, 1
      %p307 = scmp.ne.s32.totalorder %s302, %s304
      %p308 = scmp.eq.s32.totalorder %s32, 0
      %p309 = por %p307, %p308
      %p310 = scmp.ne.s32.totalorder %s302, %s304
      %p311 = scmp.eq.s32.totalorder %s37, 1
      %p312 = por %p310, %p311
      %p313 = scmp.ne.s32.totalorder %s304, %s305
      %p314 = scmp.eq.s32.totalorder %s37, 0
      %p315 = por %p313, %p314
      %p316 = scmp.ne.s32.totalorder %s304, %s305
      %p317 = scmp.eq.s32.totalorder %s38, 1
      %p318 = por %p316, %p317
      %p320 = scmp.ne.s32.totalorder %s305, %s319
      %p321 = scmp.eq.s32.totalorder %s38, 0
      %p322 = por %p320, %p321
      %s324 = sadd.s32 %s323, 1
      %p327 = scmp.eq.s32.totalorder %s32, 1
      %p328 = scmp.ne.s32.totalorder %s323, %s325
      %p329 = scmp.eq.s32.totalorder %s32, 0
      %p330 = por %p328, %p329
      %p331 = scmp.ne.s32.totalorder %s323, %s325
      %p332 = scmp.eq.s32.totalorder %s37, 1
      %p333 = por %p331, %p332
      %p334 = scmp.ne.s32.totalorder %s325, %s326
      %p335 = scmp.eq.s32.totalorder %s37, 0
      %p336 = por %p334, %p335
      %p337 = scmp.ne.s32.totalorder %s325, %s326
      %p338 = scmp.eq.s32.totalorder %s38, 1
      %p339 = por %p337, %p338
      %p341 = scmp.ne.s32.totalorder %s326, %s340
      %p342 = scmp.eq.s32.totalorder %s38, 0
      %p343 = por %p341, %p342
      %s345 = sadd.s32 %s344, 1
      %p348 = scmp.eq.s32.totalorder %s32, 1
      %p349 = scmp.ne.s32.totalorder %s344, %s346
      %p350 = scmp.eq.s32.totalorder %s32, 0
      %p351 = por %p349, %p350
      %p352 = scmp.ne.s32.totalorder %s344, %s346
      %p353 = scmp.eq.s32.totalorder %s37, 1
      %p354 = por %p352, %p353
      %p355 = scmp.ne.s32.totalorder %s346, %s347
      %p356 = scmp.eq.s32.totalorder %s37, 0
      %p357 = por %p355, %p356
      %p358 = scmp.ne.s32.totalorder %s346, %s347
      %p359 = scmp.eq.s32.totalorder %s38, 1
      %p360 = por %p358, %p359
      %p362 = scmp.ne.s32.totalorder %s347, %s361
      %p363 = scmp.eq.s32.totalorder %s38, 0
      %p364 = por %p362, %p363
      %s366 = sadd.s32 %s365, 1
      %p369 = scmp.eq.s32.totalorder %s32, 1
      %p370 = scmp.ne.s32.totalorder %s365, %s367
      %p371 = scmp.eq.s32.totalorder %s32, 0
      %p372 = por %p370, %p371
      %p373 = scmp.ne.s32.totalorder %s365, %s367
      %p374 = scmp.eq.s32.totalorder %s37, 1
      %p375 = por %p373, %p374
      %p376 = scmp.ne.s32.totalorder %s367, %s368
      %p377 = scmp.eq.s32.totalorder %s37, 0
      %p378 = por %p376, %p377
      %p379 = scmp.ne.s32.totalorder %s367, %s368
      %p380 = scmp.eq.s32.totalorder %s38, 1
      %p381 = por %p379, %p380
      %p383 = scmp.ne.s32.totalorder %s368, %s382
      %p384 = scmp.eq.s32.totalorder %s38, 0
      %p385 = por %p383, %p384
      %s387 = sadd.s32 %s386, 1
      %p390 = scmp.eq.s32.totalorder %s32, 1
      %p391 = scmp.ne.s32.totalorder %s386, %s388
      %p392 = scmp.eq.s32.totalorder %s32, 0
      %p393 = por %p391, %p392
      %p394 = scmp.ne.s32.totalorder %s386, %s388
      %p395 = scmp.eq.s32.totalorder %s37, 1
      %p396 = por %p394, %p395
      %p397 = scmp.ne.s32.totalorder %s388, %s389
      %p398 = scmp.eq.s32.totalorder %s37, 0
      %p399 = por %p397, %p398
      %p400 = scmp.ne.s32.totalorder %s388, %s389
      %p401 = scmp.eq.s32.totalorder %s38, 1
      %p402 = por %p400, %p401
      %p404 = scmp.ne.s32.totalorder %s389, %s403
      %p405 = scmp.eq.s32.totalorder %s38, 0
      %p406 = por %p404, %p405
      %s408 = sadd.s32 %s407, 1
      %p411 = scmp.eq.s32.totalorder %s32, 1
      %p412 = scmp.ne.s32.totalorder %s407, %s409
      %p413 = scmp.eq.s32.totalorder %s32, 0
      %p414 = por %p412, %p413
      %p415 = scmp.ne.s32.totalorder %s407, %s409
      %p416 = scmp.eq.s32.totalorder %s37, 1
      %p417 = por %p415, %p416
      %p418 = scmp.ne.s32.totalorder %s409, %s410
      %p419 = scmp.eq.s32.totalorder %s37, 0
      %p420 = por %p418, %p419
      %p421 = scmp.ne.s32.totalorder %s409, %s410
      %p422 = scmp.eq.s32.totalorder %s38, 1
      %p423 = por %p421, %p422
      %p425 = scmp.ne.s32.totalorder %s410, %s424
      %p426 = scmp.eq.s32.totalorder %s38, 0
      %p427 = por %p425, %p426
      %s429 = sadd.s32 %s428, 1
      %p432 = scmp.eq.s32.totalorder %s32, 1
      %p433 = scmp.ne.s32.totalorder %s428, %s430
      %p434 = scmp.eq.s32.totalorder %s32, 0
      %p435 = por %p433, %p434
      %p436 = scmp.ne.s32.totalorder %s428, %s430
      %p437 = scmp.eq.s32.totalorder %s37, 1
      %p438 = por %p436, %p437
      %p439 = scmp.ne.s32.totalorder %s430, %s431
      %p440 = scmp.eq.s32.totalorder %s37, 0
      %p441 = por %p439, %p440
      %p442 = scmp.ne.s32.totalorder %s430, %s431
      %p443 = scmp.eq.s32.totalorder %s38, 1
      %p444 = por %p442, %p443
      %p446 = scmp.ne.s32.totalorder %s431, %s445
      %p447 = scmp.eq.s32.totalorder %s38, 0
      %p448 = por %p446, %p447
      %s450 = sadd.s32 %s449, 1
      %p453 = scmp.eq.s32.totalorder %s32, 1
      %p454 = scmp.ne.s32.totalorder %s449, %s451
      %p455 = scmp.eq.s32.totalorder %s32, 0
      %p456 = por %p454, %p455
      %p457 = scmp.ne.s32.totalorder %s449, %s451
      %p458 = scmp.eq.s32.totalorder %s37, 1
      %p459 = por %p457, %p458
      %p460 = scmp.ne.s32.totalorder %s451, %s452
      %p461 = scmp.eq.s32.totalorder %s37, 0
      %p462 = por %p460, %p461
      %p463 = scmp.ne.s32.totalorder %s451, %s452
      %p464 = scmp.eq.s32.totalorder %s38, 1
      %p465 = por %p463, %p464
      %p467 = scmp.ne.s32.totalorder %s452, %s466
      %p468 = scmp.eq.s32.totalorder %s38, 0
      %p469 = por %p467, %p468
      %s470 = ssub.s32 %s32, %s39
      %p471 = scmp.eq.s32.totalorder %s470, 0
      %s473 = sadd.s32 %s472, 1
      %s474 = scalar_select %p471, %s472, %s473
      %p477 = pneg %p471
      %p478 = scmp.eq.s32.totalorder %s32, 1
      %p479 = por %p477, %p478
      %p480 = scmp.ne.s32.totalorder %s472, %s475
      %p481 = scmp.eq.s32.totalorder %s32, 0
      %p482 = por %p480, %p481
      %p483 = scmp.ne.s32.totalorder %s472, %s475
      %p484 = scmp.eq.s32.totalorder %s37, 1
      %p485 = por %p483, %p484
      %p486 = scmp.ne.s32.totalorder %s475, %s476
      %p487 = scmp.eq.s32.totalorder %s37, 0
      %p488 = por %p486, %p487
      %p489 = scmp.ne.s32.totalorder %s475, %s476
      %p490 = scmp.eq.s32.totalorder %s38, 1
      %p491 = por %p489, %p490
      %p493 = scmp.ne.s32.totalorder %s476, %s492
      %p494 = scmp.eq.s32.totalorder %s38, 0
      %p495 = por %p493, %p494
      %p496 = scmp.le.s32.totalorder 1, %s32
      %p497 = scmp.lt.s32.totalorder %s32, 3
      %p498 = pnand %p496, %p497
      %p499 = pneg %p498
      // Predicated region
      $region9: #{bert_classifier_forward.1} parent=5 // pred_check
        _
      $region10: #{bert_classifier_forward.1} parent=5 // pred_check_branch
        %501 = sbr.rel (%p498) target = $region12
      $region11: #{bert_classifier_forward.1} parent=5 // pred_region
        %s502 = ssub.s32 %s32, 1
        // Predicated region
        $region13: #{bert_classifier_forward.1} parent=11 // pred_check
          %p503 = pneg %p105
        $region14: #{bert_classifier_forward.1} parent=11 // pred_check_branch
          %505 = sbr.rel (%p503) target = $region16
        $region15: #{bert_classifier_forward.1} parent=11 // pred_region
          _
        $region16: #{bert_classifier_forward.1} parent=11 // pred_fallthru
          _
        // Predicated region
        $region17: #{bert_classifier_forward.1} parent=11 // pred_check
          %p506 = pneg %p126
        $region18: #{bert_classifier_forward.1} parent=11 // pred_check_branch
          %508 = sbr.rel (%p506) target = $region20
        $region19: #{bert_classifier_forward.1} parent=11 // pred_region
          _
        $region20: #{bert_classifier_forward.1} parent=11 // pred_fallthru
          _
        // Predicated region
        $region21: #{bert_classifier_forward.1} parent=11 // pred_check
          %p509 = pneg %p147
        $region22: #{bert_classifier_forward.1} parent=11 // pred_check_branch
          %511 = sbr.rel (%p509) target = $region24
        $region23: #{bert_classifier_forward.1} parent=11 // pred_region
          %513 = vsyncadd [#allocation3], 0
          %s514 = sshll.u32 %s4, 4
          %s515 = int_to_ptr.hbm [resolvable:$true] %s514
          %s516 = sshll.u32 [#allocation2], 4
          %s517 = int_to_ptr.vmem [resolvable:$true] %s516
          %522 = dma.hbm_to_vmem [thread:$0]  %s515, 6144, %s517, [#allocation3], 192, 192, 12
        $region24: #{bert_classifier_forward.1} parent=11 // pred_fallthru
          _
        // Predicated region
        $region25: #{bert_classifier_forward.1} parent=11 // pred_check
          %p523 = pneg %p168
        $region26: #{bert_classifier_forward.1} parent=11 // pred_check_branch
          %525 = sbr.rel (%p523) target = $region28
        $region27: #{bert_classifier_forward.1} parent=11 // pred_region
          _
        $region28: #{bert_classifier_forward.1} parent=11 // pred_fallthru
          _
        // Predicated region
        $region29: #{bert_classifier_forward.1} parent=11 // pred_check
          %p526 = pneg %p189
        $region30: #{bert_classifier_forward.1} parent=11 // pred_check_branch
          %528 = sbr.rel (%p526) target = $region32
        $region31: #{bert_classifier_forward.1} parent=11 // pred_region
          _
        $region32: #{bert_classifier_forward.1} parent=11 // pred_fallthru
          _
        // Predicated region
        $region33: #{bert_classifier_forward.1} parent=11 // pred_check
          %p529 = pneg %p210
        $region34: #{bert_classifier_forward.1} parent=11 // pred_check_branch
          %531 = sbr.rel (%p529) target = $region36
        $region35: #{bert_classifier_forward.1} parent=11 // pred_region
          _
        $region36: #{bert_classifier_forward.1} parent=11 // pred_fallthru
          _
        // Predicated region
        $region37: #{bert_classifier_forward.1} parent=11 // pred_check
          %p532 = pneg %p231
        $region38: #{bert_classifier_forward.1} parent=11 // pred_check_branch
          %534 = sbr.rel (%p532) target = $region40
        $region39: #{bert_classifier_forward.1} parent=11 // pred_region
          _
        $region40: #{bert_classifier_forward.1} parent=11 // pred_fallthru
          _
        // Predicated region
        $region41: #{bert_classifier_forward.1} parent=11 // pred_check
          %p535 = pneg %p252
        $region42: #{bert_classifier_forward.1} parent=11 // pred_check_branch
          %537 = sbr.rel (%p535) target = $region44
        $region43: #{bert_classifier_forward.1} parent=11 // pred_region
          _
        $region44: #{bert_classifier_forward.1} parent=11 // pred_fallthru
          _
        // Predicated region
        $region45: #{bert_classifier_forward.1} parent=11 // pred_check
          %p538 = pneg %p273
        $region46: #{bert_classifier_forward.1} parent=11 // pred_check_branch
          %540 = sbr.rel (%p538) target = $region48
        $region47: #{bert_classifier_forward.1} parent=11 // pred_region
          %542 = vsyncadd [#allocation6], 0
          %s543 = sshll.u32 %s10, 4
          %s544 = int_to_ptr.hbm [resolvable:$true] %s543
          %s545 = sshll.u32 [#allocation5], 4
          %s546 = int_to_ptr.vmem [resolvable:$true] %s545
          %551 = dma.hbm_to_vmem [thread:$0]  %s544, 4096, %s546, [#allocation6], 128, 128, 8
        $region48: #{bert_classifier_forward.1} parent=11 // pred_fallthru
          _
        // Predicated region
        $region49: #{bert_classifier_forward.1} parent=11 // pred_check
          %p552 = pneg %p294
        $region50: #{bert_classifier_forward.1} parent=11 // pred_check_branch
          %554 = sbr.rel (%p552) target = $region52
        $region51: #{bert_classifier_forward.1} parent=11 // pred_region
          _
        $region52: #{bert_classifier_forward.1} parent=11 // pred_fallthru
          _
        // Predicated region
        $region53: #{bert_classifier_forward.1} parent=11 // pred_check
          %p555 = pneg %p315
        $region54: #{bert_classifier_forward.1} parent=11 // pred_check_branch
          %557 = sbr.rel (%p555) target = $region56
        $region55: #{bert_classifier_forward.1} parent=11 // pred_region
          %559 = vsyncadd [#allocation6], 0
          %s560 = sshll.u32 %s12, 4
          %s561 = int_to_ptr.hbm [resolvable:$true] %s560
          %s562 = sshll.u32 [#allocation7], 4
          %s563 = int_to_ptr.vmem [resolvable:$true] %s562
          %568 = dma.hbm_to_vmem [thread:$0]  %s561, 4096, %s563, [#allocation6], 64, 64, 4
        $region56: #{bert_classifier_forward.1} parent=11 // pred_fallthru
          _
        // Predicated region
        $region57: #{bert_classifier_forward.1} parent=11 // pred_check
          %p569 = pneg %p336
        $region58: #{bert_classifier_forward.1} parent=11 // pred_check_branch
          %571 = sbr.rel (%p569) target = $region60
        $region59: #{bert_classifier_forward.1} parent=11 // pred_region
          _
        $region60: #{bert_classifier_forward.1} parent=11 // pred_fallthru
          _
        // Predicated region
        $region61: #{bert_classifier_forward.1} parent=11 // pred_check
          %p572 = pneg %p357
        $region62: #{bert_classifier_forward.1} parent=11 // pred_check_branch
          %574 = sbr.rel (%p572) target = $region64
        $region63: #{bert_classifier_forward.1} parent=11 // pred_region
          _
        $region64: #{bert_classifier_forward.1} parent=11 // pred_fallthru
          _
        // Predicated region
        $region65: #{bert_classifier_forward.1} parent=11 // pred_check
          %p575 = pneg %p378
        $region66: #{bert_classifier_forward.1} parent=11 // pred_check_branch
          %577 = sbr.rel (%p575) target = $region68
        $region67: #{bert_classifier_forward.1} parent=11 // pred_region
          _
        $region68: #{bert_classifier_forward.1} parent=11 // pred_fallthru
          _
        // Predicated region
        $region69: #{bert_classifier_forward.1} parent=11 // pred_check
          %p578 = pneg %p399
        $region70: #{bert_classifier_forward.1} parent=11 // pred_check_branch
          %580 = sbr.rel (%p578) target = $region72
        $region71: #{bert_classifier_forward.1} parent=11 // pred_region
          _
        $region72: #{bert_classifier_forward.1} parent=11 // pred_fallthru
          _
        // Predicated region
        $region73: #{bert_classifier_forward.1} parent=11 // pred_check
          %p581 = pneg %p420
        $region74: #{bert_classifier_forward.1} parent=11 // pred_check_branch
          %583 = sbr.rel (%p581) target = $region76
        $region75: #{bert_classifier_forward.1} parent=11 // pred_region
          _
        $region76: #{bert_classifier_forward.1} parent=11 // pred_fallthru
          _
        // Predicated region
        $region77: #{bert_classifier_forward.1} parent=11 // pred_check
          %p584 = pneg %p441
        $region78: #{bert_classifier_forward.1} parent=11 // pred_check_branch
          %586 = sbr.rel (%p584) target = $region80
        $region79: #{bert_classifier_forward.1} parent=11 // pred_region
          %588 = vsyncadd [#allocation9], 0
          %s589 = sshll.u32 %s18, 4
          %s590 = int_to_ptr.hbm [resolvable:$true] %s589
          %s591 = sshll.u32 [#allocation8], 4
          %s592 = int_to_ptr.vmem [resolvable:$true] %s591
          %597 = dma.hbm_to_vmem [thread:$0]  %s590, 1024, %s592, [#allocation9], 64, 64, 4
        $region80: #{bert_classifier_forward.1} parent=11 // pred_fallthru
          _
        // Predicated region
        $region81: #{bert_classifier_forward.1} parent=11 // pred_check
          %p598 = pneg %p462
        $region82: #{bert_classifier_forward.1} parent=11 // pred_check_branch
          %600 = sbr.rel (%p598) target = $region84
        $region83: #{bert_classifier_forward.1} parent=11 // pred_region
          _
        $region84: #{bert_classifier_forward.1} parent=11 // pred_fallthru
          _
      $region12: #{bert_classifier_forward.1} parent=5 // pred_fallthru
        _
      %p601 = scmp.lt.s32.totalorder %s32, 2
      // Predicated region
      $region85: #{bert_classifier_forward.1} parent=5 // pred_check
        %p602 = pneg %p601
      $region86: #{bert_classifier_forward.1} parent=5 // pred_check_branch
        %604 = sbr.rel (%p602) target = $region88
      $region87: #{bert_classifier_forward.1} parent=5 // pred_region
        // Predicated region
        $region89: #{bert_classifier_forward.1} parent=87 // pred_check
          %p605 = pneg %p52
        $region90: #{bert_classifier_forward.1} parent=87 // pred_check_branch
          %607 = sbr.rel (%p605) target = $region92
        $region91: #{bert_classifier_forward.1} parent=87 // pred_region
          %p608 = scmp.lt.s32.totalorder %s32, 1
          %s609 = scalar_select %p608, %s32, 1
          %s610 = smul.addr %s609, 8
          %s611 = scalar_lea.vmem %s0, %s610
        $region92: #{bert_classifier_forward.1} parent=87 // pred_fallthru
          _
        // Predicated region
        $region93: #{bert_classifier_forward.1} parent=87 // pred_check
          %p612 = pneg %p78
        $region94: #{bert_classifier_forward.1} parent=87 // pred_check_branch
          %614 = sbr.rel (%p612) target = $region96
        $region95: #{bert_classifier_forward.1} parent=87 // pred_region
          %p615 = scmp.lt.s32.totalorder %s32, 1
          %s616 = scalar_select %p615, %s32, 1
          %s617 = scalar_lea.vmem %s1, %s616
        $region96: #{bert_classifier_forward.1} parent=87 // pred_fallthru
          _
      $region88: #{bert_classifier_forward.1} parent=5 // pred_fallthru
        _
      %p618 = scmp.le.s32.totalorder 1, %s32
      %p619 = scmp.lt.s32.totalorder %s32, 3
      %p620 = pnand %p618, %p619
      %p621 = pneg %p620
      // Predicated region
      $region97: #{bert_classifier_forward.1} parent=5 // pred_check
        _
      $region98: #{bert_classifier_forward.1} parent=5 // pred_check_branch
        %623 = sbr.rel (%p620) target = $region100
      $region99: #{bert_classifier_forward.1} parent=5 // pred_region
        %s624 = ssub.s32 %s32, 1
        // Predicated region
        $region101: #{bert_classifier_forward.1} parent=99 // pred_check
          %p625 = pneg %p147
        $region102: #{bert_classifier_forward.1} parent=99 // pred_check_branch
          %627 = sbr.rel (%p625) target = $region104
        $region103: #{bert_classifier_forward.1} parent=99 // pred_region
          %629 = dma.done [#allocation3], 6144
        $region104: #{bert_classifier_forward.1} parent=99 // pred_fallthru
          _
        // Predicated region
        $region105: #{bert_classifier_forward.1} parent=99 // pred_check
          %p630 = pneg %p273
        $region106: #{bert_classifier_forward.1} parent=99 // pred_check_branch
          %632 = sbr.rel (%p630) target = $region108
        $region107: #{bert_classifier_forward.1} parent=99 // pred_region
          %634 = dma.done [#allocation6], 4096
        $region108: #{bert_classifier_forward.1} parent=99 // pred_fallthru
          _
        // Predicated region
        $region109: #{bert_classifier_forward.1} parent=99 // pred_check
          %p635 = pneg %p315
        $region110: #{bert_classifier_forward.1} parent=99 // pred_check_branch
          %637 = sbr.rel (%p635) target = $region112
        $region111: #{bert_classifier_forward.1} parent=99 // pred_region
          %639 = dma.done [#allocation6], 4096
        $region112: #{bert_classifier_forward.1} parent=99 // pred_fallthru
          _
        // Predicated region
        $region113: #{bert_classifier_forward.1} parent=99 // pred_check
          %p640 = pneg %p441
        $region114: #{bert_classifier_forward.1} parent=99 // pred_check_branch
          %642 = sbr.rel (%p640) target = $region116
        $region115: #{bert_classifier_forward.1} parent=99 // pred_region
          %644 = dma.done [#allocation9], 1024
        $region116: #{bert_classifier_forward.1} parent=99 // pred_fallthru
          _
        %p645 = scmp.lt.s32.totalorder %s37, 1
        %s646 = scalar_select %p645, %s37, 1
        %s647 = smul.addr %s646, 8
        %s648 = scalar_lea.vmem %s0, %s647
        %p649 = pneg %p58
        %p650 = pneg %p55
        %p651 = scmp.lt.s32.totalorder %s37, 1
        %s652 = scalar_select %p651, %s37, 1
        %s653 = scalar_lea.vmem %s1, %s652
        %p654 = pneg %p84
        %p655 = pneg %p81
        %p656 = pneg %p105
        %p657 = pneg %p102
        %p658 = pneg %p126
        %p659 = pneg %p123
        %p660 = pneg %p147
        %p661 = pneg %p144
        %p662 = pneg %p168
        %p663 = pneg %p165
        %p664 = pneg %p189
        %p665 = pneg %p186
        %p666 = pneg %p210
        %p667 = pneg %p207
        %p668 = pneg %p231
        %p669 = pneg %p228
        %p670 = pneg %p252
        %p671 = pneg %p249
        %p672 = pneg %p273
        %p673 = pneg %p270
        %p674 = pneg %p294
        %p675 = pneg %p291
        %p676 = pneg %p315
        %p677 = pneg %p312
        %p678 = pneg %p336
        %p679 = pneg %p333
        %p680 = pneg %p357
        %p681 = pneg %p354
        %p682 = pneg %p378
        %p683 = pneg %p375
        %p684 = pneg %p399
        %p685 = pneg %p396
        %p686 = pneg %p420
        %p687 = pneg %p417
        %p688 = pneg %p441
        %p689 = pneg %p438
        %p690 = pneg %p462
        %p691 = pneg %p459
        %p692 = pneg %p488
        %p693 = pneg %p485
        %s694 = sand.u32 %s475, 1
        %s695 = scalar_lea.sflag [#allocation4], %s694
        %s696 = sand.u32 %s475, 1
        %s697 = scalar_lea.vmem [#allocation10], %s696
        %p698 = scmp.lt.s32.totalorder %s37, 1
        %s699 = scalar_select %p698, %s37, 1
        %s700 = smul.addr %s699, 8
        %s701 = scalar_lea.vmem %s0, %s700
        %p702 = scmp.lt.s32.totalorder %s37, 1
        %s703 = scalar_select %p702, %s37, 1
        %s704 = scalar_lea.vmem %s1, %s703
        %v706 = vld [vmem:[%s701] sm:$0xff]
        %v707 = vld [vmem:[%s2] sm:$0x1]
        %v708 = vld [vmem:[%s3] sm:$0x1]
        %709 = vadd.xlane.f32.xlu0 %v706
        %v710 = vpop.xlane.xlu0 %709
        %v711 = vrcp.pop 128.0
        %v712 = vmul.f32 128.0, %v711
        %v713 = vsub.f32 1.0, %v712
        %v714 = vmul.f32 %v711, %v713
        %v715 = vadd.f32 %v711, %v714
        %vm716 = vweird.f32 %v711
        %v717 = vsel %vm716, %v711, %v715
        %v718 = vmul.f32 %v710, %v717
        %v719 = vsub.f32 %v706, %v718
        %v720 = vmul.f32 %v719, %v719
        %721 = vadd.xlane.f32.xlu0 %v720
        %v722 = vpop.xlane.xlu0 %721
        %v723 = vmul.f32 %v722, %v717
        %v724 = vadd.f32 %v723, 1e-12
        %v725 = vrsqrt.pop %v724
        %v726 = vmul.f32 %v725, %v724
        %v727 = vmul.f32 %v726, %v725
        %v728 = vmul.f32 0.5, %v727
        %v729 = vsub.f32 1.5, %v728
        %v730 = vmul.f32 %v725, %v729
        %vm731 = vweird.f32 %v724
        %vm732 = vweird.f32 %v725
        %vm733 = vmor %vm731, %vm732
        %v734 = vsel %vm733, %v725, %v730
        %v735 = vmul.f32 %v719, %v734
        %v737 = vperm.slane %v707, 0
        %v739 = vmul.f32 %v735, %v737
        %v741 = vperm.slane %v708, 0
        %v743 = vadd.f32 %v739, %v741
        %v744 = vld [vmem:[%s704] sm:$0x1]
        %v745 = vpack.c.bf16 %v743, %v743
        %v746 = vld [vmem:[#allocation2] sm:$0xff]
        %v747 = vld [vmem:[#allocation2 + $0x8] sm:$0xf]
        %v748 = vld [vmem:[#allocation2 + $0xc] sm:$0xff]
        %v749 = vld [vmem:[#allocation2 + $0x14] sm:$0xf]
        %v750 = vld [vmem:[#allocation2 + $0x18] sm:$0xff]
        %v751 = vld [vmem:[#allocation2 + $0x20] sm:$0xf]
        %v752 = vld [vmem:[#allocation2 + $0x24] sm:$0xff]
        %v753 = vld [vmem:[#allocation2 + $0x2c] sm:$0xf]
        %v754 = vld [vmem:[#allocation2 + $0x30] sm:$0xff]
        %v755 = vld [vmem:[#allocation2 + $0x38] sm:$0xf]
        %v756 = vld [vmem:[#allocation2 + $0x3c] sm:$0xff]
        %v757 = vld [vmem:[#allocation2 + $0x44] sm:$0xf]
        %v758 = vld [vmem:[#allocation2 + $0x48] sm:$0xff]
        %v759 = vld [vmem:[#allocation2 + $0x50] sm:$0xf]
        %v760 = vld [vmem:[#allocation2 + $0x54] sm:$0xff]
        %v761 = vld [vmem:[#allocation2 + $0x5c] sm:$0xf]
        %v762 = vld [vmem:[#allocation2 + $0x60] sm:$0xff]
        %v763 = vld [vmem:[#allocation2 + $0x68] sm:$0xf]
        %v764 = vld [vmem:[#allocation2 + $0x6c] sm:$0xff]
        %v765 = vld [vmem:[#allocation2 + $0x74] sm:$0xf]
        %v766 = vld [vmem:[#allocation2 + $0x78] sm:$0xff]
        %v767 = vld [vmem:[#allocation2 + $0x80] sm:$0xf]
        %v768 = vld [vmem:[#allocation2 + $0x84] sm:$0xff]
        %v769 = vld [vmem:[#allocation2 + $0x8c] sm:$0xf]
        %v770 = vld [vmem:[#allocation2 + $0x90] sm:$0xff]
        %v771 = vld [vmem:[#allocation2 + $0x98] sm:$0xf]
        %v772 = vld [vmem:[#allocation2 + $0x9c] sm:$0xff]
        %v773 = vld [vmem:[#allocation2 + $0xa4] sm:$0xf]
        %v774 = vld [vmem:[#allocation2 + $0xa8] sm:$0xff]
        %v775 = vld [vmem:[#allocation2 + $0xb0] sm:$0xf]
        %v776 = vld [vmem:[#allocation2 + $0xb4] sm:$0xff]
        %v777 = vld [vmem:[#allocation2 + $0xbc] sm:$0xf]
        %v778 = vld [vmem:[%s5] sm:$0x7]
        %v780 = vperm.slane %v778, 0
        %v781 = vperm.slane %v778, 1
        %v782 = vperm.slane %v778, 2
        %v818 = vunpack.c.l.b16 %v746
        %v819 = vunpack.c.h.b16 %v746
        %v820 = vunpack.c.l.b16 %v747
        %v821 = vunpack.c.l.b16 %v748
        %v822 = vunpack.c.h.b16 %v748
        %v823 = vunpack.c.l.b16 %v749
        %v824 = vunpack.c.l.b16 %v750
        %v825 = vunpack.c.h.b16 %v750
        %v826 = vunpack.c.l.b16 %v751
        %v827 = vunpack.c.l.b16 %v752
        %v828 = vunpack.c.h.b16 %v752
        %v829 = vunpack.c.l.b16 %v753
        %v830 = vunpack.c.l.b16 %v754
        %v831 = vunpack.c.h.b16 %v754
        %v832 = vunpack.c.l.b16 %v755
        %v833 = vunpack.c.l.b16 %v756
        %v834 = vunpack.c.h.b16 %v756
        %v835 = vunpack.c.l.b16 %v757
        %v836 = vunpack.c.l.b16 %v758
        %v837 = vunpack.c.h.b16 %v758
        %v838 = vunpack.c.l.b16 %v759
        %v839 = vunpack.c.l.b16 %v760
        %v840 = vunpack.c.h.b16 %v760
        %v841 = vunpack.c.l.b16 %v761
        %v842 = vunpack.c.l.b16 %v762
        %v843 = vunpack.c.h.b16 %v762
        %v844 = vunpack.c.l.b16 %v763
        %v845 = vunpack.c.l.b16 %v764
        %v846 = vunpack.c.h.b16 %v764
        %v847 = vunpack.c.l.b16 %v765
        %v848 = vunpack.c.l.b16 %v766
        %v849 = vunpack.c.h.b16 %v766
        %v850 = vunpack.c.l.b16 %v767
        %v851 = vunpack.c.l.b16 %v768
        %v852 = vunpack.c.h.b16 %v768
        %v853 = vunpack.c.l.b16 %v769
        %v854 = vunpack.c.l.b16 %v770
        %v855 = vunpack.c.h.b16 %v770
        %v856 = vunpack.c.l.b16 %v771
        %v857 = vunpack.c.l.b16 %v772
        %v858 = vunpack.c.h.b16 %v772
        %v859 = vunpack.c.l.b16 %v773
        %v860 = vunpack.c.l.b16 %v774
        %v861 = vunpack.c.h.b16 %v774
        %v862 = vunpack.c.l.b16 %v775
        %v863 = vunpack.c.l.b16 %v776
        %v864 = vunpack.c.h.b16 %v776
        %v865 = vunpack.c.l.b16 %v777
        %v866 = vpack.c.b16 %v821, %v818
        %v867 = vpack.c.b16 %v822, %v819
        %v868 = vpack.c.b16 %v823, %v820
        %v869 = vpack.c.b16 %v827, %v824
        %v870 = vpack.c.b16 %v828, %v825
        %v871 = vpack.c.b16 %v829, %v826
        %v872 = vpack.c.b16 %v833, %v830
        %v873 = vpack.c.b16 %v834, %v831
        %v874 = vpack.c.b16 %v835, %v832
        %v875 = vpack.c.b16 %v839, %v836
        %v876 = vpack.c.b16 %v840, %v837
        %v877 = vpack.c.b16 %v841, %v838
        %v878 = vpack.c.b16 %v845, %v842
        %v879 = vpack.c.b16 %v846, %v843
        %v880 = vpack.c.b16 %v847, %v844
        %v881 = vpack.c.b16 %v851, %v848
        %v882 = vpack.c.b16 %v852, %v849
        %v883 = vpack.c.b16 %v853, %v850
        %v884 = vpack.c.b16 %v857, %v854
        %v885 = vpack.c.b16 %v858, %v855
        %v886 = vpack.c.b16 %v859, %v856
        %v887 = vpack.c.b16 %v863, %v860
        %v888 = vpack.c.b16 %v864, %v861
        %v889 = vpack.c.b16 %v865, %v862
        %914 = vmatpush.bf16.msra.mxu0 %v887
        %915 = vmatpush.bf16.msra.mxu0 %v884
        %916 = vmatpush.bf16.msra.mxu0 %v881
        %917 = vmatpush.bf16.msra.mxu0 %v878
        %918 = vmatpush.bf16.msra.mxu0 %v875
        %919 = vmatpush.bf16.msra.mxu0 %v872
        %920 = vmatpush.bf16.msra.mxu0 %v869
        %921 = vmatpush.bf16.msra.mxu0 %v866
        %922 = vmatmul.bf16.gmra.mxu0 %v745
        %v923 = vpop.f32.mrf.mxu0
        %v924 = vadd.f32 %v780, %v923
        %v925 = vpop.f32.mrf.mxu0
        %926 = vdwg.mxu0
        %927 = vmatpush.bf16.msra.mxu0 %v888
        %928 = vmatpush.bf16.msra.mxu0 %v885
        %929 = vmatpush.bf16.msra.mxu0 %v882
        %930 = vmatpush.bf16.msra.mxu0 %v879
        %931 = vmatpush.bf16.msra.mxu0 %v876
        %932 = vmatpush.bf16.msra.mxu0 %v873
        %933 = vmatpush.bf16.msra.mxu0 %v870
        %934 = vmatpush.bf16.msra.mxu0 %v867
        %935 = vmatmul.bf16.gmra.mxu0 %v745
        %v936 = vpop.f32.mrf.mxu0
        %v937 = vadd.f32 %v781, %v936
        %v938 = vpop.f32.mrf.mxu0
        %939 = vdwg.mxu0
        %940 = vmatpush.bf16.msra.mxu0 %v889
        %941 = vmatpush.bf16.msra.mxu0 %v886
        %942 = vmatpush.bf16.msra.mxu0 %v883
        %943 = vmatpush.bf16.msra.mxu0 %v880
        %944 = vmatpush.bf16.msra.mxu0 %v877
        %945 = vmatpush.bf16.msra.mxu0 %v874
        %946 = vmatpush.bf16.msra.mxu0 %v871
        %947 = vmatpush.bf16.msra.mxu0 %v868
        %948 = vmatmul.bf16.gmra.mxu0 %v745
        %v949 = vpop.f32.mrf.mxu0
        %v950 = vadd.f32 %v782, %v949
        %v951 = vpop.f32.mrf.mxu0
        %952 = vdwg.mxu0
        %v953 = vpack.c.bf16 %v924, %v924
        %v954 = vpack.c.bf16 %v937, %v937
        %v956 = vperm.slane %v744, 0
        %vm958 = vcmask 261120
        %v960 = vsel %vm958, %v953, 0
        %v963 = vsel %vm958, %v954, 0
        %965 = vmatpush.bf16.xpose.msra.mxu0 0
        %966 = vmatpush.bf16.xpose.msra.mxu0 0
        %967 = vmatpush.bf16.xpose.msra.mxu0 0
        %968 = vmatpush.bf16.xpose.msra.mxu0 0
        %969 = vmatpush.bf16.xpose.msra.mxu0 0
        %970 = vmatpush.bf16.xpose.msra.mxu0 0
        %971 = vmatpush.bf16.xpose.msra.mxu0 0
        %972 = vmatpush.bf16.xpose.msra.mxu0 %v963
        %973 = vmatmul.bf16.gmra.mxu0 %v960
        %v974 = vpop.f32.mrf.mxu0
        %v975 = vadd.f32 %v956, %v974
        %v976 = vpop.f32.mrf.mxu0
        %977 = vdwg.mxu0
        %vm978 = vcmask 64512
        %v979 = vsel %vm978, %v975, -inf
        %980 = vmax.xlane.f32.xlu0 %v979
        %v981 = vpop.xlane.xlu0 %980
        %v982 = vsub.f32 %v975, %v981
        %v983 = vmul.f32 %v982, 1.442695
        %v984 = vpow.pop %v983
        %v985 = vsel %vm978, %v984, 0.0
        %986 = vadd.xlane.f32.xlu0 %v985
        %v987 = vpop.xlane.xlu0 %986
        %v988 = vrcp.pop %v987
        %v989 = vmul.f32 %v984, %v988
        %v990 = vpack.c.bf16 %v989, %v989
        %v991 = vpack.c.bf16 %v950, %v950
        %v993 = vsel %vm978, %v990, 0
        %vm995 = vcmask 1043456
        %v997 = vsel %vm995, %v991, 0
        %999 = vmatpush.bf16.msra.mxu0 0
        %1000 = vmatpush.bf16.msra.mxu0 0
        %1001 = vmatpush.bf16.msra.mxu0 0
        %1002 = vmatpush.bf16.msra.mxu0 0
        %1003 = vmatpush.bf16.msra.mxu0 0
        %1004 = vmatpush.bf16.msra.mxu0 0
        %1005 = vmatpush.bf16.msra.mxu0 0
        %1006 = vmatpush.bf16.msra.mxu0 %v997
        %1007 = vmatmul.bf16.gmra.mxu0 %v993
        %v1008 = vpop.f32.mrf.mxu0
        %v1009 = vadd.f32 0.0, %v1008
        %v1010 = vpop.f32.mrf.mxu0
        %1011 = vdwg.mxu0
        %1013 = vrot.lane.b32.xlu0 %v953, 96
        %v1014 = vpop.permute.xlu0 %1013
        %1016 = vrot.lane.b32.xlu0 %v954, 96
        %v1017 = vpop.permute.xlu0 %1016
        %v1019 = vsel %vm958, %v1014, 0
        %v1022 = vsel %vm958, %v1017, 0
        %1024 = vmatpush.bf16.xpose.msra.mxu0 0
        %1025 = vmatpush.bf16.xpose.msra.mxu0 0
        %1026 = vmatpush.bf16.xpose.msra.mxu0 0
        %1027 = vmatpush.bf16.xpose.msra.mxu0 0
        %1028 = vmatpush.bf16.xpose.msra.mxu0 0
        %1029 = vmatpush.bf16.xpose.msra.mxu0 0
        %1030 = vmatpush.bf16.xpose.msra.mxu0 0
        %1031 = vmatpush.bf16.xpose.msra.mxu0 %v1022
        %1032 = vmatmul.bf16.gmra.mxu0 %v1019
        %v1033 = vpop.f32.mrf.mxu0
        %v1034 = vadd.f32 %v956, %v1033
        %v1035 = vpop.f32.mrf.mxu0
        %1036 = vdwg.mxu0
        %v1037 = vsel %vm978, %v1034, -inf
        %1038 = vmax.xlane.f32.xlu0 %v1037
        %v1039 = vpop.xlane.xlu0 %1038
        %v1040 = vsub.f32 %v1034, %v1039
        %v1041 = vmul.f32 %v1040, 1.442695
        %v1042 = vpow.pop %v1041
        %v1043 = vsel %vm978, %v1042, 0.0
        %1044 = vadd.xlane.f32.xlu0 %v1043
        %v1045 = vpop.xlane.xlu0 %1044
        %v1046 = vrcp.pop %v1045
        %v1047 = vmul.f32 %v1042, %v1046
        %v1048 = vpack.c.bf16 %v1047, %v1047
        %1050 = vrot.lane.b32.xlu0 %v991, 96
        %v1051 = vpop.permute.xlu0 %1050
        %v1053 = vsel %vm978, %v1048, 0
        %v1056 = vsel %vm995, %v1051, 0
        %1058 = vmatpush.bf16.msra.mxu0 0
        %1059 = vmatpush.bf16.msra.mxu0 0
        %1060 = vmatpush.bf16.msra.mxu0 0
        %1061 = vmatpush.bf16.msra.mxu0 0
        %1062 = vmatpush.bf16.msra.mxu0 0
        %1063 = vmatpush.bf16.msra.mxu0 0
        %1064 = vmatpush.bf16.msra.mxu0 0
        %1065 = vmatpush.bf16.msra.mxu0 %v1056
        %1066 = vmatmul.bf16.gmra.mxu0 %v1053
        %v1067 = vpop.f32.mrf.mxu0
        %v1068 = vadd.f32 0.0, %v1067
        %v1069 = vpop.f32.mrf.mxu0
        %1070 = vdwg.mxu0
        %1071 = vrot.lane.b32.xlu0 %v953, 64
        %v1072 = vpop.permute.xlu0 %1071
        %1073 = vrot.lane.b32.xlu0 %v954, 64
        %v1074 = vpop.permute.xlu0 %1073
        %v1076 = vsel %vm958, %v1072, 0
        %v1079 = vsel %vm958, %v1074, 0
        %1081 = vmatpush.bf16.xpose.msra.mxu0 0
        %1082 = vmatpush.bf16.xpose.msra.mxu0 0
        %1083 = vmatpush.bf16.xpose.msra.mxu0 0
        %1084 = vmatpush.bf16.xpose.msra.mxu0 0
        %1085 = vmatpush.bf16.xpose.msra.mxu0 0
        %1086 = vmatpush.bf16.xpose.msra.mxu0 0
        %1087 = vmatpush.bf16.xpose.msra.mxu0 0
        %1088 = vmatpush.bf16.xpose.msra.mxu0 %v1079
        %1089 = vmatmul.bf16.gmra.mxu0 %v1076
        %v1090 = vpop.f32.mrf.mxu0
        %v1091 = vadd.f32 %v956, %v1090
        %v1092 = vpop.f32.mrf.mxu0
        %1093 = vdwg.mxu0
        %v1094 = vsel %vm978, %v1091, -inf
        %1095 = vmax.xlane.f32.xlu0 %v1094
        %v1096 = vpop.xlane.xlu0 %1095
        %v1097 = vsub.f32 %v1091, %v1096
        %v1098 = vmul.f32 %v1097, 1.442695
        %v1099 = vpow.pop %v1098
        %v1100 = vsel %vm978, %v1099, 0.0
        %1101 = vadd.xlane.f32.xlu0 %v1100
        %v1102 = vpop.xlane.xlu0 %1101
        %v1103 = vrcp.pop %v1102
        %v1104 = vmul.f32 %v1099, %v1103
        %v1105 = vpack.c.bf16 %v1104, %v1104
        %1106 = vrot.lane.b32.xlu0 %v991, 64
        %v1107 = vpop.permute.xlu0 %1106
        %v1109 = vsel %vm978, %v1105, 0
        %v1112 = vsel %vm995, %v1107, 0
        %1114 = vmatpush.bf16.msra.mxu0 0
        %1115 = vmatpush.bf16.msra.mxu0 0
        %1116 = vmatpush.bf16.msra.mxu0 0
        %1117 = vmatpush.bf16.msra.mxu0 0
        %1118 = vmatpush.bf16.msra.mxu0 0
        %1119 = vmatpush.bf16.msra.mxu0 0
        %1120 = vmatpush.bf16.msra.mxu0 0
        %1121 = vmatpush.bf16.msra.mxu0 %v1112
        %1122 = vmatmul.bf16.gmra.mxu0 %v1109
        %v1123 = vpop.f32.mrf.mxu0
        %v1124 = vadd.f32 0.0, %v1123
        %v1125 = vpop.f32.mrf.mxu0
        %1126 = vdwg.mxu0
        %1127 = vrot.lane.b32.xlu0 %v953, 32
        %v1128 = vpop.permute.xlu0 %1127
        %1129 = vrot.lane.b32.xlu0 %v954, 32
        %v1130 = vpop.permute.xlu0 %1129
        %v1132 = vsel %vm958, %v1128, 0
        %v1135 = vsel %vm958, %v1130, 0
        %1137 = vmatpush.bf16.xpose.msra.mxu0 0
        %1138 = vmatpush.bf16.xpose.msra.mxu0 0
        %1139 = vmatpush.bf16.xpose.msra.mxu0 0
        %1140 = vmatpush.bf16.xpose.msra.mxu0 0
        %1141 = vmatpush.bf16.xpose.msra.mxu0 0
        %1142 = vmatpush.bf16.xpose.msra.mxu0 0
        %1143 = vmatpush.bf16.xpose.msra.mxu0 0
        %1144 = vmatpush.bf16.xpose.msra.mxu0 %v1135
        %1145 = vmatmul.bf16.gmra.mxu0 %v1132
        %v1146 = vpop.f32.mrf.mxu0
        %v1147 = vadd.f32 %v956, %v1146
        %v1148 = vpop.f32.mrf.mxu0
        %1149 = vdwg.mxu0
        %v1150 = vsel %vm978, %v1147, -inf
        %1151 = vmax.xlane.f32.xlu0 %v1150
        %v1152 = vpop.xlane.xlu0 %1151
        %v1153 = vsub.f32 %v1147, %v1152
        %v1154 = vmul.f32 %v1153, 1.442695
        %v1155 = vpow.pop %v1154
        %v1156 = vsel %vm978, %v1155, 0.0
        %1157 = vadd.xlane.f32.xlu0 %v1156
        %v1158 = vpop.xlane.xlu0 %1157
        %v1159 = vrcp.pop %v1158
        %v1160 = vmul.f32 %v1155, %v1159
        %v1161 = vpack.c.bf16 %v1160, %v1160
        %1162 = vrot.lane.b32.xlu0 %v991, 32
        %v1163 = vpop.permute.xlu0 %1162
        %v1165 = vsel %vm978, %v1161, 0
        %v1168 = vsel %vm995, %v1163, 0
        %1170 = vmatpush.bf16.msra.mxu0 0
        %1171 = vmatpush.bf16.msra.mxu0 0
        %1172 = vmatpush.bf16.msra.mxu0 0
        %1173 = vmatpush.bf16.msra.mxu0 0
        %1174 = vmatpush.bf16.msra.mxu0 0
        %1175 = vmatpush.bf16.msra.mxu0 0
        %1176 = vmatpush.bf16.msra.mxu0 0
        %1177 = vmatpush.bf16.msra.mxu0 %v1168
        %1178 = vmatmul.bf16.gmra.mxu0 %v1165
        %v1179 = vpop.f32.mrf.mxu0
        %v1180 = vadd.f32 0.0, %v1179
        %v1181 = vpop.f32.mrf.mxu0
        %1182 = vdwg.mxu0
        %1184 = vrot.lane.b32.xlu0 %v1068, 32
        %v1185 = vpop.permute.xlu0 %1184
        %1188 = vrot.lane.b32.xlu0 %v1124, 64
        %v1189 = vpop.permute.xlu0 %1188
        %1192 = vrot.lane.b32.xlu0 %v1180, 96
        %v1193 = vpop.permute.xlu0 %1192
        %v1195 = vsel %vm958, %v1009, %v1185
        %vm1196 = vcmask 523264
        %v1197 = vsel %vm1196, %v1195, %v1189
        %vm1198 = vcmask 785408
        %v1199 = vsel %vm1198, %v1197, %v1193
        %v1200 = vpack.c.bf16 %v1199, %v1199
        %v1201 = vld [vmem:[%s6] sm:$0xf]
        %v1202 = vld [vmem:[%s6 + $0x4] sm:$0xf]
        %v1203 = vld [vmem:[%s6 + $0x8] sm:$0xf]
        %v1204 = vld [vmem:[%s6 + $0xc] sm:$0xf]
        %v1205 = vld [vmem:[%s6 + $0x10] sm:$0xf]
        %v1206 = vld [vmem:[%s6 + $0x14] sm:$0xf]
        %v1207 = vld [vmem:[%s6 + $0x18] sm:$0xf]
        %v1208 = vld [vmem:[%s6 + $0x1c] sm:$0xf]
        %v1209 = vld [vmem:[%s6 + $0x20] sm:$0xf]
        %v1210 = vld [vmem:[%s6 + $0x24] sm:$0xf]
        %v1211 = vld [vmem:[%s6 + $0x28] sm:$0xf]
        %v1212 = vld [vmem:[%s6 + $0x2c] sm:$0xf]
        %v1213 = vld [vmem:[%s6 + $0x30] sm:$0xf]
        %v1214 = vld [vmem:[%s6 + $0x34] sm:$0xf]
        %v1215 = vld [vmem:[%s6 + $0x38] sm:$0xf]
        %v1216 = vld [vmem:[%s6 + $0x3c] sm:$0xf]
        %v1217 = vld [vmem:[%s7] sm:$0x1]
        %v1219 = vperm.slane %v1217, 0
        %v1237 = vunpack.c.l.b16 %v1201
        %v1238 = vunpack.c.l.b16 %v1202
        %v1239 = vunpack.c.l.b16 %v1203
        %v1240 = vunpack.c.l.b16 %v1204
        %v1241 = vunpack.c.l.b16 %v1205
        %v1242 = vunpack.c.l.b16 %v1206
        %v1243 = vunpack.c.l.b16 %v1207
        %v1244 = vunpack.c.l.b16 %v1208
        %v1245 = vunpack.c.l.b16 %v1209
        %v1246 = vunpack.c.l.b16 %v1210
        %v1247 = vunpack.c.l.b16 %v1211
        %v1248 = vunpack.c.l.b16 %v1212
        %v1249 = vunpack.c.l.b16 %v1213
        %v1250 = vunpack.c.l.b16 %v1214
        %v1251 = vunpack.c.l.b16 %v1215
        %v1252 = vunpack.c.l.b16 %v1216
        %v1253 = vpack.c.b16 %v1238, %v1237
        %v1254 = vpack.c.b16 %v1240, %v1239
        %v1255 = vpack.c.b16 %v1242, %v1241
        %v1256 = vpack.c.b16 %v1244, %v1243
        %v1257 = vpack.c.b16 %v1246, %v1245
        %v1258 = vpack.c.b16 %v1248, %v1247
        %v1259 = vpack.c.b16 %v1250, %v1249
        %v1260 = vpack.c.b16 %v1252, %v1251
        %1269 = vmatpush.bf16.msra.mxu0 %v1260
        %1270 = vmatpush.bf16.msra.mxu0 %v1259
        %1271 = vmatpush.bf16.msra.mxu0 %v1258
        %1272 = vmatpush.bf16.msra.mxu0 %v1257
        %1273 = vmatpush.bf16.msra.mxu0 %v1256
        %1274 = vmatpush.bf16.msra.mxu0 %v1255
        %1275 = vmatpush.bf16.msra.mxu0 %v1254
        %1276 = vmatpush.bf16.msra.mxu0 %v1253
        %1277 = vmatmul.bf16.gmra.mxu0 %v1200
        %v1278 = vpop.f32.mrf.mxu0
        %v1279 = vadd.f32 %v1219, %v1278
        %v1280 = vpop.f32.mrf.mxu0
        %1281 = vdwg.mxu0
        %v1282 = vadd.f32 %v1279, %v743
        %v1283 = vld [vmem:[%s8] sm:$0x1]
        %v1284 = vld [vmem:[%s9] sm:$0x1]
        %1285 = vadd.xlane.f32.xlu0 %v1282
        %v1286 = vpop.xlane.xlu0 %1285
        %v1287 = vmul.f32 %v1286, %v717
        %v1288 = vsub.f32 %v1282, %v1287
        %v1289 = vmul.f32 %v1288, %v1288
        %1290 = vadd.xlane.f32.xlu0 %v1289
        %v1291 = vpop.xlane.xlu0 %1290
        %v1292 = vmul.f32 %v1291, %v717
        %v1293 = vadd.f32 %v1292, 1e-12
        %v1294 = vrsqrt.pop %v1293
        %v1295 = vmul.f32 %v1294, %v1293
        %v1296 = vmul.f32 %v1295, %v1294
        %v1297 = vmul.f32 0.5, %v1296
        %v1298 = vsub.f32 1.5, %v1297
        %v1299 = vmul.f32 %v1294, %v1298
        %vm1300 = vweird.f32 %v1293
        %vm1301 = vweird.f32 %v1294
        %vm1302 = vmor %vm1300, %vm1301
        %v1303 = vsel %vm1302, %v1294, %v1299
        %v1304 = vmul.f32 %v1288, %v1303
        %v1306 = vperm.slane %v1283, 0
        %v1308 = vmul.f32 %v1304, %v1306
        %v1310 = vperm.slane %v1284, 0
        %v1312 = vadd.f32 %v1308, %v1310
        %v1313 = vpack.c.bf16 %v1312, %v1312
        %v1314 = vld [vmem:[#allocation5] sm:$0xff]
        %v1315 = vld [vmem:[#allocation5 + $0x8] sm:$0xff]
        %v1316 = vld [vmem:[#allocation5 + $0x10] sm:$0xff]
        %v1317 = vld [vmem:[#allocation5 + $0x18] sm:$0xff]
        %v1318 = vld [vmem:[#allocation5 + $0x20] sm:$0xff]
        %v1319 = vld [vmem:[#allocation5 + $0x28] sm:$0xff]
        %v1320 = vld [vmem:[#allocation5 + $0x30] sm:$0xff]
        %v1321 = vld [vmem:[#allocation5 + $0x38] sm:$0xff]
        %v1322 = vld [vmem:[#allocation5 + $0x40] sm:$0xff]
        %v1323 = vld [vmem:[#allocation5 + $0x48] sm:$0xff]
        %v1324 = vld [vmem:[#allocation5 + $0x50] sm:$0xff]
        %v1325 = vld [vmem:[#allocation5 + $0x58] sm:$0xff]
        %v1326 = vld [vmem:[#allocation5 + $0x60] sm:$0xff]
        %v1327 = vld [vmem:[#allocation5 + $0x68] sm:$0xff]
        %v1328 = vld [vmem:[#allocation5 + $0x70] sm:$0xff]
        %v1329 = vld [vmem:[#allocation5 + $0x78] sm:$0xff]
        %v1330 = vld [vmem:[%s11] sm:$0x3]
        %v1332 = vperm.slane %v1330, 0
        %v1333 = vperm.slane %v1330, 1
        %v1352 = vunpack.c.l.b16 %v1314
        %v1353 = vunpack.c.h.b16 %v1314
        %v1354 = vunpack.c.l.b16 %v1315
        %v1355 = vunpack.c.h.b16 %v1315
        %v1356 = vunpack.c.l.b16 %v1316
        %v1357 = vunpack.c.h.b16 %v1316
        %v1358 = vunpack.c.l.b16 %v1317
        %v1359 = vunpack.c.h.b16 %v1317
        %v1360 = vunpack.c.l.b16 %v1318
        %v1361 = vunpack.c.h.b16 %v1318
        %v1362 = vunpack.c.l.b16 %v1319
        %v1363 = vunpack.c.h.b16 %v1319
        %v1364 = vunpack.c.l.b16 %v1320
        %v1365 = vunpack.c.h.b16 %v1320
        %v1366 = vunpack.c.l.b16 %v1321
        %v1367 = vunpack.c.h.b16 %v1321
        %v1368 = vunpack.c.l.b16 %v1322
        %v1369 = vunpack.c.h.b16 %v1322
        %v1370 = vunpack.c.l.b16 %v1323
        %v1371 = vunpack.c.h.b16 %v1323
        %v1372 = vunpack.c.l.b16 %v1324
        %v1373 = vunpack.c.h.b16 %v1324
        %v1374 = vunpack.c.l.b16 %v1325
        %v1375 = vunpack.c.h.b16 %v1325
        %v1376 = vunpack.c.l.b16 %v1326
        %v1377 = vunpack.c.h.b16 %v1326
        %v1378 = vunpack.c.l.b16 %v1327
        %v1379 = vunpack.c.h.b16 %v1327
        %v1380 = vunpack.c.l.b16 %v1328
        %v1381 = vunpack.c.h.b16 %v1328
        %v1382 = vunpack.c.l.b16 %v1329
        %v1383 = vunpack.c.h.b16 %v1329
        %v1384 = vpack.c.b16 %v1354, %v1352
        %v1385 = vpack.c.b16 %v1355, %v1353
        %v1386 = vpack.c.b16 %v1358, %v1356
        %v1387 = vpack.c.b16 %v1359, %v1357
        %v1388 = vpack.c.b16 %v1362, %v1360
        %v1389 = vpack.c.b16 %v1363, %v1361
        %v1390 = vpack.c.b16 %v1366, %v1364
        %v1391 = vpack.c.b16 %v1367, %v1365
        %v1392 = vpack.c.b16 %v1370, %v1368
        %v1393 = vpack.c.b16 %v1371, %v1369
        %v1394 = vpack.c.b16 %v1374, %v1372
        %v1395 = vpack.c.b16 %v1375, %v1373
        %v1396 = vpack.c.b16 %v1378, %v1376
        %v1397 = vpack.c.b16 %v1379, %v1377
        %v1398 = vpack.c.b16 %v1382, %v1380
        %v1399 = vpack.c.b16 %v1383, %v1381
        %1416 = vmatpush.bf16.msra.mxu0 %v1398
        %1417 = vmatpush.bf16.msra.mxu0 %v1396
        %1418 = vmatpush.bf16.msra.mxu0 %v1394
        %1419 = vmatpush.bf16.msra.mxu0 %v1392
        %1420 = vmatpush.bf16.msra.mxu0 %v1390
        %1421 = vmatpush.bf16.msra.mxu0 %v1388
        %1422 = vmatpush.bf16.msra.mxu0 %v1386
        %1423 = vmatpush.bf16.msra.mxu0 %v1384
        %1424 = vmatmul.bf16.gmra.mxu0 %v1313
        %v1425 = vpop.f32.mrf.mxu0
        %v1426 = vadd.f32 %v1332, %v1425
        %v1427 = vpop.f32.mrf.mxu0
        %1428 = vdwg.mxu0
        %1429 = vmatpush.bf16.msra.mxu0 %v1399
        %1430 = vmatpush.bf16.msra.mxu0 %v1397
        %1431 = vmatpush.bf16.msra.mxu0 %v1395
        %1432 = vmatpush.bf16.msra.mxu0 %v1393
        %1433 = vmatpush.bf16.msra.mxu0 %v1391
        %1434 = vmatpush.bf16.msra.mxu0 %v1389
        %1435 = vmatpush.bf16.msra.mxu0 %v1387
        %1436 = vmatpush.bf16.msra.mxu0 %v1385
        %1437 = vmatmul.bf16.gmra.mxu0 %v1313
        %v1438 = vpop.f32.mrf.mxu0
        %v1439 = vadd.f32 %v1333, %v1438
        %v1440 = vpop.f32.mrf.mxu0
        %1441 = vdwg.mxu0
        %v1442 = vmul.f32 %v1426, 0.5
        %v1443 = vmul.f32 %v1439, 0.5
        %v1444 = vmul.f32 %v1426, 0.044715
        %v1445 = vmul.f32 %v1439, 0.044715
        %v1446 = vmul.f32 %v1444, %v1426
        %v1447 = vmul.f32 %v1445, %v1439
        %v1448 = vmul.f32 %v1446, %v1426
        %v1449 = vmul.f32 %v1447, %v1439
        %v1450 = vadd.f32 %v1426, %v1448
        %v1451 = vadd.f32 %v1439, %v1449
        %v1452 = vmul.f32 %v1450, 0.7978846
        %v1453 = vmul.f32 %v1451, 0.7978846
        %v1454 = vtanh.pop %v1452
        %v1455 = vtanh.pop %v1453
        %v1456 = vadd.f32 %v1454, 1.0
        %v1457 = vadd.f32 %v1455, 1.0
        %v1458 = vmul.f32 %v1442, %v1456
        %v1459 = vmul.f32 %v1443, %v1457
        %v1460 = vpack.c.bf16 %v1458, %v1458
        %v1461 = vpack.c.bf16 %v1459, %v1459
        %v1462 = vld [vmem:[#allocation7] sm:$0xf]
        %v1463 = vld [vmem:[#allocation7 + $0x4] sm:$0xf]
        %v1464 = vld [vmem:[#allocation7 + $0x8] sm:$0xf]
        %v1465 = vld [vmem:[#allocation7 + $0xc] sm:$0xf]
        %v1466 = vld [vmem:[#allocation7 + $0x10] sm:$0xf]
        %v1467 = vld [vmem:[#allocation7 + $0x14] sm:$0xf]
        %v1468 = vld [vmem:[#allocation7 + $0x18] sm:$0xf]
        %v1469 = vld [vmem:[#allocation7 + $0x1c] sm:$0xf]
        %v1470 = vld [vmem:[#allocation7 + $0x20] sm:$0xf]
        %v1471 = vld [vmem:[#allocation7 + $0x24] sm:$0xf]
        %v1472 = vld [vmem:[#allocation7 + $0x28] sm:$0xf]
        %v1473 = vld [vmem:[#allocation7 + $0x2c] sm:$0xf]
        %v1474 = vld [vmem:[#allocation7 + $0x30] sm:$0xf]
        %v1475 = vld [vmem:[#allocation7 + $0x34] sm:$0xf]
        %v1476 = vld [vmem:[#allocation7 + $0x38] sm:$0xf]
        %v1477 = vld [vmem:[#allocation7 + $0x3c] sm:$0xf]
        %v1478 = vld [vmem:[#allocation7 + $0x40] sm:$0xf]
        %v1479 = vld [vmem:[#allocation7 + $0x44] sm:$0xf]
        %v1480 = vld [vmem:[#allocation7 + $0x48] sm:$0xf]
        %v1481 = vld [vmem:[#allocation7 + $0x4c] sm:$0xf]
        %v1482 = vld [vmem:[#allocation7 + $0x50] sm:$0xf]
        %v1483 = vld [vmem:[#allocation7 + $0x54] sm:$0xf]
        %v1484 = vld [vmem:[#allocation7 + $0x58] sm:$0xf]
        %v1485 = vld [vmem:[#allocation7 + $0x5c] sm:$0xf]
        %v1486 = vld [vmem:[#allocation7 + $0x60] sm:$0xf]
        %v1487 = vld [vmem:[#allocation7 + $0x64] sm:$0xf]
        %v1488 = vld [vmem:[#allocation7 + $0x68] sm:$0xf]
        %v1489 = vld [vmem:[#allocation7 + $0x6c] sm:$0xf]
        %v1490 = vld [vmem:[#allocation7 + $0x70] sm:$0xf]
        %v1491 = vld [vmem:[#allocation7 + $0x74] sm:$0xf]
        %v1492 = vld [vmem:[#allocation7 + $0x78] sm:$0xf]
        %v1493 = vld [vmem:[#allocation7 + $0x7c] sm:$0xf]
        %v1494 = vld [vmem:[%s13] sm:$0x1]
        %v1496 = vperm.slane %v1494, 0
        %v1530 = vunpack.c.l.b16 %v1462
        %v1531 = vunpack.c.l.b16 %v1463
        %v1532 = vunpack.c.l.b16 %v1464
        %v1533 = vunpack.c.l.b16 %v1465
        %v1534 = vunpack.c.l.b16 %v1466
        %v1535 = vunpack.c.l.b16 %v1467
        %v1536 = vunpack.c.l.b16 %v1468
        %v1537 = vunpack.c.l.b16 %v1469
        %v1538 = vunpack.c.l.b16 %v1470
        %v1539 = vunpack.c.l.b16 %v1471
        %v1540 = vunpack.c.l.b16 %v1472
        %v1541 = vunpack.c.l.b16 %v1473
        %v1542 = vunpack.c.l.b16 %v1474
        %v1543 = vunpack.c.l.b16 %v1475
        %v1544 = vunpack.c.l.b16 %v1476
        %v1545 = vunpack.c.l.b16 %v1477
        %v1546 = vunpack.c.l.b16 %v1478
        %v1547 = vunpack.c.l.b16 %v1479
        %v1548 = vunpack.c.l.b16 %v1480
        %v1549 = vunpack.c.l.b16 %v1481
        %v1550 = vunpack.c.l.b16 %v1482
        %v1551 = vunpack.c.l.b16 %v1483
        %v1552 = vunpack.c.l.b16 %v1484
        %v1553 = vunpack.c.l.b16 %v1485
        %v1554 = vunpack.c.l.b16 %v1486
        %v1555 = vunpack.c.l.b16 %v1487
        %v1556 = vunpack.c.l.b16 %v1488
        %v1557 = vunpack.c.l.b16 %v1489
        %v1558 = vunpack.c.l.b16 %v1490
        %v1559 = vunpack.c.l.b16 %v1491
        %v1560 = vunpack.c.l.b16 %v1492
        %v1561 = vunpack.c.l.b16 %v1493
        %v1562 = vpack.c.b16 %v1531, %v1530
        %v1563 = vpack.c.b16 %v1533, %v1532
        %v1564 = vpack.c.b16 %v1535, %v1534
        %v1565 = vpack.c.b16 %v1537, %v1536
        %v1566 = vpack.c.b16 %v1539, %v1538
        %v1567 = vpack.c.b16 %v1541, %v1540
        %v1568 = vpack.c.b16 %v1543, %v1542
        %v1569 = vpack.c.b16 %v1545, %v1544
        %v1570 = vpack.c.b16 %v1547, %v1546
        %v1571 = vpack.c.b16 %v1549, %v1548
        %v1572 = vpack.c.b16 %v1551, %v1550
        %v1573 = vpack.c.b16 %v1553, %v1552
        %v1574 = vpack.c.b16 %v1555, %v1554
        %v1575 = vpack.c.b16 %v1557, %v1556
        %v1576 = vpack.c.b16 %v1559, %v1558
        %v1577 = vpack.c.b16 %v1561, %v1560
        %1594 = vmatpush.bf16.msra.mxu0 %v1569
        %1595 = vmatpush.bf16.msra.mxu0 %v1568
        %1596 = vmatpush.bf16.msra.mxu0 %v1567
        %1597 = vmatpush.bf16.msra.mxu0 %v1566
        %1598 = vmatpush.bf16.msra.mxu0 %v1565
        %1599 = vmatpush.bf16.msra.mxu0 %v1564
        %1600 = vmatpush.bf16.msra.mxu0 %v1563
        %1601 = vmatpush.bf16.msra.mxu0 %v1562
        %1602 = vmatmul.bf16.gmra.mxu0 %v1460
        %v1603 = vpop.f32.mrf.mxu0
        %v1604 = vadd.f32 %v1496, %v1603
        %v1605 = vpop.f32.mrf.mxu0
        %1606 = vdwg.mxu0
        %1607 = vmatpush.bf16.msra.mxu0 %v1577
        %1608 = vmatpush.bf16.msra.mxu0 %v1576
        %1609 = vmatpush.bf16.msra.mxu0 %v1575
        %1610 = vmatpush.bf16.msra.mxu0 %v1574
        %1611 = vmatpush.bf16.msra.mxu0 %v1573
        %1612 = vmatpush.bf16.msra.mxu0 %v1572
        %1613 = vmatpush.bf16.msra.mxu0 %v1571
        %1614 = vmatpush.bf16.msra.mxu0 %v1570
        %1615 = vmatmul.bf16.gmra.mxu0 %v1461
        %v1616 = vpop.f32.mrf.mxu0
        %v1617 = vadd.f32 %v1604, %v1616
        %v1618 = vpop.f32.mrf.mxu0
        %1619 = vdwg.mxu0
        %v1620 = vadd.f32 %v1617, %v1312
        %v1621 = vld [vmem:[%s14] sm:$0x1]
        %v1622 = vld [vmem:[%s15] sm:$0x1]
        %1623 = vadd.xlane.f32.xlu0 %v1620
        %v1624 = vpop.xlane.xlu0 %1623
        %v1625 = vmul.f32 %v1624, %v717
        %v1626 = vsub.f32 %v1620, %v1625
        %v1627 = vmul.f32 %v1626, %v1626
        %1628 = vadd.xlane.f32.xlu0 %v1627
        %v1629 = vpop.xlane.xlu0 %1628
        %v1630 = vmul.f32 %v1629, %v717
        %v1631 = vadd.f32 %v1630, 1e-12
        %v1632 = vrsqrt.pop %v1631
        %v1633 = vmul.f32 %v1632, %v1631
        %v1634 = vmul.f32 %v1633, %v1632
        %v1635 = vmul.f32 0.5, %v1634
        %v1636 = vsub.f32 1.5, %v1635
        %v1637 = vmul.f32 %v1632, %v1636
        %vm1638 = vweird.f32 %v1631
        %vm1639 = vweird.f32 %v1632
        %vm1640 = vmor %vm1638, %vm1639
        %v1641 = vsel %vm1640, %v1632, %v1637
        %v1642 = vmul.f32 %v1626, %v1641
        %v1644 = vperm.slane %v1621, 0
        %v1646 = vmul.f32 %v1642, %v1644
        %v1648 = vperm.slane %v1622, 0
        %v1650 = vadd.f32 %v1646, %v1648
        %v1651 = vpack.c.bf16 %v1650, %v1650
        %s1652 = scalar_lea.vmem [#allocation2], 192
        %v1653 = vld [vmem:[%s1652] sm:$0xff]
        %v1654 = vld [vmem:[%s1652 + $0x8] sm:$0xf]
        %v1655 = vld [vmem:[%s1652 + $0xc] sm:$0xff]
        %v1656 = vld [vmem:[%s1652 + $0x14] sm:$0xf]
        %v1657 = vld [vmem:[%s1652 + $0x18] sm:$0xff]
        %v1658 = vld [vmem:[%s1652 + $0x20] sm:$0xf]
        %v1659 = vld [vmem:[%s1652 + $0x24] sm:$0xff]
        %v1660 = vld [vmem:[%s1652 + $0x2c] sm:$0xf]
        %v1661 = vld [vmem:[%s1652 + $0x30] sm:$0xff]
        %v1662 = vld [vmem:[%s1652 + $0x38] sm:$0xf]
        %v1663 = vld [vmem:[%s1652 + $0x3c] sm:$0xff]
        %v1664 = vld [vmem:[%s1652 + $0x44] sm:$0xf]
        %v1665 = vld [vmem:[%s1652 + $0x48] sm:$0xff]
        %v1666 = vld [vmem:[%s1652 + $0x50] sm:$0xf]
        %v1667 = vld [vmem:[%s1652 + $0x54] sm:$0xff]
        %v1668 = vld [vmem:[%s1652 + $0x5c] sm:$0xf]
        %v1669 = vld [vmem:[%s1652 + $0x60] sm:$0xff]
        %v1670 = vld [vmem:[%s1652 + $0x68] sm:$0xf]
        %v1671 = vld [vmem:[%s1652 + $0x6c] sm:$0xff]
        %v1672 = vld [vmem:[%s1652 + $0x74] sm:$0xf]
        %v1673 = vld [vmem:[%s1652 + $0x78] sm:$0xff]
        %v1674 = vld [vmem:[%s1652 + $0x80] sm:$0xf]
        %v1675 = vld [vmem:[%s1652 + $0x84] sm:$0xff]
        %v1676 = vld [vmem:[%s1652 + $0x8c] sm:$0xf]
        %v1677 = vld [vmem:[%s1652 + $0x90] sm:$0xff]
        %v1678 = vld [vmem:[%s1652 + $0x98] sm:$0xf]
        %v1679 = vld [vmem:[%s1652 + $0x9c] sm:$0xff]
        %v1680 = vld [vmem:[%s1652 + $0xa4] sm:$0xf]
        %v1681 = vld [vmem:[%s1652 + $0xa8] sm:$0xff]
        %v1682 = vld [vmem:[%s1652 + $0xb0] sm:$0xf]
        %v1683 = vld [vmem:[%s1652 + $0xb4] sm:$0xff]
        %v1684 = vld [vmem:[%s1652 + $0xbc] sm:$0xf]
        %s1685 = scalar_lea.vmem %s5, 3
        %v1686 = vld [vmem:[%s1685] sm:$0x7]
        %v1688 = vperm.slane %v1686, 0
        %v1689 = vperm.slane %v1686, 1
        %v1690 = vperm.slane %v1686, 2
        %v1726 = vunpack.c.l.b16 %v1653
        %v1727 = vunpack.c.h.b16 %v1653
        %v1728 = vunpack.c.l.b16 %v1654
        %v1729 = vunpack.c.l.b16 %v1655
        %v1730 = vunpack.c.h.b16 %v1655
        %v1731 = vunpack.c.l.b16 %v1656
        %v1732 = vunpack.c.l.b16 %v1657
        %v1733 = vunpack.c.h.b16 %v1657
        %v1734 = vunpack.c.l.b16 %v1658
        %v1735 = vunpack.c.l.b16 %v1659
        %v1736 = vunpack.c.h.b16 %v1659
        %v1737 = vunpack.c.l.b16 %v1660
        %v1738 = vunpack.c.l.b16 %v1661
        %v1739 = vunpack.c.h.b16 %v1661
        %v1740 = vunpack.c.l.b16 %v1662
        %v1741 = vunpack.c.l.b16 %v1663
        %v1742 = vunpack.c.h.b16 %v1663
        %v1743 = vunpack.c.l.b16 %v1664
        %v1744 = vunpack.c.l.b16 %v1665
        %v1745 = vunpack.c.h.b16 %v1665
        %v1746 = vunpack.c.l.b16 %v1666
        %v1747 = vunpack.c.l.b16 %v1667
        %v1748 = vunpack.c.h.b16 %v1667
        %v1749 = vunpack.c.l.b16 %v1668
        %v1750 = vunpack.c.l.b16 %v1669
        %v1751 = vunpack.c.h.b16 %v1669
        %v1752 = vunpack.c.l.b16 %v1670
        %v1753 = vunpack.c.l.b16 %v1671
        %v1754 = vunpack.c.h.b16 %v1671
        %v1755 = vunpack.c.l.b16 %v1672
        %v1756 = vunpack.c.l.b16 %v1673
        %v1757 = vunpack.c.h.b16 %v1673
        %v1758 = vunpack.c.l.b16 %v1674
        %v1759 = vunpack.c.l.b16 %v1675
        %v1760 = vunpack.c.h.b16 %v1675
        %v1761 = vunpack.c.l.b16 %v1676
        %v1762 = vunpack.c.l.b16 %v1677
        %v1763 = vunpack.c.h.b16 %v1677
        %v1764 = vunpack.c.l.b16 %v1678
        %v1765 = vunpack.c.l.b16 %v1679
        %v1766 = vunpack.c.h.b16 %v1679
        %v1767 = vunpack.c.l.b16 %v1680
        %v1768 = vunpack.c.l.b16 %v1681
        %v1769 = vunpack.c.h.b16 %v1681
        %v1770 = vunpack.c.l.b16 %v1682
        %v1771 = vunpack.c.l.b16 %v1683
        %v1772 = vunpack.c.h.b16 %v1683
        %v1773 = vunpack.c.l.b16 %v1684
        %v1774 = vpack.c.b16 %v1729, %v1726
        %v1775 = vpack.c.b16 %v1730, %v1727
        %v1776 = vpack.c.b16 %v1731, %v1728
        %v1777 = vpack.c.b16 %v1735, %v1732
        %v1778 = vpack.c.b16 %v1736, %v1733
        %v1779 = vpack.c.b16 %v1737, %v1734
        %v1780 = vpack.c.b16 %v1741, %v1738
        %v1781 = vpack.c.b16 %v1742, %v1739
        %v1782 = vpack.c.b16 %v1743, %v1740
        %v1783 = vpack.c.b16 %v1747, %v1744
        %v1784 = vpack.c.b16 %v1748, %v1745
        %v1785 = vpack.c.b16 %v1749, %v1746
        %v1786 = vpack.c.b16 %v1753, %v1750
        %v1787 = vpack.c.b16 %v1754, %v1751
        %v1788 = vpack.c.b16 %v1755, %v1752
        %v1789 = vpack.c.b16 %v1759, %v1756
        %v1790 = vpack.c.b16 %v1760, %v1757
        %v1791 = vpack.c.b16 %v1761, %v1758
        %v1792 = vpack.c.b16 %v1765, %v1762
        %v1793 = vpack.c.b16 %v1766, %v1763
        %v1794 = vpack.c.b16 %v1767, %v1764
        %v1795 = vpack.c.b16 %v1771, %v1768
        %v1796 = vpack.c.b16 %v1772, %v1769
        %v1797 = vpack.c.b16 %v1773, %v1770
        %1822 = vmatpush.bf16.msra.mxu0 %v1795
        %1823 = vmatpush.bf16.msra.mxu0 %v1792
        %1824 = vmatpush.bf16.msra.mxu0 %v1789
        %1825 = vmatpush.bf16.msra.mxu0 %v1786
        %1826 = vmatpush.bf16.msra.mxu0 %v1783
        %1827 = vmatpush.bf16.msra.mxu0 %v1780
        %1828 = vmatpush.bf16.msra.mxu0 %v1777
        %1829 = vmatpush.bf16.msra.mxu0 %v1774
        %1830 = vmatmul.bf16.gmra.mxu0 %v1651
        %v1831 = vpop.f32.mrf.mxu0
        %v1832 = vadd.f32 %v1688, %v1831
        %v1833 = vpop.f32.mrf.mxu0
        %1834 = vdwg.mxu0
        %1835 = vmatpush.bf16.msra.mxu0 %v1796
        %1836 = vmatpush.bf16.msra.mxu0 %v1793
        %1837 = vmatpush.bf16.msra.mxu0 %v1790
        %1838 = vmatpush.bf16.msra.mxu0 %v1787
        %1839 = vmatpush.bf16.msra.mxu0 %v1784
        %1840 = vmatpush.bf16.msra.mxu0 %v1781
        %1841 = vmatpush.bf16.msra.mxu0 %v1778
        %1842 = vmatpush.bf16.msra.mxu0 %v1775
        %1843 = vmatmul.bf16.gmra.mxu0 %v1651
        %v1844 = vpop.f32.mrf.mxu0
        %v1845 = vadd.f32 %v1689, %v1844
        %v1846 = vpop.f32.mrf.mxu0
        %1847 = vdwg.mxu0
        %1848 = vmatpush.bf16.msra.mxu0 %v1797
        %1849 = vmatpush.bf16.msra.mxu0 %v1794
        %1850 = vmatpush.bf16.msra.mxu0 %v1791
        %1851 = vmatpush.bf16.msra.mxu0 %v1788
        %1852 = vmatpush.bf16.msra.mxu0 %v1785
        %1853 = vmatpush.bf16.msra.mxu0 %v1782
        %1854 = vmatpush.bf16.msra.mxu0 %v1779
        %1855 = vmatpush.bf16.msra.mxu0 %v1776
        %1856 = vmatmul.bf16.gmra.mxu0 %v1651
        %v1857 = vpop.f32.mrf.mxu0
        %v1858 = vadd.f32 %v1690, %v1857
        %v1859 = vpop.f32.mrf.mxu0
        %1860 = vdwg.mxu0
        %v1861 = vpack.c.bf16 %v1832, %v1832
        %v1862 = vpack.c.bf16 %v1845, %v1845
        %v1864 = vsel %vm958, %v1861, 0
        %v1867 = vsel %vm958, %v1862, 0
        %1869 = vmatpush.bf16.xpose.msra.mxu0 0
        %1870 = vmatpush.bf16.xpose.msra.mxu0 0
        %1871 = vmatpush.bf16.xpose.msra.mxu0 0
        %1872 = vmatpush.bf16.xpose.msra.mxu0 0
        %1873 = vmatpush.bf16.xpose.msra.mxu0 0
        %1874 = vmatpush.bf16.xpose.msra.mxu0 0
        %1875 = vmatpush.bf16.xpose.msra.mxu0 0
        %1876 = vmatpush.bf16.xpose.msra.mxu0 %v1867
        %1877 = vmatmul.bf16.gmra.mxu0 %v1864
        %v1878 = vpop.f32.mrf.mxu0
        %v1879 = vadd.f32 %v956, %v1878
        %v1880 = vpop.f32.mrf.mxu0
        %1881 = vdwg.mxu0
        %v1882 = vsel %vm978, %v1879, -inf
        %1883 = vmax.xlane.f32.xlu0 %v1882
        %v1884 = vpop.xlane.xlu0 %1883
        %v1885 = vsub.f32 %v1879, %v1884
        %v1886 = vmul.f32 %v1885, 1.442695
        %v1887 = vpow.pop %v1886
        %v1888 = vsel %vm978, %v1887, 0.0
        %1889 = vadd.xlane.f32.xlu0 %v1888
        %v1890 = vpop.xlane.xlu0 %1889
        %v1891 = vrcp.pop %v1890
        %v1892 = vmul.f32 %v1887, %v1891
        %v1893 = vpack.c.bf16 %v1892, %v1892
        %v1894 = vpack.c.bf16 %v1858, %v1858
        %v1896 = vsel %vm978, %v1893, 0
        %v1899 = vsel %vm995, %v1894, 0
        %1901 = vmatpush.bf16.msra.mxu0 0
        %1902 = vmatpush.bf16.msra.mxu0 0
        %1903 = vmatpush.bf16.msra.mxu0 0
        %1904 = vmatpush.bf16.msra.mxu0 0
        %1905 = vmatpush.bf16.msra.mxu0 0
        %1906 = vmatpush.bf16.msra.mxu0 0
        %1907 = vmatpush.bf16.msra.mxu0 0
        %1908 = vmatpush.bf16.msra.mxu0 %v1899
        %1909 = vmatmul.bf16.gmra.mxu0 %v1896
        %v1910 = vpop.f32.mrf.mxu0
        %v1911 = vadd.f32 0.0, %v1910
        %v1912 = vpop.f32.mrf.mxu0
        %1913 = vdwg.mxu0
        %1915 = vrot.lane.b32.xlu0 %v1861, 96
        %v1916 = vpop.permute.xlu0 %1915
        %1918 = vrot.lane.b32.xlu0 %v1862, 96
        %v1919 = vpop.permute.xlu0 %1918
        %v1921 = vsel %vm958, %v1916, 0
        %v1924 = vsel %vm958, %v1919, 0
        %1926 = vmatpush.bf16.xpose.msra.mxu0 0
        %1927 = vmatpush.bf16.xpose.msra.mxu0 0
        %1928 = vmatpush.bf16.xpose.msra.mxu0 0
        %1929 = vmatpush.bf16.xpose.msra.mxu0 0
        %1930 = vmatpush.bf16.xpose.msra.mxu0 0
        %1931 = vmatpush.bf16.xpose.msra.mxu0 0
        %1932 = vmatpush.bf16.xpose.msra.mxu0 0
        %1933 = vmatpush.bf16.xpose.msra.mxu0 %v1924
        %1934 = vmatmul.bf16.gmra.mxu0 %v1921
        %v1935 = vpop.f32.mrf.mxu0
        %v1936 = vadd.f32 %v956, %v1935
        %v1937 = vpop.f32.mrf.mxu0
        %1938 = vdwg.mxu0
        %v1939 = vsel %vm978, %v1936, -inf
        %1940 = vmax.xlane.f32.xlu0 %v1939
        %v1941 = vpop.xlane.xlu0 %1940
        %v1942 = vsub.f32 %v1936, %v1941
        %v1943 = vmul.f32 %v1942, 1.442695
        %v1944 = vpow.pop %v1943
        %v1945 = vsel %vm978, %v1944, 0.0
        %1946 = vadd.xlane.f32.xlu0 %v1945
        %v1947 = vpop.xlane.xlu0 %1946
        %v1948 = vrcp.pop %v1947
        %v1949 = vmul.f32 %v1944, %v1948
        %v1950 = vpack.c.bf16 %v1949, %v1949
        %1952 = vrot.lane.b32.xlu0 %v1894, 96
        %v1953 = vpop.permute.xlu0 %1952
        %v1955 = vsel %vm978, %v1950, 0
        %v1958 = vsel %vm995, %v1953, 0
        %1960 = vmatpush.bf16.msra.mxu0 0
        %1961 = vmatpush.bf16.msra.mxu0 0
        %1962 = vmatpush.bf16.msra.mxu0 0
        %1963 = vmatpush.bf16.msra.mxu0 0
        %1964 = vmatpush.bf16.msra.mxu0 0
        %1965 = vmatpush.bf16.msra.mxu0 0
        %1966 = vmatpush.bf16.msra.mxu0 0
        %1967 = vmatpush.bf16.msra.mxu0 %v1958
        %1968 = vmatmul.bf16.gmra.mxu0 %v1955
        %v1969 = vpop.f32.mrf.mxu0
        %v1970 = vadd.f32 0.0, %v1969
        %v1971 = vpop.f32.mrf.mxu0
        %1972 = vdwg.mxu0
        %1973 = vrot.lane.b32.xlu0 %v1861, 64
        %v1974 = vpop.permute.xlu0 %1973
        %1975 = vrot.lane.b32.xlu0 %v1862, 64
        %v1976 = vpop.permute.xlu0 %1975
        %v1978 = vsel %vm958, %v1974, 0
        %v1981 = vsel %vm958, %v1976, 0
        %1983 = vmatpush.bf16.xpose.msra.mxu0 0
        %1984 = vmatpush.bf16.xpose.msra.mxu0 0
        %1985 = vmatpush.bf16.xpose.msra.mxu0 0
        %1986 = vmatpush.bf16.xpose.msra.mxu0 0
        %1987 = vmatpush.bf16.xpose.msra.mxu0 0
        %1988 = vmatpush.bf16.xpose.msra.mxu0 0
        %1989 = vmatpush.bf16.xpose.msra.mxu0 0
        %1990 = vmatpush.bf16.xpose.msra.mxu0 %v1981
        %1991 = vmatmul.bf16.gmra.mxu0 %v1978
        %v1992 = vpop.f32.mrf.mxu0
        %v1993 = vadd.f32 %v956, %v1992
        %v1994 = vpop.f32.mrf.mxu0
        %1995 = vdwg.mxu0
        %v1996 = vsel %vm978, %v1993, -inf
        %1997 = vmax.xlane.f32.xlu0 %v1996
        %v1998 = vpop.xlane.xlu0 %1997
        %v1999 = vsub.f32 %v1993, %v1998
        %v2000 = vmul.f32 %v1999, 1.442695
        %v2001 = vpow.pop %v2000
        %v2002 = vsel %vm978, %v2001, 0.0
        %2003 = vadd.xlane.f32.xlu0 %v2002
        %v2004 = vpop.xlane.xlu0 %2003
        %v2005 = vrcp.pop %v2004
        %v2006 = vmul.f32 %v2001, %v2005
        %v2007 = vpack.c.bf16 %v2006, %v2006
        %2008 = vrot.lane.b32.xlu0 %v1894, 64
        %v2009 = vpop.permute.xlu0 %2008
        %v2011 = vsel %vm978, %v2007, 0
        %v2014 = vsel %vm995, %v2009, 0
        %2016 = vmatpush.bf16.msra.mxu0 0
        %2017 = vmatpush.bf16.msra.mxu0 0
        %2018 = vmatpush.bf16.msra.mxu0 0
        %2019 = vmatpush.bf16.msra.mxu0 0
        %2020 = vmatpush.bf16.msra.mxu0 0
        %2021 = vmatpush.bf16.msra.mxu0 0
        %2022 = vmatpush.bf16.msra.mxu0 0
        %2023 = vmatpush.bf16.msra.mxu0 %v2014
        %2024 = vmatmul.bf16.gmra.mxu0 %v2011
        %v2025 = vpop.f32.mrf.mxu0
        %v2026 = vadd.f32 0.0, %v2025
        %v2027 = vpop.f32.mrf.mxu0
        %2028 = vdwg.mxu0
        %2029 = vrot.lane.b32.xlu0 %v1861, 32
        %v2030 = vpop.permute.xlu0 %2029
        %2031 = vrot.lane.b32.xlu0 %v1862, 32
        %v2032 = vpop.permute.xlu0 %2031
        %v2034 = vsel %vm958, %v2030, 0
        %v2037 = vsel %vm958, %v2032, 0
        %2039 = vmatpush.bf16.xpose.msra.mxu0 0
        %2040 = vmatpush.bf16.xpose.msra.mxu0 0
        %2041 = vmatpush.bf16.xpose.msra.mxu0 0
        %2042 = vmatpush.bf16.xpose.msra.mxu0 0
        %2043 = vmatpush.bf16.xpose.msra.mxu0 0
        %2044 = vmatpush.bf16.xpose.msra.mxu0 0
        %2045 = vmatpush.bf16.xpose.msra.mxu0 0
        %2046 = vmatpush.bf16.xpose.msra.mxu0 %v2037
        %2047 = vmatmul.bf16.gmra.mxu0 %v2034
        %v2048 = vpop.f32.mrf.mxu0
        %v2049 = vadd.f32 %v956, %v2048
        %v2050 = vpop.f32.mrf.mxu0
        %2051 = vdwg.mxu0
        %v2052 = vsel %vm978, %v2049, -inf
        %2053 = vmax.xlane.f32.xlu0 %v2052
        %v2054 = vpop.xlane.xlu0 %2053
        %v2055 = vsub.f32 %v2049, %v2054
        %v2056 = vmul.f32 %v2055, 1.442695
        %v2057 = vpow.pop %v2056
        %v2058 = vsel %vm978, %v2057, 0.0
        %2059 = vadd.xlane.f32.xlu0 %v2058
        %v2060 = vpop.xlane.xlu0 %2059
        %v2061 = vrcp.pop %v2060
        %v2062 = vmul.f32 %v2057, %v2061
        %v2063 = vpack.c.bf16 %v2062, %v2062
        %2064 = vrot.lane.b32.xlu0 %v1894, 32
        %v2065 = vpop.permute.xlu0 %2064
        %v2067 = vsel %vm978, %v2063, 0
        %v2070 = vsel %vm995, %v2065, 0
        %2072 = vmatpush.bf16.msra.mxu0 0
        %2073 = vmatpush.bf16.msra.mxu0 0
        %2074 = vmatpush.bf16.msra.mxu0 0
        %2075 = vmatpush.bf16.msra.mxu0 0
        %2076 = vmatpush.bf16.msra.mxu0 0
        %2077 = vmatpush.bf16.msra.mxu0 0
        %2078 = vmatpush.bf16.msra.mxu0 0
        %2079 = vmatpush.bf16.msra.mxu0 %v2070
        %2080 = vmatmul.bf16.gmra.mxu0 %v2067
        %v2081 = vpop.f32.mrf.mxu0
        %v2082 = vadd.f32 0.0, %v2081
        %v2083 = vpop.f32.mrf.mxu0
        %2084 = vdwg.mxu0
        %2086 = vrot.lane.b32.xlu0 %v1970, 32
        %v2087 = vpop.permute.xlu0 %2086
        %2090 = vrot.lane.b32.xlu0 %v2026, 64
        %v2091 = vpop.permute.xlu0 %2090
        %2094 = vrot.lane.b32.xlu0 %v2082, 96
        %v2095 = vpop.permute.xlu0 %2094
        %v2097 = vsel %vm958, %v1911, %v2087
        %v2098 = vsel %vm1196, %v2097, %v2091
        %v2099 = vsel %vm1198, %v2098, %v2095
        %v2100 = vpack.c.bf16 %v2099, %v2099
        %s2101 = scalar_lea.vmem %s6, 64
        %v2102 = vld [vmem:[%s2101] sm:$0xf]
        %v2103 = vld [vmem:[%s2101 + $0x4] sm:$0xf]
        %v2104 = vld [vmem:[%s2101 + $0x8] sm:$0xf]
        %v2105 = vld [vmem:[%s2101 + $0xc] sm:$0xf]
        %v2106 = vld [vmem:[%s2101 + $0x10] sm:$0xf]
        %v2107 = vld [vmem:[%s2101 + $0x14] sm:$0xf]
        %v2108 = vld [vmem:[%s2101 + $0x18] sm:$0xf]
        %v2109 = vld [vmem:[%s2101 + $0x1c] sm:$0xf]
        %v2110 = vld [vmem:[%s2101 + $0x20] sm:$0xf]
        %v2111 = vld [vmem:[%s2101 + $0x24] sm:$0xf]
        %v2112 = vld [vmem:[%s2101 + $0x28] sm:$0xf]
        %v2113 = vld [vmem:[%s2101 + $0x2c] sm:$0xf]
        %v2114 = vld [vmem:[%s2101 + $0x30] sm:$0xf]
        %v2115 = vld [vmem:[%s2101 + $0x34] sm:$0xf]
        %v2116 = vld [vmem:[%s2101 + $0x38] sm:$0xf]
        %v2117 = vld [vmem:[%s2101 + $0x3c] sm:$0xf]
        %s2118 = scalar_lea.vmem %s7, 1
        %v2119 = vld [vmem:[%s2118] sm:$0x1]
        %v2121 = vperm.slane %v2119, 0
        %v2139 = vunpack.c.l.b16 %v2102
        %v2140 = vunpack.c.l.b16 %v2103
        %v2141 = vunpack.c.l.b16 %v2104
        %v2142 = vunpack.c.l.b16 %v2105
        %v2143 = vunpack.c.l.b16 %v2106
        %v2144 = vunpack.c.l.b16 %v2107
        %v2145 = vunpack.c.l.b16 %v2108
        %v2146 = vunpack.c.l.b16 %v2109
        %v2147 = vunpack.c.l.b16 %v2110
        %v2148 = vunpack.c.l.b16 %v2111
        %v2149 = vunpack.c.l.b16 %v2112
        %v2150 = vunpack.c.l.b16 %v2113
        %v2151 = vunpack.c.l.b16 %v2114
        %v2152 = vunpack.c.l.b16 %v2115
        %v2153 = vunpack.c.l.b16 %v2116
        %v2154 = vunpack.c.l.b16 %v2117
        %v2155 = vpack.c.b16 %v2140, %v2139
        %v2156 = vpack.c.b16 %v2142, %v2141
        %v2157 = vpack.c.b16 %v2144, %v2143
        %v2158 = vpack.c.b16 %v2146, %v2145
        %v2159 = vpack.c.b16 %v2148, %v2147
        %v2160 = vpack.c.b16 %v2150, %v2149
        %v2161 = vpack.c.b16 %v2152, %v2151
        %v2162 = vpack.c.b16 %v2154, %v2153
        %2171 = vmatpush.bf16.msra.mxu0 %v2162
        %2172 = vmatpush.bf16.msra.mxu0 %v2161
        %2173 = vmatpush.bf16.msra.mxu0 %v2160
        %2174 = vmatpush.bf16.msra.mxu0 %v2159
        %2175 = vmatpush.bf16.msra.mxu0 %v2158
        %2176 = vmatpush.bf16.msra.mxu0 %v2157
        %2177 = vmatpush.bf16.msra.mxu0 %v2156
        %2178 = vmatpush.bf16.msra.mxu0 %v2155
        %2179 = vmatmul.bf16.gmra.mxu0 %v2100
        %v2180 = vpop.f32.mrf.mxu0
        %v2181 = vadd.f32 %v2121, %v2180
        %v2182 = vpop.f32.mrf.mxu0
        %2183 = vdwg.mxu0
        %v2184 = vadd.f32 %v2181, %v1650
        %s2185 = scalar_lea.vmem %s8, 1
        %v2186 = vld [vmem:[%s2185] sm:$0x1]
        %s2187 = scalar_lea.vmem %s9, 1
        %v2188 = vld [vmem:[%s2187] sm:$0x1]
        %2189 = vadd.xlane.f32.xlu0 %v2184
        %v2190 = vpop.xlane.xlu0 %2189
        %v2191 = vmul.f32 %v2190, %v717
        %v2192 = vsub.f32 %v2184, %v2191
        %v2193 = vmul.f32 %v2192, %v2192
        %2194 = vadd.xlane.f32.xlu0 %v2193
        %v2195 = vpop.xlane.xlu0 %2194
        %v2196 = vmul.f32 %v2195, %v717
        %v2197 = vadd.f32 %v2196, 1e-12
        %v2198 = vrsqrt.pop %v2197
        %v2199 = vmul.f32 %v2198, %v2197
        %v2200 = vmul.f32 %v2199, %v2198
        %v2201 = vmul.f32 0.5, %v2200
        %v2202 = vsub.f32 1.5, %v2201
        %v2203 = vmul.f32 %v2198, %v2202
        %vm2204 = vweird.f32 %v2197
        %vm2205 = vweird.f32 %v2198
        %vm2206 = vmor %vm2204, %vm2205
        %v2207 = vsel %vm2206, %v2198, %v2203
        %v2208 = vmul.f32 %v2192, %v2207
        %v2210 = vperm.slane %v2186, 0
        %v2212 = vmul.f32 %v2208, %v2210
        %v2214 = vperm.slane %v2188, 0
        %v2216 = vadd.f32 %v2212, %v2214
        %v2217 = vpack.c.bf16 %v2216, %v2216
        %s2218 = scalar_lea.vmem [#allocation5], 128
        %v2219 = vld [vmem:[%s2218] sm:$0xff]
        %v2220 = vld [vmem:[%s2218 + $0x8] sm:$0xff]
        %v2221 = vld [vmem:[%s2218 + $0x10] sm:$0xff]
        %v2222 = vld [vmem:[%s2218 + $0x18] sm:$0xff]
        %v2223 = vld [vmem:[%s2218 + $0x20] sm:$0xff]
        %v2224 = vld [vmem:[%s2218 + $0x28] sm:$0xff]
        %v2225 = vld [vmem:[%s2218 + $0x30] sm:$0xff]
        %v2226 = vld [vmem:[%s2218 + $0x38] sm:$0xff]
        %v2227 = vld [vmem:[%s2218 + $0x40] sm:$0xff]
        %v2228 = vld [vmem:[%s2218 + $0x48] sm:$0xff]
        %v2229 = vld [vmem:[%s2218 + $0x50] sm:$0xff]
        %v2230 = vld [vmem:[%s2218 + $0x58] sm:$0xff]
        %v2231 = vld [vmem:[%s2218 + $0x60] sm:$0xff]
        %v2232 = vld [vmem:[%s2218 + $0x68] sm:$0xff]
        %v2233 = vld [vmem:[%s2218 + $0x70] sm:$0xff]
        %v2234 = vld [vmem:[%s2218 + $0x78] sm:$0xff]
        %s2235 = scalar_lea.vmem %s11, 2
        %v2236 = vld [vmem:[%s2235] sm:$0x3]
        %v2238 = vperm.slane %v2236, 0
        %v2239 = vperm.slane %v2236, 1
        %v2258 = vunpack.c.l.b16 %v2219
        %v2259 = vunpack.c.h.b16 %v2219
        %v2260 = vunpack.c.l.b16 %v2220
        %v2261 = vunpack.c.h.b16 %v2220
        %v2262 = vunpack.c.l.b16 %v2221
        %v2263 = vunpack.c.h.b16 %v2221
        %v2264 = vunpack.c.l.b16 %v2222
        %v2265 = vunpack.c.h.b16 %v2222
        %v2266 = vunpack.c.l.b16 %v2223
        %v2267 = vunpack.c.h.b16 %v2223
        %v2268 = vunpack.c.l.b16 %v2224
        %v2269 = vunpack.c.h.b16 %v2224
        %v2270 = vunpack.c.l.b16 %v2225
        %v2271 = vunpack.c.h.b16 %v2225
        %v2272 = vunpack.c.l.b16 %v2226
        %v2273 = vunpack.c.h.b16 %v2226
        %v2274 = vunpack.c.l.b16 %v2227
        %v2275 = vunpack.c.h.b16 %v2227
        %v2276 = vunpack.c.l.b16 %v2228
        %v2277 = vunpack.c.h.b16 %v2228
        %v2278 = vunpack.c.l.b16 %v2229
        %v2279 = vunpack.c.h.b16 %v2229
        %v2280 = vunpack.c.l.b16 %v2230
        %v2281 = vunpack.c.h.b16 %v2230
        %v2282 = vunpack.c.l.b16 %v2231
        %v2283 = vunpack.c.h.b16 %v2231
        %v2284 = vunpack.c.l.b16 %v2232
        %v2285 = vunpack.c.h.b16 %v2232
        %v2286 = vunpack.c.l.b16 %v2233
        %v2287 = vunpack.c.h.b16 %v2233
        %v2288 = vunpack.c.l.b16 %v2234
        %v2289 = vunpack.c.h.b16 %v2234
        %v2290 = vpack.c.b16 %v2260, %v2258
        %v2291 = vpack.c.b16 %v2261, %v2259
        %v2292 = vpack.c.b16 %v2264, %v2262
        %v2293 = vpack.c.b16 %v2265, %v2263
        %v2294 = vpack.c.b16 %v2268, %v2266
        %v2295 = vpack.c.b16 %v2269, %v2267
        %v2296 = vpack.c.b16 %v2272, %v2270
        %v2297 = vpack.c.b16 %v2273, %v2271
        %v2298 = vpack.c.b16 %v2276, %v2274
        %v2299 = vpack.c.b16 %v2277, %v2275
        %v2300 = vpack.c.b16 %v2280, %v2278
        %v2301 = vpack.c.b16 %v2281, %v2279
        %v2302 = vpack.c.b16 %v2284, %v2282
        %v2303 = vpack.c.b16 %v2285, %v2283
        %v2304 = vpack.c.b16 %v2288, %v2286
        %v2305 = vpack.c.b16 %v2289, %v2287
        %2322 = vmatpush.bf16.msra.mxu0 %v2304
        %2323 = vmatpush.bf16.msra.mxu0 %v2302
        %2324 = vmatpush.bf16.msra.mxu0 %v2300
        %2325 = vmatpush.bf16.msra.mxu0 %v2298
        %2326 = vmatpush.bf16.msra.mxu0 %v2296
        %2327 = vmatpush.bf16.msra.mxu0 %v2294
        %2328 = vmatpush.bf16.msra.mxu0 %v2292
        %2329 = vmatpush.bf16.msra.mxu0 %v2290
        %2330 = vmatmul.bf16.gmra.mxu0 %v2217
        %v2331 = vpop.f32.mrf.mxu0
        %v2332 = vadd.f32 %v2238, %v2331
        %v2333 = vpop.f32.mrf.mxu0
        %2334 = vdwg.mxu0
        %2335 = vmatpush.bf16.msra.mxu0 %v2305
        %2336 = vmatpush.bf16.msra.mxu0 %v2303
        %2337 = vmatpush.bf16.msra.mxu0 %v2301
        %2338 = vmatpush.bf16.msra.mxu0 %v2299
        %2339 = vmatpush.bf16.msra.mxu0 %v2297
        %2340 = vmatpush.bf16.msra.mxu0 %v2295
        %2341 = vmatpush.bf16.msra.mxu0 %v2293
        %2342 = vmatpush.bf16.msra.mxu0 %v2291
        %2343 = vmatmul.bf16.gmra.mxu0 %v2217
        %v2344 = vpop.f32.mrf.mxu0
        %v2345 = vadd.f32 %v2239, %v2344
        %v2346 = vpop.f32.mrf.mxu0
        %2347 = vdwg.mxu0
        %v2348 = vmul.f32 %v2332, 0.5
        %v2349 = vmul.f32 %v2345, 0.5
        %v2350 = vmul.f32 %v2332, 0.044715
        %v2351 = vmul.f32 %v2345, 0.044715
        %v2352 = vmul.f32 %v2350, %v2332
        %v2353 = vmul.f32 %v2351, %v2345
        %v2354 = vmul.f32 %v2352, %v2332
        %v2355 = vmul.f32 %v2353, %v2345
        %v2356 = vadd.f32 %v2332, %v2354
        %v2357 = vadd.f32 %v2345, %v2355
        %v2358 = vmul.f32 %v2356, 0.7978846
        %v2359 = vmul.f32 %v2357, 0.7978846
        %v2360 = vtanh.pop %v2358
        %v2361 = vtanh.pop %v2359
        %v2362 = vadd.f32 %v2360, 1.0
        %v2363 = vadd.f32 %v2361, 1.0
        %v2364 = vmul.f32 %v2348, %v2362
        %v2365 = vmul.f32 %v2349, %v2363
        %v2366 = vpack.c.bf16 %v2364, %v2364
        %v2367 = vpack.c.bf16 %v2365, %v2365
        %s2368 = scalar_lea.vmem [#allocation7], 128
        %v2369 = vld [vmem:[%s2368] sm:$0xf]
        %v2370 = vld [vmem:[%s2368 + $0x4] sm:$0xf]
        %v2371 = vld [vmem:[%s2368 + $0x8] sm:$0xf]
        %v2372 = vld [vmem:[%s2368 + $0xc] sm:$0xf]
        %v2373 = vld [vmem:[%s2368 + $0x10] sm:$0xf]
        %v2374 = vld [vmem:[%s2368 + $0x14] sm:$0xf]
        %v2375 = vld [vmem:[%s2368 + $0x18] sm:$0xf]
        %v2376 = vld [vmem:[%s2368 + $0x1c] sm:$0xf]
        %v2377 = vld [vmem:[%s2368 + $0x20] sm:$0xf]
        %v2378 = vld [vmem:[%s2368 + $0x24] sm:$0xf]
        %v2379 = vld [vmem:[%s2368 + $0x28] sm:$0xf]
        %v2380 = vld [vmem:[%s2368 + $0x2c] sm:$0xf]
        %v2381 = vld [vmem:[%s2368 + $0x30] sm:$0xf]
        %v2382 = vld [vmem:[%s2368 + $0x34] sm:$0xf]
        %v2383 = vld [vmem:[%s2368 + $0x38] sm:$0xf]
        %v2384 = vld [vmem:[%s2368 + $0x3c] sm:$0xf]
        %v2385 = vld [vmem:[%s2368 + $0x40] sm:$0xf]
        %v2386 = vld [vmem:[%s2368 + $0x44] sm:$0xf]
        %v2387 = vld [vmem:[%s2368 + $0x48] sm:$0xf]
        %v2388 = vld [vmem:[%s2368 + $0x4c] sm:$0xf]
        %v2389 = vld [vmem:[%s2368 + $0x50] sm:$0xf]
        %v2390 = vld [vmem:[%s2368 + $0x54] sm:$0xf]
        %v2391 = vld [vmem:[%s2368 + $0x58] sm:$0xf]
        %v2392 = vld [vmem:[%s2368 + $0x5c] sm:$0xf]
        %v2393 = vld [vmem:[%s2368 + $0x60] sm:$0xf]
        %v2394 = vld [vmem:[%s2368 + $0x64] sm:$0xf]
        %v2395 = vld [vmem:[%s2368 + $0x68] sm:$0xf]
        %v2396 = vld [vmem:[%s2368 + $0x6c] sm:$0xf]
        %v2397 = vld [vmem:[%s2368 + $0x70] sm:$0xf]
        %v2398 = vld [vmem:[%s2368 + $0x74] sm:$0xf]
        %v2399 = vld [vmem:[%s2368 + $0x78] sm:$0xf]
        %v2400 = vld [vmem:[%s2368 + $0x7c] sm:$0xf]
        %s2401 = scalar_lea.vmem %s13, 1
        %v2402 = vld [vmem:[%s2401] sm:$0x1]
        %v2404 = vperm.slane %v2402, 0
        %v2438 = vunpack.c.l.b16 %v2369
        %v2439 = vunpack.c.l.b16 %v2370
        %v2440 = vunpack.c.l.b16 %v2371
        %v2441 = vunpack.c.l.b16 %v2372
        %v2442 = vunpack.c.l.b16 %v2373
        %v2443 = vunpack.c.l.b16 %v2374
        %v2444 = vunpack.c.l.b16 %v2375
        %v2445 = vunpack.c.l.b16 %v2376
        %v2446 = vunpack.c.l.b16 %v2377
        %v2447 = vunpack.c.l.b16 %v2378
        %v2448 = vunpack.c.l.b16 %v2379
        %v2449 = vunpack.c.l.b16 %v2380
        %v2450 = vunpack.c.l.b16 %v2381
        %v2451 = vunpack.c.l.b16 %v2382
        %v2452 = vunpack.c.l.b16 %v2383
        %v2453 = vunpack.c.l.b16 %v2384
        %v2454 = vunpack.c.l.b16 %v2385
        %v2455 = vunpack.c.l.b16 %v2386
        %v2456 = vunpack.c.l.b16 %v2387
        %v2457 = vunpack.c.l.b16 %v2388
        %v2458 = vunpack.c.l.b16 %v2389
        %v2459 = vunpack.c.l.b16 %v2390
        %v2460 = vunpack.c.l.b16 %v2391
        %v2461 = vunpack.c.l.b16 %v2392
        %v2462 = vunpack.c.l.b16 %v2393
        %v2463 = vunpack.c.l.b16 %v2394
        %v2464 = vunpack.c.l.b16 %v2395
        %v2465 = vunpack.c.l.b16 %v2396
        %v2466 = vunpack.c.l.b16 %v2397
        %v2467 = vunpack.c.l.b16 %v2398
        %v2468 = vunpack.c.l.b16 %v2399
        %v2469 = vunpack.c.l.b16 %v2400
        %v2470 = vpack.c.b16 %v2439, %v2438
        %v2471 = vpack.c.b16 %v2441, %v2440
        %v2472 = vpack.c.b16 %v2443, %v2442
        %v2473 = vpack.c.b16 %v2445, %v2444
        %v2474 = vpack.c.b16 %v2447, %v2446
        %v2475 = vpack.c.b16 %v2449, %v2448
        %v2476 = vpack.c.b16 %v2451, %v2450
        %v2477 = vpack.c.b16 %v2453, %v2452
        %v2478 = vpack.c.b16 %v2455, %v2454
        %v2479 = vpack.c.b16 %v2457, %v2456
        %v2480 = vpack.c.b16 %v2459, %v2458
        %v2481 = vpack.c.b16 %v2461, %v2460
        %v2482 = vpack.c.b16 %v2463, %v2462
        %v2483 = vpack.c.b16 %v2465, %v2464
        %v2484 = vpack.c.b16 %v2467, %v2466
        %v2485 = vpack.c.b16 %v2469, %v2468
        %2502 = vmatpush.bf16.msra.mxu0 %v2477
        %2503 = vmatpush.bf16.msra.mxu0 %v2476
        %2504 = vmatpush.bf16.msra.mxu0 %v2475
        %2505 = vmatpush.bf16.msra.mxu0 %v2474
        %2506 = vmatpush.bf16.msra.mxu0 %v2473
        %2507 = vmatpush.bf16.msra.mxu0 %v2472
        %2508 = vmatpush.bf16.msra.mxu0 %v2471
        %2509 = vmatpush.bf16.msra.mxu0 %v2470
        %2510 = vmatmul.bf16.gmra.mxu0 %v2366
        %v2511 = vpop.f32.mrf.mxu0
        %v2512 = vadd.f32 %v2404, %v2511
        %v2513 = vpop.f32.mrf.mxu0
        %2514 = vdwg.mxu0
        %2515 = vmatpush.bf16.msra.mxu0 %v2485
        %2516 = vmatpush.bf16.msra.mxu0 %v2484
        %2517 = vmatpush.bf16.msra.mxu0 %v2483
        %2518 = vmatpush.bf16.msra.mxu0 %v2482
        %2519 = vmatpush.bf16.msra.mxu0 %v2481
        %2520 = vmatpush.bf16.msra.mxu0 %v2480
        %2521 = vmatpush.bf16.msra.mxu0 %v2479
        %2522 = vmatpush.bf16.msra.mxu0 %v2478
        %2523 = vmatmul.bf16.gmra.mxu0 %v2367
        %v2524 = vpop.f32.mrf.mxu0
        %v2525 = vadd.f32 %v2512, %v2524
        %v2526 = vpop.f32.mrf.mxu0
        %2527 = vdwg.mxu0
        %v2528 = vadd.f32 %v2525, %v2216
        %s2529 = scalar_lea.vmem %s14, 1
        %v2530 = vld [vmem:[%s2529] sm:$0x1]
        %s2531 = scalar_lea.vmem %s15, 1
        %v2532 = vld [vmem:[%s2531] sm:$0x1]
        %2533 = vadd.xlane.f32.xlu0 %v2528
        %v2534 = vpop.xlane.xlu0 %2533
        %v2535 = vmul.f32 %v2534, %v717
        %v2536 = vsub.f32 %v2528, %v2535
        %v2537 = vmul.f32 %v2536, %v2536
        %2538 = vadd.xlane.f32.xlu0 %v2537
        %v2539 = vpop.xlane.xlu0 %2538
        %v2540 = vmul.f32 %v2539, %v717
        %v2541 = vadd.f32 %v2540, 1e-12
        %v2542 = vrsqrt.pop %v2541
        %v2543 = vmul.f32 %v2542, %v2541
        %v2544 = vmul.f32 %v2543, %v2542
        %v2545 = vmul.f32 0.5, %v2544
        %v2546 = vsub.f32 1.5, %v2545
        %v2547 = vmul.f32 %v2542, %v2546
        %vm2548 = vweird.f32 %v2541
        %vm2549 = vweird.f32 %v2542
        %vm2550 = vmor %vm2548, %vm2549
        %v2551 = vsel %vm2550, %v2542, %v2547
        %v2552 = vmul.f32 %v2536, %v2551
        %v2554 = vperm.slane %v2530, 0
        %v2556 = vmul.f32 %v2552, %v2554
        %v2558 = vperm.slane %v2532, 0
        %v2560 = vadd.f32 %v2556, %v2558
        %v2561 = vpack.c.bf16 %v2560, %v2560
        %v2562 = vld [vmem:[%s16] sm:$0xf]
        %v2563 = vld [vmem:[%s16 + $0x4] sm:$0xf]
        %v2564 = vld [vmem:[%s16 + $0x8] sm:$0xf]
        %v2565 = vld [vmem:[%s16 + $0xc] sm:$0xf]
        %v2566 = vld [vmem:[%s16 + $0x10] sm:$0xf]
        %v2567 = vld [vmem:[%s16 + $0x14] sm:$0xf]
        %v2568 = vld [vmem:[%s16 + $0x18] sm:$0xf]
        %v2569 = vld [vmem:[%s16 + $0x1c] sm:$0xf]
        %v2570 = vld [vmem:[%s16 + $0x20] sm:$0xf]
        %v2571 = vld [vmem:[%s16 + $0x24] sm:$0xf]
        %v2572 = vld [vmem:[%s16 + $0x28] sm:$0xf]
        %v2573 = vld [vmem:[%s16 + $0x2c] sm:$0xf]
        %v2574 = vld [vmem:[%s16 + $0x30] sm:$0xf]
        %v2575 = vld [vmem:[%s16 + $0x34] sm:$0xf]
        %v2576 = vld [vmem:[%s16 + $0x38] sm:$0xf]
        %v2577 = vld [vmem:[%s16 + $0x3c] sm:$0xf]
        %v2578 = vld [vmem:[%s17] sm:$0x1]
        %v2595 = vunpack.c.l.b16 %v2562
        %v2596 = vunpack.c.l.b16 %v2563
        %v2597 = vunpack.c.l.b16 %v2564
        %v2598 = vunpack.c.l.b16 %v2565
        %v2599 = vunpack.c.l.b16 %v2566
        %v2600 = vunpack.c.l.b16 %v2567
        %v2601 = vunpack.c.l.b16 %v2568
        %v2602 = vunpack.c.l.b16 %v2569
        %v2603 = vunpack.c.l.b16 %v2570
        %v2604 = vunpack.c.l.b16 %v2571
        %v2605 = vunpack.c.l.b16 %v2572
        %v2606 = vunpack.c.l.b16 %v2573
        %v2607 = vunpack.c.l.b16 %v2574
        %v2608 = vunpack.c.l.b16 %v2575
        %v2609 = vunpack.c.l.b16 %v2576
        %v2610 = vunpack.c.l.b16 %v2577
        %v2611 = vpack.c.b16 %v2596, %v2595
        %v2612 = vpack.c.b16 %v2598, %v2597
        %v2613 = vpack.c.b16 %v2600, %v2599
        %v2614 = vpack.c.b16 %v2602, %v2601
        %v2615 = vpack.c.b16 %v2604, %v2603
        %v2616 = vpack.c.b16 %v2606, %v2605
        %v2617 = vpack.c.b16 %v2608, %v2607
        %v2618 = vpack.c.b16 %v2610, %v2609
        %2627 = vmatpush.bf16.msra.mxu0 %v2618
        %2628 = vmatpush.bf16.msra.mxu0 %v2617
        %2629 = vmatpush.bf16.msra.mxu0 %v2616
        %2630 = vmatpush.bf16.msra.mxu0 %v2615
        %2631 = vmatpush.bf16.msra.mxu0 %v2614
        %2632 = vmatpush.bf16.msra.mxu0 %v2613
        %2633 = vmatpush.bf16.msra.mxu0 %v2612
        %2634 = vmatpush.bf16.msra.mxu0 %v2611
        %2635 = vmatmul.bf16.gmra.mxu0 %v2561
        %v2636 = vpop.f32.mrf.mxu0
        %v2637 = vadd.f32 %v2578, %v2636
        %v2638 = vpop.f32.mrf.mxu0
        %2639 = vdwg.mxu0
        %v2640 = vtanh.pop %v2637
        %v2641 = vpack.c.bf16 %v2640, %v2640
        %v2642 = vld [vmem:[#allocation8] sm:$0xf]
        %v2643 = vld [vmem:[#allocation8 + $0x4] sm:$0xf]
        %v2644 = vld [vmem:[#allocation8 + $0x8] sm:$0xf]
        %v2645 = vld [vmem:[#allocation8 + $0xc] sm:$0xf]
        %v2646 = vld [vmem:[#allocation8 + $0x10] sm:$0xf]
        %v2647 = vld [vmem:[#allocation8 + $0x14] sm:$0xf]
        %v2648 = vld [vmem:[#allocation8 + $0x18] sm:$0xf]
        %v2649 = vld [vmem:[#allocation8 + $0x1c] sm:$0xf]
        %v2650 = vld [vmem:[#allocation8 + $0x20] sm:$0xf]
        %v2651 = vld [vmem:[#allocation8 + $0x24] sm:$0xf]
        %v2652 = vld [vmem:[#allocation8 + $0x28] sm:$0xf]
        %v2653 = vld [vmem:[#allocation8 + $0x2c] sm:$0xf]
        %v2654 = vld [vmem:[#allocation8 + $0x30] sm:$0xf]
        %v2655 = vld [vmem:[#allocation8 + $0x34] sm:$0xf]
        %v2656 = vld [vmem:[#allocation8 + $0x38] sm:$0xf]
        %v2657 = vld [vmem:[#allocation8 + $0x3c] sm:$0xf]
        %v2658 = vld [vmem:[%s19] sm:$0x1]
        %v2675 = vunpack.c.l.b16 %v2642
        %v2676 = vunpack.c.l.b16 %v2643
        %v2677 = vunpack.c.l.b16 %v2644
        %v2678 = vunpack.c.l.b16 %v2645
        %v2679 = vunpack.c.l.b16 %v2646
        %v2680 = vunpack.c.l.b16 %v2647
        %v2681 = vunpack.c.l.b16 %v2648
        %v2682 = vunpack.c.l.b16 %v2649
        %v2683 = vunpack.c.l.b16 %v2650
        %v2684 = vunpack.c.l.b16 %v2651
        %v2685 = vunpack.c.l.b16 %v2652
        %v2686 = vunpack.c.l.b16 %v2653
        %v2687 = vunpack.c.l.b16 %v2654
        %v2688 = vunpack.c.l.b16 %v2655
        %v2689 = vunpack.c.l.b16 %v2656
        %v2690 = vunpack.c.l.b16 %v2657
        %v2691 = vpack.c.b16 %v2676, %v2675
        %v2692 = vpack.c.b16 %v2678, %v2677
        %v2693 = vpack.c.b16 %v2680, %v2679
        %v2694 = vpack.c.b16 %v2682, %v2681
        %v2695 = vpack.c.b16 %v2684, %v2683
        %v2696 = vpack.c.b16 %v2686, %v2685
        %v2697 = vpack.c.b16 %v2688, %v2687
        %v2698 = vpack.c.b16 %v2690, %v2689
        %2707 = vmatpush.bf16.msra.mxu0 %v2698
        %2708 = vmatpush.bf16.msra.mxu0 %v2697
        %2709 = vmatpush.bf16.msra.mxu0 %v2696
        %2710 = vmatpush.bf16.msra.mxu0 %v2695
        %2711 = vmatpush.bf16.msra.mxu0 %v2694
        %2712 = vmatpush.bf16.msra.mxu0 %v2693
        %2713 = vmatpush.bf16.msra.mxu0 %v2692
        %2714 = vmatpush.bf16.msra.mxu0 %v2691
        %2715 = vmatmul.bf16.gmra.mxu0 %v2641
        %v2716 = vpop.f32.mrf.mxu0
        %v2717 = vadd.f32 %v2658, %v2716
        %v2718 = vpop.f32.mrf.mxu0
        %2719 = vdwg.mxu0
        %v2720 = vmax.f32 %v2717, 0.0
        %2721 = vst [vmem:[%s697] sm:$0x1] %v2720
        %s2722 = sand.u32 %s475, 1
        %s2723 = scalar_lea.sflag [#allocation4], %s2722
        %s2724 = sand.u32 %s475, 1
        %s2725 = scalar_lea.vmem [#allocation10], %s2724
        // Predicated region
        $region117: #{bert_classifier_forward.1} parent=99 // pred_check
          %p2726 = pneg %p485
        $region118: #{bert_classifier_forward.1} parent=99 // pred_check_branch
          %2728 = sbr.rel (%p2726) target = $region120
        $region119: #{bert_classifier_forward.1} parent=99 // pred_region
          %2730 = vsyncadd %s2723, 0
          %s2731 = scalar_lea.hbm %s20, %s37
          %s2733 = sshll.u32 %s2725, 4
          %s2734 = int_to_ptr.vmem [resolvable:$true] %s2733
          %s2735 = sshll.u32 %s2731, 4
          %s2736 = int_to_ptr.hbm [resolvable:$true] %s2735
          %2738 = dma.vmem_to_hbm [thread:$0]  %s2734, 16, %s2736, %s2723
        $region120: #{bert_classifier_forward.1} parent=99 // pred_fallthru
          _
      $region100: #{bert_classifier_forward.1} parent=5 // pred_fallthru
        _
      %p2739 = scmp.le.s32.totalorder 2, %s32
      // Predicated region
      $region121: #{bert_classifier_forward.1} parent=5 // pred_check
        %p2740 = pneg %p2739
      $region122: #{bert_classifier_forward.1} parent=5 // pred_check_branch
        %2742 = sbr.rel (%p2740) target = $region124
      $region123: #{bert_classifier_forward.1} parent=5 // pred_region
        %s2743 = ssub.s32 %s32, 2
        // Predicated region
        $region125: #{bert_classifier_forward.1} parent=123 // pred_check
          %p2744 = pneg %p491
        $region126: #{bert_classifier_forward.1} parent=123 // pred_check_branch
          %2746 = sbr.rel (%p2744) target = $region128
        $region127: #{bert_classifier_forward.1} parent=123 // pred_region
          %s2747 = sand.u32 %s476, 1
          %s2748 = scalar_lea.sflag [#allocation4], %s2747
          %s2749 = sand.u32 %s476, 1
          %s2750 = scalar_lea.vmem [#allocation10], %s2749
          %2752 = dma.done %s2748, 16
        $region128: #{bert_classifier_forward.1} parent=123 // pred_fallthru
          _
      $region124: #{bert_classifier_forward.1} parent=5 // pred_fallthru
        _
    $region6: #{bert_classifier_forward.1} parent=1 // loop_footer
      %s36 = sadd.s32 1, %s32
    $region7: #{bert_classifier_forward.1} parent=1 // loop_footer_branch
      %31 = sbr.rel target = $region3
    $region8: #{bert_classifier_forward.1} parent=1 // loop_exit
      _
    %2753 = vsyncpa [#allocation3], 1
    %s2754 = scalar_lea.sflag [#allocation3], 1
    %2755 = vsyncpa %s2754, 1
    %2756 = vsyncpa [#allocation6], 1
    %2757 = vsyncpa [#allocation9], 1
    %2758 = vsyncpa [#allocation4], 1
    %s2759 = scalar_lea.sflag [#allocation4], 1
    %2760 = vsyncpa %s2759, 1

</llo_original>
